<compile_context>
chip_gen: v5e
topology: v5e:2x2
jax: 0.10.0
libtpu: 0.0.40
codegen_flags: <defaults>
</compile_context>

<pallas_src>
import math

import jax
import jax.numpy as jnp
from jax.experimental import pallas as pl
from jax.experimental.pallas import tpu as pltpu


# ----------------------------------------------------------------------------
# Kernel
# ----------------------------------------------------------------------------
def _make_kernel(B, V, N, S, OC, H):
    SOC = S * OC
    DK = OC // H
    VN = V * N
    inv_sqrt_dk = 1.0 / math.sqrt(DK)

    def kernel(fmap_ref, nidx_ref, dir_ref, sdir_ref, w_ref, b_ref,
               wq_ref, bq_ref, wk_ref, bk_ref, wv_ref, bv_ref,
               wo_ref, bo_ref, out_ref, fuse_ref, heads_ref):
        bf16 = jnp.bfloat16
        f32 = jnp.float32

        # ---- (1) fused feature projection for all B batches at once ----
        # (B*V, in_c) @ (in_c, (S+1)*OC) + bias, bf16 MXU / f32 accumulate.
        feat = jnp.dot(fmap_ref[...].astype(bf16), w_ref[...].astype(bf16),
                       preferred_element_type=f32) + b_ref[...]
        center = feat[:, :OC]            # (B*V, OC)      f32
        support = feat[:, OC:]           # (B*V, S*OC)    f32

        # ---- (2) neighbor-direction normalisation (F.normalize, dim=-1) ----
        # dir_ref is (B*V*N, 8) with the last 5 columns zero-padded; padding does not
        # perturb the squared norm.  rsqrt on the EUP; clamp matches clamp-on-norm.
        d = dir_ref[...]
        inv_n = jax.lax.rsqrt(jnp.maximum(jnp.sum(d * d, axis=1, keepdims=True), 1e-24))
        dn = (d * inv_n).astype(bf16)

        # ---- (3) theta = relu(dir_norm @ support_dir_norm) on the MXU (bf16, K=8) ----
        theta_all = jnp.maximum(
            jnp.dot(dn, sdir_ref[...].astype(bf16), preferred_element_type=f32), 0.0)

        # ---- (4) per-batch gather + fuse (gather must not mix batches) ----
        idx_all = nidx_ref[...]                                        # (B*V*N, 1) int32
        iota_v = jax.lax.broadcasted_iota(jnp.int32, (VN, V), 1)
        for b in range(B):                                             # B is small & static
            idx_b = idx_all[b * VN:(b + 1) * VN, :]                    # (V*N, 1)
            onehot = (idx_b == iota_v).astype(bf16)                    # (V*N, V), exact
            sup_b = support[b * V:(b + 1) * V, :].astype(bf16)         # (V, S*OC)
            gath = jnp.dot(onehot, sup_b, preferred_element_type=f32)  # (V*N, S*OC)
            act = (theta_all[b * VN:(b + 1) * VN, :] * gath).reshape(V, N, SOC)
            mx = jnp.max(act, axis=1)                                  # (V, S*OC)
            acc = mx[:, 0:OC]
            for s in range(1, S):                                      # S static & small
                acc = acc + mx[:, s * OC:(s + 1) * OC]
            fuse_ref[b * V:(b + 1) * V, :] = center[b * V:(b + 1) * V, :] + acc

        # ---- (5) QKV projections, batched over all B (bf16 MXU, f32 accumulate) ----
        x_all = fuse_ref[...].astype(bf16)                             # (B*V, OC)
        q = jnp.dot(x_all, wq_ref[...].astype(bf16), preferred_element_type=f32) + bq_ref[...]
        k = jnp.dot(x_all, wk_ref[...].astype(bf16), preferred_element_type=f32) + bk_ref[...]
        v = jnp.dot(x_all, wv_ref[...].astype(bf16), preferred_element_type=f32) + bv_ref[...]

        # ---- (6) per-batch per-head attention; heads written at static lane offsets ----
        # TODO(synk): switch to flash-style online softmax over V tiles at large V.
        for b in range(B):
            r0, r1 = b * V, (b + 1) * V
            for h in range(H):
                c0, c1 = h * DK, (h + 1) * DK
                qh = q[r0:r1, c0:c1].astype(bf16)
                kh = k[r0:r1, c0:c1].astype(bf16)
                vh = v[r0:r1, c0:c1].astype(bf16)
                sc = jax.lax.dot_general(qh, kh, (((1,), (1,)), ((), ())),
                                         preferred_element_type=f32) * inv_sqrt_dk
                sc = sc - jnp.max(sc, axis=-1, keepdims=True)
                p = jnp.exp(sc)
                p = p / jnp.sum(p, axis=-1, keepdims=True)             # exact softmax
                heads_ref[r0:r1, c0:c1] = jnp.dot(p.astype(bf16), vh,
                                                  preferred_element_type=f32)

        # ---- (7) single output projection over all batches / heads ----
        out = jnp.dot(heads_ref[...].astype(bf16), wo_ref[...].astype(bf16),
                      preferred_element_type=f32) + bo_ref[...]
        out_ref[...] = out.astype(out_ref.dtype)

    return kernel


# ----------------------------------------------------------------------------
# Wrapper: layout plumbing + pallas_call
# ----------------------------------------------------------------------------
def _pick_batch_block(bs, V, target_rows=256):
    """Largest divisor of bs whose row block fits target_rows; prefer >=2 grid steps
    so both v7x TensorCores get work."""
    cands = [d for d in range(1, bs + 1)
             if bs % d == 0 and (d * V) % 8 == 0 and d * V <= target_rows]
    if not cands:
        return bs
    multi = [d for d in cands if bs // d >= 2]
    return max(multi) if multi else max(cands)


def attention_conv_layer_v2(neighbor_index, vertices, feature_map, params, batch_block=None):
    bs, V, N = neighbor_index.shape
    in_c = feature_map.shape[-1]
    OC = params["out_channel"]
    S = params["support_num"]
    H = 4
    C = (S + 1) * OC
    SOC = S * OC

    # Pad N to a multiple of 8 by repeating the first neighbor (max over duplicates is
    # unchanged) so the in-kernel (V*N,SOC)->(V,N,SOC) reshape is a pure re-tiling.
    Np = ((N + 7) // 8) * 8
    if Np != N:
        pad = jnp.broadcast_to(neighbor_index[:, :, :1], (bs, V, Np - N))
        neighbor_index = jnp.concatenate([neighbor_index, pad], axis=-1)
    N = Np

    # Glue (small tensors only): neighbor positions -> raw directions, flattened rows.
    gather = jax.vmap(lambda t, idx: t[idx])
    neighbors = gather(vertices, neighbor_index)                     # (bs, V, N, 3)
    nbr_dir = (neighbors - vertices[:, :, None, :]).reshape(bs * V * N, 3)
    nbr_dir = jnp.pad(nbr_dir, ((0, 0), (0, 5)))                     # (bs*V*N, 8), zero cols
    nidx = neighbor_index.reshape(bs * V * N, 1).astype(jnp.int32)
    fmap_flat = feature_map.reshape(bs * V, in_c)

    # Parameter prep: support-direction normalisation over dim 0, padded to 8 rows.
    dvec = params["directions"]
    sdir = dvec * jax.lax.rsqrt(
        jnp.maximum(jnp.sum(dvec * dvec, axis=0, keepdims=True), 1e-24))
    sdir = jnp.pad(sdir, ((0, 5), (0, 0)))                           # (8, S*OC), zero rows

    B = batch_block if batch_block is not None else _pick_batch_block(bs, V)
    assert bs % B == 0
    grid = (bs // B,)

    def batched(rows, cols):
        return pl.BlockSpec((rows, cols), lambda i: (i, 0))

    def shared(rows, cols):
        return pl.BlockSpec((rows, cols), lambda i: (0, 0))

    kernel = _make_kernel(B, V, N, S, OC, H)
    out = pl.pallas_call(
        kernel,
        out_shape=jax.ShapeDtypeStruct((bs * V, OC), jnp.float32),
        grid=grid,
        in_specs=[
            batched(B * V, in_c),        # feature_map (flattened rows)
            batched(B * V * N, 1),       # neighbor_index (flattened rows)
            batched(B * V * N, 8),       # raw neighbor directions (zero-padded cols)
            shared(8, SOC),              # normalized support directions (zero-padded rows)
            shared(in_c, C),             # projection weights
            shared(1, C),                # projection bias
            shared(OC, OC), shared(1, OC),   # wq, bq
            shared(OC, OC), shared(1, OC),   # wk, bk
            shared(OC, OC), shared(1, OC),   # wv, bv
            shared(OC, OC), shared(1, OC),   # wo, bo
        ],
        out_specs=batched(B * V, OC),
        scratch_shapes=[pltpu.VMEM((B * V, OC), jnp.float32),   # fused features
                        pltpu.VMEM((B * V, OC), jnp.float32)],  # concatenated heads
        compiler_params=pltpu.CompilerParams(dimension_semantics=("parallel",)),
    )(fmap_flat, nidx, nbr_dir, sdir,
      params["weights"], params["bias"].reshape(1, C),
      params["wq"], params["bq"], params["wk"], params["bk"],
      params["wv"], params["bv"], params["wo"], params["bo"])
    return out.reshape(bs, V, OC)


# ----------------------------------------------------------------------------
# Pure-JAX reference (f32) for correctness checking
# ----------------------------------------------------------------------------
def _reference_forward(neighbor_index, vertices, feature_map, params):
    bs, V, N = neighbor_index.shape
    OC = params["out_channel"]
    S = params["support_num"]
    H = 4
    DK = OC // H
    gather = jax.vmap(lambda t, idx: t[idx])
    neighbors = gather(vertices, neighbor_index)
    d = neighbors - vertices[:, :, None, :]
    dn = d * jax.lax.rsqrt(jnp.maximum(jnp.sum(d * d, -1, keepdims=True), 1e-24))
    dvec = params["directions"]
    sdir = dvec * jax.lax.rsqrt(
        jnp.maximum(jnp.sum(dvec * dvec, axis=0, keepdims=True), 1e-24))
    theta = jax.nn.relu(dn @ sdir)                                   # (bs,V,N,S*OC)
    feat = feature_map @ params["weights"] + params["bias"]
    center = feat[..., :OC]
    support = feat[..., OC:]
    sup_n = gather(support, neighbor_index)                          # (bs,V,N,S*OC)
    act = (theta * sup_n).reshape(bs, V, N, S, OC)
    act = jnp.sum(jnp.max(act, axis=2), axis=2)
    x = center + act

    def lin(t, w, b):
        return t @ w + b

    q, k, v = lin(x, params["wq"], params["bq"]), lin(x, params["wk"], params["bk"]), \
        lin(x, params["wv"], params["bv"])

    def split(t):
        return t.reshape(bs, V, H, DK).transpose(0, 2, 1, 3)

    qh, kh, vh = split(q), split(k), split(v)
    sc = qh @ kh.transpose(0, 1, 3, 2) / math.sqrt(DK)
    p = jax.nn.softmax(sc, axis=-1)
    o = (p @ vh).transpose(0, 2, 1, 3).reshape(bs, V, OC)
    return lin(o, params["wo"], params["bo"])


# ----------------------------------------------------------------------------
# Deterministic parameter initialization (shapes from the module's __init__)
# ----------------------------------------------------------------------------
def init_params(key, in_channel, out_channel, support_num):
    C = (support_num + 1) * out_channel
    stdv = 1.0 / math.sqrt(out_channel * (support_num + 1))
    d_model = out_channel
    stdv_lin = 1.0 / math.sqrt(d_model * d_model)
    stdv_b = 1.0 / math.sqrt(d_model)
    ks = jax.random.split(key, 11)
    u = lambda k, shape, s: jax.random.uniform(k, shape, jnp.float32, -s, s)
    # Attention linears stored as (in_features, out_features), applied as x @ W + b
    # (equivalent parameterization of nn.Linear's x @ W.T + b).
    return dict(
        out_channel=out_channel,
        support_num=support_num,
        weights=u(ks[0], (in_channel, C), stdv),
        bias=u(ks[1], (C,), stdv),
        directions=u(ks[2], (3, support_num * out_channel), stdv),
        wq=u(ks[3], (d_model, d_model), stdv_lin),
        bq=u(ks[4], (1, d_model), stdv_b),
        wk=u(ks[5], (d_model, d_model), stdv_lin),
        bk=u(ks[6], (1, d_model), stdv_b),
        wv=u(ks[7], (d_model, d_model), stdv_lin),
        bv=u(ks[8], (1, d_model), stdv_b),
        wo=u(ks[9], (d_model, d_model), stdv_lin),
        bo=u(ks[10], (1, d_model), stdv_b),
    )


if __name__ == "__main__":
    key = jax.random.PRNGKey(0)
    bs, V, N = 4, 16, 8
    in_channel, out_channel, support_num = 16, 32, 2

    k1, k2, k3, kp = jax.random.split(key, 4)
    vertices = jax.random.normal(k1, (bs, V, 3), jnp.float32)
    neighbor_index = jax.random.randint(k2, (bs, V, N), 0, V, dtype=jnp.int32)
    feature_map = jax.random.normal(k3, (bs, V, in_channel), jnp.float32)
    params = init_params(kp, in_channel, out_channel, support_num)

    out = attention_conv_layer_v2(neighbor_index, vertices, feature_map, params)
    out = jax.block_until_ready(out)
    assert out.shape == (bs, V, out_channel)
    assert bool(jnp.all(jnp.isfinite(out)))

    # Correctness vs pure-f32 JAX reference (tolerance accounts for bf16 MXU operands).
    ref = _reference_forward(neighbor_index, vertices, feature_map, params)
    max_err = float(jnp.max(jnp.abs(out - ref)))
    assert max_err < 3e-2, f"max abs error vs reference too large: {max_err}"

    print("KERNEL_OK")
</pallas_src>

<mosaic_0001>
module attributes {stable_mosaic.version = 11 : i64} {
  func.func @kernel(%arg0: i32, %arg1: memref<32x16xf32, #tpu.memory_space<vmem>>, %arg2: memref<256x1xi32, #tpu.memory_space<vmem>>, %arg3: memref<256x8xf32, #tpu.memory_space<vmem>>, %arg4: memref<8x64xf32, #tpu.memory_space<vmem>>, %arg5: memref<16x96xf32, #tpu.memory_space<vmem>>, %arg6: memref<1x96xf32, #tpu.memory_space<vmem>>, %arg7: memref<32x32xf32, #tpu.memory_space<vmem>>, %arg8: memref<1x32xf32, #tpu.memory_space<vmem>>, %arg9: memref<32x32xf32, #tpu.memory_space<vmem>>, %arg10: memref<1x32xf32, #tpu.memory_space<vmem>>, %arg11: memref<32x32xf32, #tpu.memory_space<vmem>>, %arg12: memref<1x32xf32, #tpu.memory_space<vmem>>, %arg13: memref<32x32xf32, #tpu.memory_space<vmem>>, %arg14: memref<1x32xf32, #tpu.memory_space<vmem>>, %arg15: memref<32x32xf32, #tpu.memory_space<vmem>>, %arg16: memref<32x32xf32, #tpu.memory_space<vmem>>, %arg17: memref<32x32xf32, #tpu.memory_space<vmem>>) attributes {dimension_semantics = [#tpu.dimension_semantics<parallel>], iteration_bounds = array<i64: 2>, scalar_prefetch = 0 : i64, scratch_operands = 2 : i64, tpu.core_type = #tpu.core_type<tc>, window_params = [{transform_indices = @transform_0, window_bounds = array<i64: 32, 16>}, {transform_indices = @transform_1, window_bounds = array<i64: 256, 1>}, {transform_indices = @transform_2, window_bounds = array<i64: 256, 8>}, {pipeline_mode = #tpu.pipeline_mode<synchronous>, transform_indices = @transform_3, window_bounds = array<i64: 8, 64>}, {pipeline_mode = #tpu.pipeline_mode<synchronous>, transform_indices = @transform_4, window_bounds = array<i64: 16, 96>}, {pipeline_mode = #tpu.pipeline_mode<synchronous>, transform_indices = @transform_5, window_bounds = array<i64: 1, 96>}, {pipeline_mode = #tpu.pipeline_mode<synchronous>, transform_indices = @transform_6, window_bounds = array<i64: 32, 32>}, {pipeline_mode = #tpu.pipeline_mode<synchronous>, transform_indices = @transform_7, window_bounds = array<i64: 1, 32>}, {pipeline_mode = #tpu.pipeline_mode<synchronous>, transform_indices = @transform_8, window_bounds = array<i64: 32, 32>}, {pipeline_mode = #tpu.pipeline_mode<synchronous>, transform_indices = @transform_9, window_bounds = array<i64: 1, 32>}, {pipeline_mode = #tpu.pipeline_mode<synchronous>, transform_indices = @transform_10, window_bounds = array<i64: 32, 32>}, {pipeline_mode = #tpu.pipeline_mode<synchronous>, transform_indices = @transform_11, window_bounds = array<i64: 1, 32>}, {pipeline_mode = #tpu.pipeline_mode<synchronous>, transform_indices = @transform_12, window_bounds = array<i64: 32, 32>}, {pipeline_mode = #tpu.pipeline_mode<synchronous>, transform_indices = @transform_13, window_bounds = array<i64: 1, 32>}, {transform_indices = @transform_14, window_bounds = array<i64: 32, 32>}]} {
    %c0 = arith.constant 0 : index
    %c0_0 = arith.constant 0 : index
    %0 = vector.load %arg1[%c0, %c0_0] : memref<32x16xf32, #tpu.memory_space<vmem>>, vector<32x16xf32>
    %1 = arith.truncf %0 : vector<32x16xf32> to vector<32x16xbf16>
    %c0_1 = arith.constant 0 : index
    %c0_2 = arith.constant 0 : index
    %2 = vector.load %arg5[%c0_1, %c0_2] : memref<16x96xf32, #tpu.memory_space<vmem>>, vector<16x96xf32>
    %3 = arith.truncf %2 : vector<16x96xf32> to vector<16x96xbf16>
    %cst = arith.constant dense<0.000000e+00> : vector<32x96xf32>
    %4 = tpu.matmul %1, %3, %cst {dimension_numbers = #tpu.dot_dimension_numbers<[1], [0], [0], [1], [0, 0, 1, 1], [], []>} : vector<32x16xbf16>, vector<16x96xbf16>, vector<32x96xf32> -> vector<32x96xf32>
    %c0_3 = arith.constant 0 : index
    %c0_4 = arith.constant 0 : index
    %5 = vector.load %arg6[%c0_3, %c0_4] : memref<1x96xf32, #tpu.memory_space<vmem>>, vector<1x96xf32>
    %6 = vector.broadcast %5 : vector<1x96xf32> to vector<32x96xf32>
    %7 = arith.addf %4, %6 : vector<32x96xf32>
    %8 = vector.extract_strided_slice %7 {offsets = [0, 0], sizes = [32, 32], strides = [1, 1]} : vector<32x96xf32> to vector<32x32xf32>
    %9 = vector.extract_strided_slice %7 {offsets = [0, 32], sizes = [32, 64], strides = [1, 1]} : vector<32x96xf32> to vector<32x64xf32>
    %c0_5 = arith.constant 0 : index
    %c0_6 = arith.constant 0 : index
    %10 = vector.load %arg3[%c0_5, %c0_6] : memref<256x8xf32, #tpu.memory_space<vmem>>, vector<256x8xf32>
    %11 = arith.mulf %10, %10 : vector<256x8xf32>
    %cst_7 = arith.constant dense<0.000000e+00> : vector<256xf32>
    %12 = vector.multi_reduction <add>, %11, %cst_7 [1] : vector<256x8xf32> to vector<256xf32>
    %13 = vector.shape_cast %12 : vector<256xf32> to vector<256x1xf32>
    %cst_8 = arith.constant 1.000000e-24 : f32
    %14 = vector.broadcast %cst_8 : f32 to vector<256x1xf32>
    %15 = arith.maximumf %13, %14 : vector<256x1xf32>
    %16 = math.rsqrt %15 : vector<256x1xf32>
    %17 = vector.broadcast %16 : vector<256x1xf32> to vector<256x8xf32>
    %18 = arith.mulf %10, %17 : vector<256x8xf32>
    %19 = arith.truncf %18 : vector<256x8xf32> to vector<256x8xbf16>
    %c0_9 = arith.constant 0 : index
    %c0_10 = arith.constant 0 : index
    %20 = vector.load %arg4[%c0_9, %c0_10] : memref<8x64xf32, #tpu.memory_space<vmem>>, vector<8x64xf32>
    %21 = arith.truncf %20 : vector<8x64xf32> to vector<8x64xbf16>
    %cst_11 = arith.constant dense<0.000000e+00> : vector<256x64xf32>
    %22 = tpu.matmul %19, %21, %cst_11 {dimension_numbers = #tpu.dot_dimension_numbers<[1], [0], [0], [1], [0, 0, 1, 1], [], []>} : vector<256x8xbf16>, vector<8x64xbf16>, vector<256x64xf32> -> vector<256x64xf32>
    %cst_12 = arith.constant 0.000000e+00 : f32
    %23 = vector.broadcast %cst_12 : f32 to vector<256x64xf32>
    %24 = arith.maximumf %22, %23 : vector<256x64xf32>
    %c0_13 = arith.constant 0 : index
    %c0_14 = arith.constant 0 : index
    %25 = vector.load %arg2[%c0_13, %c0_14] : memref<256x1xi32, #tpu.memory_space<vmem>>, vector<256x1xi32>
    %26 = tpu.iota {dimensions = array<i32: 1>} : vector<128x16xi32>
    %27 = vector.extract_strided_slice %25 {offsets = [0, 0], sizes = [128, 1], strides = [1, 1]} : vector<256x1xi32> to vector<128x1xi32>
    %28 = vector.broadcast %27 : vector<128x1xi32> to vector<128x16xi32>
    %29 = arith.cmpi eq, %28, %26 : vector<128x16xi32>
    %30 = arith.extui %29 : vector<128x16xi1> to vector<128x16xi32>
    %31 = arith.sitofp %30 : vector<128x16xi32> to vector<128x16xf32>
    %32 = arith.truncf %31 : vector<128x16xf32> to vector<128x16xbf16>
    %33 = vector.extract_strided_slice %9 {offsets = [0, 0], sizes = [16, 64], strides = [1, 1]} : vector<32x64xf32> to vector<16x64xf32>
    %34 = arith.truncf %33 : vector<16x64xf32> to vector<16x64xbf16>
    %cst_15 = arith.constant dense<0.000000e+00> : vector<128x64xf32>
    %35 = tpu.matmul %32, %34, %cst_15 {dimension_numbers = #tpu.dot_dimension_numbers<[1], [0], [0], [1], [0, 0, 1, 1], [], []>} : vector<128x16xbf16>, vector<16x64xbf16>, vector<128x64xf32> -> vector<128x64xf32>
    %36 = vector.extract_strided_slice %24 {offsets = [0, 0], sizes = [128, 64], strides = [1, 1]} : vector<256x64xf32> to vector<128x64xf32>
    %37 = arith.mulf %36, %35 : vector<128x64xf32>
    %38 = vector.shape_cast %37 : vector<128x64xf32> to vector<16x8x64xf32>
    %cst_16 = arith.constant dense<0xFF800000> : vector<16x64xf32>
    %39 = vector.multi_reduction <maximumf>, %38, %cst_16 [1] : vector<16x8x64xf32> to vector<16x64xf32>
    %40 = vector.extract_strided_slice %39 {offsets = [0, 0], sizes = [16, 32], strides = [1, 1]} : vector<16x64xf32> to vector<16x32xf32>
    %41 = vector.extract_strided_slice %39 {offsets = [0, 32], sizes = [16, 32], strides = [1, 1]} : vector<16x64xf32> to vector<16x32xf32>
    %42 = arith.addf %40, %41 : vector<16x32xf32>
    %43 = vector.extract_strided_slice %8 {offsets = [0, 0], sizes = [16, 32], strides = [1, 1]} : vector<32x32xf32> to vector<16x32xf32>
    %44 = arith.addf %43, %42 : vector<16x32xf32>
    %c0_17 = arith.constant 0 : index
    %c0_18 = arith.constant 0 : index
    %45 = vector.load %arg16[%c0_17, %c0_18] : memref<32x32xf32, #tpu.memory_space<vmem>>, vector<16x32xf32>
    tpu.vector_store %arg16[%c0_17, %c0_18], %44 {strides = array<i32>} : memref<32x32xf32, #tpu.memory_space<vmem>>, vector<16x32xf32>,
    %46 = vector.extract_strided_slice %25 {offsets = [128, 0], sizes = [128, 1], strides = [1, 1]} : vector<256x1xi32> to vector<128x1xi32>
    %47 = vector.broadcast %46 : vector<128x1xi32> to vector<128x16xi32>
    %48 = arith.cmpi eq, %47, %26 : vector<128x16xi32>
    %49 = arith.extui %48 : vector<128x16xi1> to vector<128x16xi32>
    %50 = arith.sitofp %49 : vector<128x16xi32> to vector<128x16xf32>
    %51 = arith.truncf %50 : vector<128x16xf32> to vector<128x16xbf16>
    %52 = vector.extract_strided_slice %9 {offsets = [16, 0], sizes = [16, 64], strides = [1, 1]} : vector<32x64xf32> to vector<16x64xf32>
    %53 = arith.truncf %52 : vector<16x64xf32> to vector<16x64xbf16>
    %cst_19 = arith.constant dense<0.000000e+00> : vector<128x64xf32>
    %54 = tpu.matmul %51, %53, %cst_19 {dimension_numbers = #tpu.dot_dimension_numbers<[1], [0], [0], [1], [0, 0, 1, 1], [], []>} : vector<128x16xbf16>, vector<16x64xbf16>, vector<128x64xf32> -> vector<128x64xf32>
    %55 = vector.extract_strided_slice %24 {offsets = [128, 0], sizes = [128, 64], strides = [1, 1]} : vector<256x64xf32> to vector<128x64xf32>
    %56 = arith.mulf %55, %54 : vector<128x64xf32>
    %57 = vector.shape_cast %56 : vector<128x64xf32> to vector<16x8x64xf32>
    %cst_20 = arith.constant dense<0xFF800000> : vector<16x64xf32>
    %58 = vector.multi_reduction <maximumf>, %57, %cst_20 [1] : vector<16x8x64xf32> to vector<16x64xf32>
    %59 = vector.extract_strided_slice %58 {offsets = [0, 0], sizes = [16, 32], strides = [1, 1]} : vector<16x64xf32> to vector<16x32xf32>
    %60 = vector.extract_strided_slice %58 {offsets = [0, 32], sizes = [16, 32], strides = [1, 1]} : vector<16x64xf32> to vector<16x32xf32>
    %61 = arith.addf %59, %60 : vector<16x32xf32>
    %62 = vector.extract_strided_slice %8 {offsets = [16, 0], sizes = [16, 32], strides = [1, 1]} : vector<32x32xf32> to vector<16x32xf32>
    %63 = arith.addf %62, %61 : vector<16x32xf32>
    %c16 = arith.constant 16 : index
    %c0_21 = arith.constant 0 : index
    %64 = vector.load %arg16[%c16, %c0_21] : memref<32x32xf32, #tpu.memory_space<vmem>>, vector<16x32xf32>
    tpu.vector_store %arg16[%c16, %c0_21], %63 {strides = array<i32>} : memref<32x32xf32, #tpu.memory_space<vmem>>, vector<16x32xf32>,
    %c0_22 = arith.constant 0 : index
    %c0_23 = arith.constant 0 : index
    %65 = vector.load %arg16[%c0_22, %c0_23] : memref<32x32xf32, #tpu.memory_space<vmem>>, vector<32x32xf32>
    %66 = arith.truncf %65 : vector<32x32xf32> to vector<32x32xbf16>
    %c0_24 = arith.constant 0 : index
    %c0_25 = arith.constant 0 : index
    %67 = vector.load %arg7[%c0_24, %c0_25] : memref<32x32xf32, #tpu.memory_space<vmem>>, vector<32x32xf32>
    %68 = arith.truncf %67 : vector<32x32xf32> to vector<32x32xbf16>
    %cst_26 = arith.constant dense<0.000000e+00> : vector<32x32xf32>
    %69 = tpu.matmul %66, %68, %cst_26 {dimension_numbers = #tpu.dot_dimension_numbers<[1], [0], [0], [1], [0, 0, 1, 1], [], []>} : vector<32x32xbf16>, vector<32x32xbf16>, vector<32x32xf32> -> vector<32x32xf32>
    %c0_27 = arith.constant 0 : index
    %c0_28 = arith.constant 0 : index
    %70 = vector.load %arg8[%c0_27, %c0_28] : memref<1x32xf32, #tpu.memory_space<vmem>>, vector<1x32xf32>
    %71 = vector.broadcast %70 : vector<1x32xf32> to vector<32x32xf32>
    %72 = arith.addf %69, %71 : vector<32x32xf32>
    %c0_29 = arith.constant 0 : index
    %c0_30 = arith.constant 0 : index
    %73 = vector.load %arg9[%c0_29, %c0_30] : memref<32x32xf32, #tpu.memory_space<vmem>>, vector<32x32xf32>
    %74 = arith.truncf %73 : vector<32x32xf32> to vector<32x32xbf16>
    %cst_31 = arith.constant dense<0.000000e+00> : vector<32x32xf32>
    %75 = tpu.matmul %66, %74, %cst_31 {dimension_numbers = #tpu.dot_dimension_numbers<[1], [0], [0], [1], [0, 0, 1, 1], [], []>} : vector<32x32xbf16>, vector<32x32xbf16>, vector<32x32xf32> -> vector<32x32xf32>
    %c0_32 = arith.constant 0 : index
    %c0_33 = arith.constant 0 : index
    %76 = vector.load %arg10[%c0_32, %c0_33] : memref<1x32xf32, #tpu.memory_space<vmem>>, vector<1x32xf32>
    %77 = vector.broadcast %76 : vector<1x32xf32> to vector<32x32xf32>
    %78 = arith.addf %75, %77 : vector<32x32xf32>
    %c0_34 = arith.constant 0 : index
    %c0_35 = arith.constant 0 : index
    %79 = vector.load %arg11[%c0_34, %c0_35] : memref<32x32xf32, #tpu.memory_space<vmem>>, vector<32x32xf32>
    %80 = arith.truncf %79 : vector<32x32xf32> to vector<32x32xbf16>
    %cst_36 = arith.constant dense<0.000000e+00> : vector<32x32xf32>
    %81 = tpu.matmul %66, %80, %cst_36 {dimension_numbers = #tpu.dot_dimension_numbers<[1], [0], [0], [1], [0, 0, 1, 1], [], []>} : vector<32x32xbf16>, vector<32x32xbf16>, vector<32x32xf32> -> vector<32x32xf32>
    %c0_37 = arith.constant 0 : index
    %c0_38 = arith.constant 0 : index
    %82 = vector.load %arg12[%c0_37, %c0_38] : memref<1x32xf32, #tpu.memory_space<vmem>>, vector<1x32xf32>
    %83 = vector.broadcast %82 : vector<1x32xf32> to vector<32x32xf32>
    %84 = arith.addf %81, %83 : vector<32x32xf32>
    %85 = vector.extract_strided_slice %72 {offsets = [0, 0], sizes = [16, 8], strides = [1, 1]} : vector<32x32xf32> to vector<16x8xf32>
    %86 = arith.truncf %85 : vector<16x8xf32> to vector<16x8xbf16>
    %87 = vector.extract_strided_slice %78 {offsets = [0, 0], sizes = [16, 8], strides = [1, 1]} : vector<32x32xf32> to vector<16x8xf32>
    %88 = arith.truncf %87 : vector<16x8xf32> to vector<16x8xbf16>
    %89 = vector.extract_strided_slice %84 {offsets = [0, 0], sizes = [16, 8], strides = [1, 1]} : vector<32x32xf32> to vector<16x8xf32>
    %90 = arith.truncf %89 : vector<16x8xf32> to vector<16x8xbf16>
    %cst_39 = arith.constant dense<0.000000e+00> : vector<16x16xf32>
    %91 = tpu.matmul %86, %88, %cst_39 {dimension_numbers = #tpu.dot_dimension_numbers<[1], [1], [0], [0], [0, 0, 1, 0], [], []>} : vector<16x8xbf16>, vector<16x8xbf16>, vector<16x16xf32> -> vector<16x16xf32>
    %cst_40 = arith.constant 0.353553385 : f32
    %92 = vector.broadcast %cst_40 : f32 to vector<16x16xf32>
    %93 = arith.mulf %91, %92 : vector<16x16xf32>
    %cst_41 = arith.constant dense<0xFF800000> : vector<16xf32>
    %94 = vector.multi_reduction <maximumf>, %93, %cst_41 [1] : vector<16x16xf32> to vector<16xf32>
    %95 = vector.shape_cast %94 : vector<16xf32> to vector<16x1xf32>
    %96 = vector.broadcast %95 : vector<16x1xf32> to vector<16x16xf32>
    %97 = arith.subf %93, %96 : vector<16x16xf32>
    %98 = math.exp %97 : vector<16x16xf32>
    %cst_42 = arith.constant dense<0.000000e+00> : vector<16xf32>
    %99 = vector.multi_reduction <add>, %98, %cst_42 [1] : vector<16x16xf32> to vector<16xf32>
    %100 = vector.shape_cast %99 : vector<16xf32> to vector<16x1xf32>
    %101 = vector.broadcast %100 : vector<16x1xf32> to vector<16x16xf32>
    %102 = arith.divf %98, %101 : vector<16x16xf32>
    %103 = arith.truncf %102 : vector<16x16xf32> to vector<16x16xbf16>
    %cst_43 = arith.constant dense<0.000000e+00> : vector<16x8xf32>
    %104 = tpu.matmul %103, %90, %cst_43 {dimension_numbers = #tpu.dot_dimension_numbers<[1], [0], [0], [1], [0, 0, 1, 1], [], []>} : vector<16x16xbf16>, vector<16x8xbf16>, vector<16x8xf32> -> vector<16x8xf32>
    %c0_44 = arith.constant 0 : index
    %c0_45 = arith.constant 0 : index
    %105 = vector.load %arg17[%c0_44, %c0_45] : memref<32x32xf32, #tpu.memory_space<vmem>>, vector<16x8xf32>
    tpu.vector_store %arg17[%c0_44, %c0_45], %104 {strides = array<i32>} : memref<32x32xf32, #tpu.memory_space<vmem>>, vector<16x8xf32>,
    %106 = vector.extract_strided_slice %72 {offsets = [0, 8], sizes = [16, 8], strides = [1, 1]} : vector<32x32xf32> to vector<16x8xf32>
    %107 = arith.truncf %106 : vector<16x8xf32> to vector<16x8xbf16>
    %108 = vector.extract_strided_slice %78 {offsets = [0, 8], sizes = [16, 8], strides = [1, 1]} : vector<32x32xf32> to vector<16x8xf32>
    %109 = arith.truncf %108 : vector<16x8xf32> to vector<16x8xbf16>
    %110 = vector.extract_strided_slice %84 {offsets = [0, 8], sizes = [16, 8], strides = [1, 1]} : vector<32x32xf32> to vector<16x8xf32>
    %111 = arith.truncf %110 : vector<16x8xf32> to vector<16x8xbf16>
    %cst_46 = arith.constant dense<0.000000e+00> : vector<16x16xf32>
    %112 = tpu.matmul %107, %109, %cst_46 {dimension_numbers = #tpu.dot_dimension_numbers<[1], [1], [0], [0], [0, 0, 1, 0], [], []>} : vector<16x8xbf16>, vector<16x8xbf16>, vector<16x16xf32> -> vector<16x16xf32>
    %cst_47 = arith.constant 0.353553385 : f32
    %113 = vector.broadcast %cst_47 : f32 to vector<16x16xf32>
    %114 = arith.mulf %112, %113 : vector<16x16xf32>
    %cst_48 = arith.constant dense<0xFF800000> : vector<16xf32>
    %115 = vector.multi_reduction <maximumf>, %114, %cst_48 [1] : vector<16x16xf32> to vector<16xf32>
    %116 = vector.shape_cast %115 : vector<16xf32> to vector<16x1xf32>
    %117 = vector.broadcast %116 : vector<16x1xf32> to vector<16x16xf32>
    %118 = arith.subf %114, %117 : vector<16x16xf32>
    %119 = math.exp %118 : vector<16x16xf32>
    %cst_49 = arith.constant dense<0.000000e+00> : vector<16xf32>
    %120 = vector.multi_reduction <add>, %119, %cst_49 [1] : vector<16x16xf32> to vector<16xf32>
    %121 = vector.shape_cast %120 : vector<16xf32> to vector<16x1xf32>
    %122 = vector.broadcast %121 : vector<16x1xf32> to vector<16x16xf32>
    %123 = arith.divf %119, %122 : vector<16x16xf32>
    %124 = arith.truncf %123 : vector<16x16xf32> to vector<16x16xbf16>
    %cst_50 = arith.constant dense<0.000000e+00> : vector<16x8xf32>
    %125 = tpu.matmul %124, %111, %cst_50 {dimension_numbers = #tpu.dot_dimension_numbers<[1], [0], [0], [1], [0, 0, 1, 1], [], []>} : vector<16x16xbf16>, vector<16x8xbf16>, vector<16x8xf32> -> vector<16x8xf32>
    %c0_51 = arith.constant 0 : index
    %c8 = arith.constant 8 : index
    %126 = vector.load %arg17[%c0_51, %c8] : memref<32x32xf32, #tpu.memory_space<vmem>>, vector<16x8xf32>
    tpu.vector_store %arg17[%c0_51, %c8], %125 {strides = array<i32>} : memref<32x32xf32, #tpu.memory_space<vmem>>, vector<16x8xf32>,
    %127 = vector.extract_strided_slice %72 {offsets = [0, 16], sizes = [16, 8], strides = [1, 1]} : vector<32x32xf32> to vector<16x8xf32>
    %128 = arith.truncf %127 : vector<16x8xf32> to vector<16x8xbf16>
    %129 = vector.extract_strided_slice %78 {offsets = [0, 16], sizes = [16, 8], strides = [1, 1]} : vector<32x32xf32> to vector<16x8xf32>
    %130 = arith.truncf %129 : vector<16x8xf32> to vector<16x8xbf16>
    %131 = vector.extract_strided_slice %84 {offsets = [0, 16], sizes = [16, 8], strides = [1, 1]} : vector<32x32xf32> to vector<16x8xf32>
    %132 = arith.truncf %131 : vector<16x8xf32> to vector<16x8xbf16>
    %cst_52 = arith.constant dense<0.000000e+00> : vector<16x16xf32>
    %133 = tpu.matmul %128, %130, %cst_52 {dimension_numbers = #tpu.dot_dimension_numbers<[1], [1], [0], [0], [0, 0, 1, 0], [], []>} : vector<16x8xbf16>, vector<16x8xbf16>, vector<16x16xf32> -> vector<16x16xf32>
    %cst_53 = arith.constant 0.353553385 : f32
    %134 = vector.broadcast %cst_53 : f32 to vector<16x16xf32>
    %135 = arith.mulf %133, %134 : vector<16x16xf32>
    %cst_54 = arith.constant dense<0xFF800000> : vector<16xf32>
    %136 = vector.multi_reduction <maximumf>, %135, %cst_54 [1] : vector<16x16xf32> to vector<16xf32>
    %137 = vector.shape_cast %136 : vector<16xf32> to vector<16x1xf32>
    %138 = vector.broadcast %137 : vector<16x1xf32> to vector<16x16xf32>
    %139 = arith.subf %135, %138 : vector<16x16xf32>
    %140 = math.exp %139 : vector<16x16xf32>
    %cst_55 = arith.constant dense<0.000000e+00> : vector<16xf32>
    %141 = vector.multi_reduction <add>, %140, %cst_55 [1] : vector<16x16xf32> to vector<16xf32>
    %142 = vector.shape_cast %141 : vector<16xf32> to vector<16x1xf32>
    %143 = vector.broadcast %142 : vector<16x1xf32> to vector<16x16xf32>
    %144 = arith.divf %140, %143 : vector<16x16xf32>
    %145 = arith.truncf %144 : vector<16x16xf32> to vector<16x16xbf16>
    %cst_56 = arith.constant dense<0.000000e+00> : vector<16x8xf32>
    %146 = tpu.matmul %145, %132, %cst_56 {dimension_numbers = #tpu.dot_dimension_numbers<[1], [0], [0], [1], [0, 0, 1, 1], [], []>} : vector<16x16xbf16>, vector<16x8xbf16>, vector<16x8xf32> -> vector<16x8xf32>
    %c0_57 = arith.constant 0 : index
    %c16_58 = arith.constant 16 : index
    %147 = vector.load %arg17[%c0_57, %c16_58] : memref<32x32xf32, #tpu.memory_space<vmem>>, vector<16x8xf32>
    tpu.vector_store %arg17[%c0_57, %c16_58], %146 {strides = array<i32>} : memref<32x32xf32, #tpu.memory_space<vmem>>, vector<16x8xf32>,
    %148 = vector.extract_strided_slice %72 {offsets = [0, 24], sizes = [16, 8], strides = [1, 1]} : vector<32x32xf32> to vector<16x8xf32>
    %149 = arith.truncf %148 : vector<16x8xf32> to vector<16x8xbf16>
    %150 = vector.extract_strided_slice %78 {offsets = [0, 24], sizes = [16, 8], strides = [1, 1]} : vector<32x32xf32> to vector<16x8xf32>
    %151 = arith.truncf %150 : vector<16x8xf32> to vector<16x8xbf16>
    %152 = vector.extract_strided_slice %84 {offsets = [0, 24], sizes = [16, 8], strides = [1, 1]} : vector<32x32xf32> to vector<16x8xf32>
    %153 = arith.truncf %152 : vector<16x8xf32> to vector<16x8xbf16>
    %cst_59 = arith.constant dense<0.000000e+00> : vector<16x16xf32>
    %154 = tpu.matmul %149, %151, %cst_59 {dimension_numbers = #tpu.dot_dimension_numbers<[1], [1], [0], [0], [0, 0, 1, 0], [], []>} : vector<16x8xbf16>, vector<16x8xbf16>, vector<16x16xf32> -> vector<16x16xf32>
    %cst_60 = arith.constant 0.353553385 : f32
    %155 = vector.broadcast %cst_60 : f32 to vector<16x16xf32>
    %156 = arith.mulf %154, %155 : vector<16x16xf32>
    %cst_61 = arith.constant dense<0xFF800000> : vector<16xf32>
    %157 = vector.multi_reduction <maximumf>, %156, %cst_61 [1] : vector<16x16xf32> to vector<16xf32>
    %158 = vector.shape_cast %157 : vector<16xf32> to vector<16x1xf32>
    %159 = vector.broadcast %158 : vector<16x1xf32> to vector<16x16xf32>
    %160 = arith.subf %156, %159 : vector<16x16xf32>
    %161 = math.exp %160 : vector<16x16xf32>
    %cst_62 = arith.constant dense<0.000000e+00> : vector<16xf32>
    %162 = vector.multi_reduction <add>, %161, %cst_62 [1] : vector<16x16xf32> to vector<16xf32>
    %163 = vector.shape_cast %162 : vector<16xf32> to vector<16x1xf32>
    %164 = vector.broadcast %163 : vector<16x1xf32> to vector<16x16xf32>
    %165 = arith.divf %161, %164 : vector<16x16xf32>
    %166 = arith.truncf %165 : vector<16x16xf32> to vector<16x16xbf16>
    %cst_63 = arith.constant dense<0.000000e+00> : vector<16x8xf32>
    %167 = tpu.matmul %166, %153, %cst_63 {dimension_numbers = #tpu.dot_dimension_numbers<[1], [0], [0], [1], [0, 0, 1, 1], [], []>} : vector<16x16xbf16>, vector<16x8xbf16>, vector<16x8xf32> -> vector<16x8xf32>
    %c0_64 = arith.constant 0 : index
    %c24 = arith.constant 24 : index
    %168 = vector.load %arg17[%c0_64, %c24] : memref<32x32xf32, #tpu.memory_space<vmem>>, vector<16x8xf32>
    tpu.vector_store %arg17[%c0_64, %c24], %167 {strides = array<i32>} : memref<32x32xf32, #tpu.memory_space<vmem>>, vector<16x8xf32>,
    %169 = vector.extract_strided_slice %72 {offsets = [16, 0], sizes = [16, 8], strides = [1, 1]} : vector<32x32xf32> to vector<16x8xf32>
    %170 = arith.truncf %169 : vector<16x8xf32> to vector<16x8xbf16>
    %171 = vector.extract_strided_slice %78 {offsets = [16, 0], sizes = [16, 8], strides = [1, 1]} : vector<32x32xf32> to vector<16x8xf32>
    %172 = arith.truncf %171 : vector<16x8xf32> to vector<16x8xbf16>
    %173 = vector.extract_strided_slice %84 {offsets = [16, 0], sizes = [16, 8], strides = [1, 1]} : vector<32x32xf32> to vector<16x8xf32>
    %174 = arith.truncf %173 : vector<16x8xf32> to vector<16x8xbf16>
    %cst_65 = arith.constant dense<0.000000e+00> : vector<16x16xf32>
    %175 = tpu.matmul %170, %172, %cst_65 {dimension_numbers = #tpu.dot_dimension_numbers<[1], [1], [0], [0], [0, 0, 1, 0], [], []>} : vector<16x8xbf16>, vector<16x8xbf16>, vector<16x16xf32> -> vector<16x16xf32>
    %cst_66 = arith.constant 0.353553385 : f32
    %176 = vector.broadcast %cst_66 : f32 to vector<16x16xf32>
    %177 = arith.mulf %175, %176 : vector<16x16xf32>
    %cst_67 = arith.constant dense<0xFF800000> : vector<16xf32>
    %178 = vector.multi_reduction <maximumf>, %177, %cst_67 [1] : vector<16x16xf32> to vector<16xf32>
    %179 = vector.shape_cast %178 : vector<16xf32> to vector<16x1xf32>
    %180 = vector.broadcast %179 : vector<16x1xf32> to vector<16x16xf32>
    %181 = arith.subf %177, %180 : vector<16x16xf32>
    %182 = math.exp %181 : vector<16x16xf32>
    %cst_68 = arith.constant dense<0.000000e+00> : vector<16xf32>
    %183 = vector.multi_reduction <add>, %182, %cst_68 [1] : vector<16x16xf32> to vector<16xf32>
    %184 = vector.shape_cast %183 : vector<16xf32> to vector<16x1xf32>
    %185 = vector.broadcast %184 : vector<16x1xf32> to vector<16x16xf32>
    %186 = arith.divf %182, %185 : vector<16x16xf32>
    %187 = arith.truncf %186 : vector<16x16xf32> to vector<16x16xbf16>
    %cst_69 = arith.constant dense<0.000000e+00> : vector<16x8xf32>
    %188 = tpu.matmul %187, %174, %cst_69 {dimension_numbers = #tpu.dot_dimension_numbers<[1], [0], [0], [1], [0, 0, 1, 1], [], []>} : vector<16x16xbf16>, vector<16x8xbf16>, vector<16x8xf32> -> vector<16x8xf32>
    %c16_70 = arith.constant 16 : index
    %c0_71 = arith.constant 0 : index
    %189 = vector.load %arg17[%c16_70, %c0_71] : memref<32x32xf32, #tpu.memory_space<vmem>>, vector<16x8xf32>
    tpu.vector_store %arg17[%c16_70, %c0_71], %188 {strides = array<i32>} : memref<32x32xf32, #tpu.memory_space<vmem>>, vector<16x8xf32>,
    %190 = vector.extract_strided_slice %72 {offsets = [16, 8], sizes = [16, 8], strides = [1, 1]} : vector<32x32xf32> to vector<16x8xf32>
    %191 = arith.truncf %190 : vector<16x8xf32> to vector<16x8xbf16>
    %192 = vector.extract_strided_slice %78 {offsets = [16, 8], sizes = [16, 8], strides = [1, 1]} : vector<32x32xf32> to vector<16x8xf32>
    %193 = arith.truncf %192 : vector<16x8xf32> to vector<16x8xbf16>
    %194 = vector.extract_strided_slice %84 {offsets = [16, 8], sizes = [16, 8], strides = [1, 1]} : vector<32x32xf32> to vector<16x8xf32>
    %195 = arith.truncf %194 : vector<16x8xf32> to vector<16x8xbf16>
    %cst_72 = arith.constant dense<0.000000e+00> : vector<16x16xf32>
    %196 = tpu.matmul %191, %193, %cst_72 {dimension_numbers = #tpu.dot_dimension_numbers<[1], [1], [0], [0], [0, 0, 1, 0], [], []>} : vector<16x8xbf16>, vector<16x8xbf16>, vector<16x16xf32> -> vector<16x16xf32>
    %cst_73 = arith.constant 0.353553385 : f32
    %197 = vector.broadcast %cst_73 : f32 to vector<16x16xf32>
    %198 = arith.mulf %196, %197 : vector<16x16xf32>
    %cst_74 = arith.constant dense<0xFF800000> : vector<16xf32>
    %199 = vector.multi_reduction <maximumf>, %198, %cst_74 [1] : vector<16x16xf32> to vector<16xf32>
    %200 = vector.shape_cast %199 : vector<16xf32> to vector<16x1xf32>
    %201 = vector.broadcast %200 : vector<16x1xf32> to vector<16x16xf32>
    %202 = arith.subf %198, %201 : vector<16x16xf32>
    %203 = math.exp %202 : vector<16x16xf32>
    %cst_75 = arith.constant dense<0.000000e+00> : vector<16xf32>
    %204 = vector.multi_reduction <add>, %203, %cst_75 [1] : vector<16x16xf32> to vector<16xf32>
    %205 = vector.shape_cast %204 : vector<16xf32> to vector<16x1xf32>
    %206 = vector.broadcast %205 : vector<16x1xf32> to vector<16x16xf32>
    %207 = arith.divf %203, %206 : vector<16x16xf32>
    %208 = arith.truncf %207 : vector<16x16xf32> to vector<16x16xbf16>
    %cst_76 = arith.constant dense<0.000000e+00> : vector<16x8xf32>
    %209 = tpu.matmul %208, %195, %cst_76 {dimension_numbers = #tpu.dot_dimension_numbers<[1], [0], [0], [1], [0, 0, 1, 1], [], []>} : vector<16x16xbf16>, vector<16x8xbf16>, vector<16x8xf32> -> vector<16x8xf32>
    %c16_77 = arith.constant 16 : index
    %c8_78 = arith.constant 8 : index
    %210 = vector.load %arg17[%c16_77, %c8_78] : memref<32x32xf32, #tpu.memory_space<vmem>>, vector<16x8xf32>
    tpu.vector_store %arg17[%c16_77, %c8_78], %209 {strides = array<i32>} : memref<32x32xf32, #tpu.memory_space<vmem>>, vector<16x8xf32>,
    %211 = vector.extract_strided_slice %72 {offsets = [16, 16], sizes = [16, 8], strides = [1, 1]} : vector<32x32xf32> to vector<16x8xf32>
    %212 = arith.truncf %211 : vector<16x8xf32> to vector<16x8xbf16>
    %213 = vector.extract_strided_slice %78 {offsets = [16, 16], sizes = [16, 8], strides = [1, 1]} : vector<32x32xf32> to vector<16x8xf32>
    %214 = arith.truncf %213 : vector<16x8xf32> to vector<16x8xbf16>
    %215 = vector.extract_strided_slice %84 {offsets = [16, 16], sizes = [16, 8], strides = [1, 1]} : vector<32x32xf32> to vector<16x8xf32>
    %216 = arith.truncf %215 : vector<16x8xf32> to vector<16x8xbf16>
    %cst_79 = arith.constant dense<0.000000e+00> : vector<16x16xf32>
    %217 = tpu.matmul %212, %214, %cst_79 {dimension_numbers = #tpu.dot_dimension_numbers<[1], [1], [0], [0], [0, 0, 1, 0], [], []>} : vector<16x8xbf16>, vector<16x8xbf16>, vector<16x16xf32> -> vector<16x16xf32>
    %cst_80 = arith.constant 0.353553385 : f32
    %218 = vector.broadcast %cst_80 : f32 to vector<16x16xf32>
    %219 = arith.mulf %217, %218 : vector<16x16xf32>
    %cst_81 = arith.constant dense<0xFF800000> : vector<16xf32>
    %220 = vector.multi_reduction <maximumf>, %219, %cst_81 [1] : vector<16x16xf32> to vector<16xf32>
    %221 = vector.shape_cast %220 : vector<16xf32> to vector<16x1xf32>
    %222 = vector.broadcast %221 : vector<16x1xf32> to vector<16x16xf32>
    %223 = arith.subf %219, %222 : vector<16x16xf32>
    %224 = math.exp %223 : vector<16x16xf32>
    %cst_82 = arith.constant dense<0.000000e+00> : vector<16xf32>
    %225 = vector.multi_reduction <add>, %224, %cst_82 [1] : vector<16x16xf32> to vector<16xf32>
    %226 = vector.shape_cast %225 : vector<16xf32> to vector<16x1xf32>
    %227 = vector.broadcast %226 : vector<16x1xf32> to vector<16x16xf32>
    %228 = arith.divf %224, %227 : vector<16x16xf32>
    %229 = arith.truncf %228 : vector<16x16xf32> to vector<16x16xbf16>
    %cst_83 = arith.constant dense<0.000000e+00> : vector<16x8xf32>
    %230 = tpu.matmul %229, %216, %cst_83 {dimension_numbers = #tpu.dot_dimension_numbers<[1], [0], [0], [1], [0, 0, 1, 1], [], []>} : vector<16x16xbf16>, vector<16x8xbf16>, vector<16x8xf32> -> vector<16x8xf32>
    %c16_84 = arith.constant 16 : index
    %c16_85 = arith.constant 16 : index
    %231 = vector.load %arg17[%c16_84, %c16_85] : memref<32x32xf32, #tpu.memory_space<vmem>>, vector<16x8xf32>
    tpu.vector_store %arg17[%c16_84, %c16_85], %230 {strides = array<i32>} : memref<32x32xf32, #tpu.memory_space<vmem>>, vector<16x8xf32>,
    %232 = vector.extract_strided_slice %72 {offsets = [16, 24], sizes = [16, 8], strides = [1, 1]} : vector<32x32xf32> to vector<16x8xf32>
    %233 = arith.truncf %232 : vector<16x8xf32> to vector<16x8xbf16>
    %234 = vector.extract_strided_slice %78 {offsets = [16, 24], sizes = [16, 8], strides = [1, 1]} : vector<32x32xf32> to vector<16x8xf32>
    %235 = arith.truncf %234 : vector<16x8xf32> to vector<16x8xbf16>
    %236 = vector.extract_strided_slice %84 {offsets = [16, 24], sizes = [16, 8], strides = [1, 1]} : vector<32x32xf32> to vector<16x8xf32>
    %237 = arith.truncf %236 : vector<16x8xf32> to vector<16x8xbf16>
    %cst_86 = arith.constant dense<0.000000e+00> : vector<16x16xf32>
    %238 = tpu.matmul %233, %235, %cst_86 {dimension_numbers = #tpu.dot_dimension_numbers<[1], [1], [0], [0], [0, 0, 1, 0], [], []>} : vector<16x8xbf16>, vector<16x8xbf16>, vector<16x16xf32> -> vector<16x16xf32>
    %cst_87 = arith.constant 0.353553385 : f32
    %239 = vector.broadcast %cst_87 : f32 to vector<16x16xf32>
    %240 = arith.mulf %238, %239 : vector<16x16xf32>
    %cst_88 = arith.constant dense<0xFF800000> : vector<16xf32>
    %241 = vector.multi_reduction <maximumf>, %240, %cst_88 [1] : vector<16x16xf32> to vector<16xf32>
    %242 = vector.shape_cast %241 : vector<16xf32> to vector<16x1xf32>
    %243 = vector.broadcast %242 : vector<16x1xf32> to vector<16x16xf32>
    %244 = arith.subf %240, %243 : vector<16x16xf32>
    %245 = math.exp %244 : vector<16x16xf32>
    %cst_89 = arith.constant dense<0.000000e+00> : vector<16xf32>
    %246 = vector.multi_reduction <add>, %245, %cst_89 [1] : vector<16x16xf32> to vector<16xf32>
    %247 = vector.shape_cast %246 : vector<16xf32> to vector<16x1xf32>
    %248 = vector.broadcast %247 : vector<16x1xf32> to vector<16x16xf32>
    %249 = arith.divf %245, %248 : vector<16x16xf32>
    %250 = arith.truncf %249 : vector<16x16xf32> to vector<16x16xbf16>
    %cst_90 = arith.constant dense<0.000000e+00> : vector<16x8xf32>
    %251 = tpu.matmul %250, %237, %cst_90 {dimension_numbers = #tpu.dot_dimension_numbers<[1], [0], [0], [1], [0, 0, 1, 1], [], []>} : vector<16x16xbf16>, vector<16x8xbf16>, vector<16x8xf32> -> vector<16x8xf32>
    %c16_91 = arith.constant 16 : index
    %c24_92 = arith.constant 24 : index
    %252 = vector.load %arg17[%c16_91, %c24_92] : memref<32x32xf32, #tpu.memory_space<vmem>>, vector<16x8xf32>
    tpu.vector_store %arg17[%c16_91, %c24_92], %251 {strides = array<i32>} : memref<32x32xf32, #tpu.memory_space<vmem>>, vector<16x8xf32>,
    %c0_93 = arith.constant 0 : index
    %c0_94 = arith.constant 0 : index
    %253 = vector.load %arg17[%c0_93, %c0_94] : memref<32x32xf32, #tpu.memory_space<vmem>>, vector<32x32xf32>
    %254 = arith.truncf %253 : vector<32x32xf32> to vector<32x32xbf16>
    %c0_95 = arith.constant 0 : index
    %c0_96 = arith.constant 0 : index
    %255 = vector.load %arg13[%c0_95, %c0_96] : memref<32x32xf32, #tpu.memory_space<vmem>>, vector<32x32xf32>
    %256 = arith.truncf %255 : vector<32x32xf32> to vector<32x32xbf16>
    %cst_97 = arith.constant dense<0.000000e+00> : vector<32x32xf32>
    %257 = tpu.matmul %254, %256, %cst_97 {dimension_numbers = #tpu.dot_dimension_numbers<[1], [0], [0], [1], [0, 0, 1, 1], [], []>} : vector<32x32xbf16>, vector<32x32xbf16>, vector<32x32xf32> -> vector<32x32xf32>
    %c0_98 = arith.constant 0 : index
    %c0_99 = arith.constant 0 : index
    %258 = vector.load %arg14[%c0_98, %c0_99] : memref<1x32xf32, #tpu.memory_space<vmem>>, vector<1x32xf32>
    %259 = vector.broadcast %258 : vector<1x32xf32> to vector<32x32xf32>
    %260 = arith.addf %257, %259 : vector<32x32xf32>
    %c0_100 = arith.constant 0 : index
    %c0_101 = arith.constant 0 : index
    %261 = vector.load %arg15[%c0_100, %c0_101] : memref<32x32xf32, #tpu.memory_space<vmem>>, vector<32x32xf32>
    tpu.vector_store %arg15[%c0_100, %c0_101], %260 {strides = array<i32>} : memref<32x32xf32, #tpu.memory_space<vmem>>, vector<32x32xf32>,
    return
  }
  func.func @transform_0(%arg0: i32) -> (i32, i32) {
    %c0_i32 = arith.constant 0 : i32
    %c0_i32_0 = arith.constant 0 : i32
    return %arg0, %c0_i32 : i32, i32
  }
  func.func @transform_1(%arg0: i32) -> (i32, i32) {
    %c0_i32 = arith.constant 0 : i32
    %c0_i32_0 = arith.constant 0 : i32
    return %arg0, %c0_i32 : i32, i32
  }
  func.func @transform_2(%arg0: i32) -> (i32, i32) {
    %c0_i32 = arith.constant 0 : i32
    %c0_i32_0 = arith.constant 0 : i32
    return %arg0, %c0_i32 : i32, i32
  }
  func.func @transform_3(%arg0: i32) -> (i32, i32) {
    %c0_i32 = arith.constant 0 : i32
    %c0_i32_0 = arith.constant 0 : i32
    %c0_i32_1 = arith.constant 0 : i32
    return %c0_i32, %c0_i32_0 : i32, i32
  }
  func.func @transform_4(%arg0: i32) -> (i32, i32) {
    %c0_i32 = arith.constant 0 : i32
    %c0_i32_0 = arith.constant 0 : i32
    %c0_i32_1 = arith.constant 0 : i32
    return %c0_i32, %c0_i32_0 : i32, i32
  }
  func.func @transform_5(%arg0: i32) -> (i32, i32) {
    %c0_i32 = arith.constant 0 : i32
    %c0_i32_0 = arith.constant 0 : i32
    %c0_i32_1 = arith.constant 0 : i32
    return %c0_i32, %c0_i32_0 : i32, i32
  }
  func.func @transform_6(%arg0: i32) -> (i32, i32) {
    %c0_i32 = arith.constant 0 : i32
    %c0_i32_0 = arith.constant 0 : i32
    %c0_i32_1 = arith.constant 0 : i32
    return %c0_i32, %c0_i32_0 : i32, i32
  }
  func.func @transform_7(%arg0: i32) -> (i32, i32) {
    %c0_i32 = arith.constant 0 : i32
    %c0_i32_0 = arith.constant 0 : i32
    %c0_i32_1 = arith.constant 0 : i32
    return %c0_i32, %c0_i32_0 : i32, i32
  }
  func.func @transform_8(%arg0: i32) -> (i32, i32) {
    %c0_i32 = arith.constant 0 : i32
    %c0_i32_0 = arith.constant 0 : i32
    %c0_i32_1 = arith.constant 0 : i32
    return %c0_i32, %c0_i32_0 : i32, i32
  }
  func.func @transform_9(%arg0: i32) -> (i32, i32) {
    %c0_i32 = arith.constant 0 : i32
    %c0_i32_0 = arith.constant 0 : i32
    %c0_i32_1 = arith.constant 0 : i32
    return %c0_i32, %c0_i32_0 : i32, i32
  }
  func.func @transform_10(%arg0: i32) -> (i32, i32) {
    %c0_i32 = arith.constant 0 : i32
    %c0_i32_0 = arith.constant 0 : i32
    %c0_i32_1 = arith.constant 0 : i32
    return %c0_i32, %c0_i32_0 : i32, i32
  }
  func.func @transform_11(%arg0: i32) -> (i32, i32) {
    %c0_i32 = arith.constant 0 : i32
    %c0_i32_0 = arith.constant 0 : i32
    %c0_i32_1 = arith.constant 0 : i32
    return %c0_i32, %c0_i32_0 : i32, i32
  }
  func.func @transform_12(%arg0: i32) -> (i32, i32) {
    %c0_i32 = arith.constant 0 : i32
    %c0_i32_0 = arith.constant 0 : i32
    %c0_i32_1 = arith.constant 0 : i32
    return %c0_i32, %c0_i32_0 : i32, i32
  }
  func.func @transform_13(%arg0: i32) -> (i32, i32) {
    %c0_i32 = arith.constant 0 : i32
    %c0_i32_0 = arith.constant 0 : i32
    %c0_i32_1 = arith.constant 0 : i32
    return %c0_i32, %c0_i32_0 : i32, i32
  }
  func.func @transform_14(%arg0: i32) -> (i32, i32) {
    %c0_i32 = arith.constant 0 : i32
    %c0_i32_0 = arith.constant 0 : i32
    return %arg0, %c0_i32 : i32, i32
  }
}

</mosaic_0001>

<llo_original>
// kernel: tpu_custom_call.1
$region0: #{tpu_custom_call.1}
  #allocation0 [shape = 'u32[]', space=smem, size = 0x4, offset = 0x4, fixed_abs, tag = 'smem constant byte address 0x4 - core index']
  #allocation1 [shape = 'u32[72,128]{1,0:T(1,128)}', space=vmem, size = 0x9000, scoped, tag = 'internal scratch']
  #allocation2 [shape = 'f32[32,32]{1,0:T(8,128)}', space=vmem, size = 0x4000, scoped, tag = 'scratch operand']
  #allocation3 [shape = 'f32[32,32]{1,0:T(8,128)}', space=vmem, size = 0x4000, scoped, tag = 'scratch operand']
  %s0 = inlined_call_operand.vmem [shape: f32[64,16], index: 0, kind: input, shape index: {}]
  %s1 = inlined_call_operand.vmem [shape: s32[512,1], index: 1, kind: input, shape index: {}]
  %s2 = inlined_call_operand.vmem [shape: f32[512,8], index: 2, kind: input, shape index: {}]
  %s3 = inlined_call_operand.vmem [shape: f32[8,64], index: 3, kind: input, shape index: {}]
  %s4 = inlined_call_operand.vmem [shape: f32[16,96], index: 4, kind: input, shape index: {}]
  %s5 = inlined_call_operand.vmem [shape: f32[1,96], index: 5, kind: input, shape index: {}]
  %s6 = inlined_call_operand.vmem [shape: f32[32,32], index: 6, kind: input, shape index: {}]
  %s7 = inlined_call_operand.vmem [shape: f32[1,32], index: 7, kind: input, shape index: {}]
  %s8 = inlined_call_operand.vmem [shape: f32[32,32], index: 8, kind: input, shape index: {}]
  %s9 = inlined_call_operand.vmem [shape: f32[1,32], index: 9, kind: input, shape index: {}]
  %s10 = inlined_call_operand.vmem [shape: f32[32,32], index: 10, kind: input, shape index: {}]
  %s11 = inlined_call_operand.vmem [shape: f32[1,32], index: 11, kind: input, shape index: {}]
  %s12 = inlined_call_operand.vmem [shape: f32[32,32], index: 12, kind: input, shape index: {}]
  %s13 = inlined_call_operand.vmem [shape: f32[1,32], index: 13, kind: input, shape index: {}]
  %s14 = inlined_call_operand.vmem [shape: f32[64,32], index: 14, kind: output, shape index: {}]
  %s15 = sld [smem:[#allocation0]]
  $region89: #{tpu_custom_call.1} parent=0
    _
  %s17 = ssub.s32 1, %s15
  %s18 = scalar_select 0, %s17, %s15
  loop: start=0, step=1, limit=4
  $region2: #{tpu_custom_call.1} parent=0 // loop_pre_header
    _
  $region3: #{tpu_custom_call.1} parent=0 // loop_header
    %s20 = sphi 0, %s24
    %p21 = scmp.ge.s32.totalorder %s20, 4
    %s30 = sphi 0, %s32
    %s33 = sphi 0, %s30
    %s34 = sphi 0, %s33
    %s50 = sphi 0, %s34
    %s56 = sphi 0, %s58
    %s59 = sphi 0, %s56
    %s60 = sphi 0, %s59
    %s76 = sphi 0, %s60
    %s82 = sphi 0, %s84
    %s85 = sphi 0, %s82
    %s86 = sphi 0, %s85
    %s102 = sphi 0, %s86
    %s106 = sphi 0, %s106
    %s108 = sphi 0, %s106
    %s109 = sphi 0, %s108
    %s123 = sphi 0, %s109
    %s127 = sphi 0, %s127
    %s129 = sphi 0, %s127
    %s130 = sphi 0, %s129
    %s144 = sphi 0, %s130
    %s148 = sphi 0, %s148
    %s150 = sphi 0, %s148
    %s151 = sphi 0, %s150
    %s165 = sphi 0, %s151
    %s169 = sphi 0, %s169
    %s171 = sphi 0, %s169
    %s172 = sphi 0, %s171
    %s186 = sphi 0, %s172
    %s190 = sphi 0, %s190
    %s192 = sphi 0, %s190
    %s193 = sphi 0, %s192
    %s207 = sphi 0, %s193
    %s211 = sphi 0, %s211
    %s213 = sphi 0, %s211
    %s214 = sphi 0, %s213
    %s228 = sphi 0, %s214
    %s232 = sphi 0, %s232
    %s234 = sphi 0, %s232
    %s235 = sphi 0, %s234
    %s249 = sphi 0, %s235
    %s253 = sphi 0, %s253
    %s255 = sphi 0, %s253
    %s256 = sphi 0, %s255
    %s270 = sphi 0, %s256
    %s274 = sphi 0, %s274
    %s276 = sphi 0, %s274
    %s277 = sphi 0, %s276
    %s291 = sphi 0, %s277
    %s295 = sphi 0, %s295
    %s297 = sphi 0, %s295
    %s298 = sphi 0, %s297
    %s312 = sphi 0, %s298
    %s316 = sphi 0, %s316
    %s318 = sphi 0, %s316
    %s319 = sphi 0, %s318
    %s333 = sphi 0, %s319
    %s339 = sphi 0, %s341
    %s342 = sphi 0, %s339
    %s343 = sphi 0, %s342
    %s359 = sphi 0, %s343
  $region4: #{tpu_custom_call.1} parent=0 // loop_header_branch
    %23 = sbr.rel (%p21) target = $region8
  $region5: #{tpu_custom_call.1} parent=0 // loop_body
    %s25 = ssub.s32 %s20, 1
    %s26 = ssub.s32 %s20, 2
    %s27 = sadd.s32 %s20, 1
    %s28 = ssub.s32 %s20, %s27
    %p29 = scmp.eq.s32.totalorder %s28, 0
    %s31 = sadd.s32 %s30, 1
    %s32 = scalar_select %p29, %s30, %s31
    %p35 = pneg %p29
    %p36 = scmp.eq.s32.totalorder %s20, 1
    %p37 = por %p35, %p36
    %p38 = scmp.ne.s32.totalorder %s30, %s33
    %p39 = scmp.eq.s32.totalorder %s20, 0
    %p40 = por %p38, %p39
    %p41 = scmp.ne.s32.totalorder %s30, %s33
    %p42 = scmp.eq.s32.totalorder %s25, 1
    %p43 = por %p41, %p42
    %p44 = scmp.ne.s32.totalorder %s33, %s34
    %p45 = scmp.eq.s32.totalorder %s25, 0
    %p46 = por %p44, %p45
    %p47 = scmp.ne.s32.totalorder %s33, %s34
    %p48 = scmp.eq.s32.totalorder %s26, 1
    %p49 = por %p47, %p48
    %p51 = scmp.ne.s32.totalorder %s34, %s50
    %p52 = scmp.eq.s32.totalorder %s26, 0
    %p53 = por %p51, %p52
    %s54 = ssub.s32 %s20, %s27
    %p55 = scmp.eq.s32.totalorder %s54, 0
    %s57 = sadd.s32 %s56, 1
    %s58 = scalar_select %p55, %s56, %s57
    %p61 = pneg %p55
    %p62 = scmp.eq.s32.totalorder %s20, 1
    %p63 = por %p61, %p62
    %p64 = scmp.ne.s32.totalorder %s56, %s59
    %p65 = scmp.eq.s32.totalorder %s20, 0
    %p66 = por %p64, %p65
    %p67 = scmp.ne.s32.totalorder %s56, %s59
    %p68 = scmp.eq.s32.totalorder %s25, 1
    %p69 = por %p67, %p68
    %p70 = scmp.ne.s32.totalorder %s59, %s60
    %p71 = scmp.eq.s32.totalorder %s25, 0
    %p72 = por %p70, %p71
    %p73 = scmp.ne.s32.totalorder %s59, %s60
    %p74 = scmp.eq.s32.totalorder %s26, 1
    %p75 = por %p73, %p74
    %p77 = scmp.ne.s32.totalorder %s60, %s76
    %p78 = scmp.eq.s32.totalorder %s26, 0
    %p79 = por %p77, %p78
    %s80 = ssub.s32 %s20, %s27
    %p81 = scmp.eq.s32.totalorder %s80, 0
    %s83 = sadd.s32 %s82, 1
    %s84 = scalar_select %p81, %s82, %s83
    %p87 = pneg %p81
    %p88 = scmp.eq.s32.totalorder %s20, 1
    %p89 = por %p87, %p88
    %p90 = scmp.ne.s32.totalorder %s82, %s85
    %p91 = scmp.eq.s32.totalorder %s20, 0
    %p92 = por %p90, %p91
    %p93 = scmp.ne.s32.totalorder %s82, %s85
    %p94 = scmp.eq.s32.totalorder %s25, 1
    %p95 = por %p93, %p94
    %p96 = scmp.ne.s32.totalorder %s85, %s86
    %p97 = scmp.eq.s32.totalorder %s25, 0
    %p98 = por %p96, %p97
    %p99 = scmp.ne.s32.totalorder %s85, %s86
    %p100 = scmp.eq.s32.totalorder %s26, 1
    %p101 = por %p99, %p100
    %p103 = scmp.ne.s32.totalorder %s86, %s102
    %p104 = scmp.eq.s32.totalorder %s26, 0
    %p105 = por %p103, %p104
    %s107 = sadd.s32 %s106, 1
    %p110 = scmp.eq.s32.totalorder %s20, 1
    %p111 = scmp.ne.s32.totalorder %s106, %s108
    %p112 = scmp.eq.s32.totalorder %s20, 0
    %p113 = por %p111, %p112
    %p114 = scmp.ne.s32.totalorder %s106, %s108
    %p115 = scmp.eq.s32.totalorder %s25, 1
    %p116 = por %p114, %p115
    %p117 = scmp.ne.s32.totalorder %s108, %s109
    %p118 = scmp.eq.s32.totalorder %s25, 0
    %p119 = por %p117, %p118
    %p120 = scmp.ne.s32.totalorder %s108, %s109
    %p121 = scmp.eq.s32.totalorder %s26, 1
    %p122 = por %p120, %p121
    %p124 = scmp.ne.s32.totalorder %s109, %s123
    %p125 = scmp.eq.s32.totalorder %s26, 0
    %p126 = por %p124, %p125
    %s128 = sadd.s32 %s127, 1
    %p131 = scmp.eq.s32.totalorder %s20, 1
    %p132 = scmp.ne.s32.totalorder %s127, %s129
    %p133 = scmp.eq.s32.totalorder %s20, 0
    %p134 = por %p132, %p133
    %p135 = scmp.ne.s32.totalorder %s127, %s129
    %p136 = scmp.eq.s32.totalorder %s25, 1
    %p137 = por %p135, %p136
    %p138 = scmp.ne.s32.totalorder %s129, %s130
    %p139 = scmp.eq.s32.totalorder %s25, 0
    %p140 = por %p138, %p139
    %p141 = scmp.ne.s32.totalorder %s129, %s130
    %p142 = scmp.eq.s32.totalorder %s26, 1
    %p143 = por %p141, %p142
    %p145 = scmp.ne.s32.totalorder %s130, %s144
    %p146 = scmp.eq.s32.totalorder %s26, 0
    %p147 = por %p145, %p146
    %s149 = sadd.s32 %s148, 1
    %p152 = scmp.eq.s32.totalorder %s20, 1
    %p153 = scmp.ne.s32.totalorder %s148, %s150
    %p154 = scmp.eq.s32.totalorder %s20, 0
    %p155 = por %p153, %p154
    %p156 = scmp.ne.s32.totalorder %s148, %s150
    %p157 = scmp.eq.s32.totalorder %s25, 1
    %p158 = por %p156, %p157
    %p159 = scmp.ne.s32.totalorder %s150, %s151
    %p160 = scmp.eq.s32.totalorder %s25, 0
    %p161 = por %p159, %p160
    %p162 = scmp.ne.s32.totalorder %s150, %s151
    %p163 = scmp.eq.s32.totalorder %s26, 1
    %p164 = por %p162, %p163
    %p166 = scmp.ne.s32.totalorder %s151, %s165
    %p167 = scmp.eq.s32.totalorder %s26, 0
    %p168 = por %p166, %p167
    %s170 = sadd.s32 %s169, 1
    %p173 = scmp.eq.s32.totalorder %s20, 1
    %p174 = scmp.ne.s32.totalorder %s169, %s171
    %p175 = scmp.eq.s32.totalorder %s20, 0
    %p176 = por %p174, %p175
    %p177 = scmp.ne.s32.totalorder %s169, %s171
    %p178 = scmp.eq.s32.totalorder %s25, 1
    %p179 = por %p177, %p178
    %p180 = scmp.ne.s32.totalorder %s171, %s172
    %p181 = scmp.eq.s32.totalorder %s25, 0
    %p182 = por %p180, %p181
    %p183 = scmp.ne.s32.totalorder %s171, %s172
    %p184 = scmp.eq.s32.totalorder %s26, 1
    %p185 = por %p183, %p184
    %p187 = scmp.ne.s32.totalorder %s172, %s186
    %p188 = scmp.eq.s32.totalorder %s26, 0
    %p189 = por %p187, %p188
    %s191 = sadd.s32 %s190, 1
    %p194 = scmp.eq.s32.totalorder %s20, 1
    %p195 = scmp.ne.s32.totalorder %s190, %s192
    %p196 = scmp.eq.s32.totalorder %s20, 0
    %p197 = por %p195, %p196
    %p198 = scmp.ne.s32.totalorder %s190, %s192
    %p199 = scmp.eq.s32.totalorder %s25, 1
    %p200 = por %p198, %p199
    %p201 = scmp.ne.s32.totalorder %s192, %s193
    %p202 = scmp.eq.s32.totalorder %s25, 0
    %p203 = por %p201, %p202
    %p204 = scmp.ne.s32.totalorder %s192, %s193
    %p205 = scmp.eq.s32.totalorder %s26, 1
    %p206 = por %p204, %p205
    %p208 = scmp.ne.s32.totalorder %s193, %s207
    %p209 = scmp.eq.s32.totalorder %s26, 0
    %p210 = por %p208, %p209
    %s212 = sadd.s32 %s211, 1
    %p215 = scmp.eq.s32.totalorder %s20, 1
    %p216 = scmp.ne.s32.totalorder %s211, %s213
    %p217 = scmp.eq.s32.totalorder %s20, 0
    %p218 = por %p216, %p217
    %p219 = scmp.ne.s32.totalorder %s211, %s213
    %p220 = scmp.eq.s32.totalorder %s25, 1
    %p221 = por %p219, %p220
    %p222 = scmp.ne.s32.totalorder %s213, %s214
    %p223 = scmp.eq.s32.totalorder %s25, 0
    %p224 = por %p222, %p223
    %p225 = scmp.ne.s32.totalorder %s213, %s214
    %p226 = scmp.eq.s32.totalorder %s26, 1
    %p227 = por %p225, %p226
    %p229 = scmp.ne.s32.totalorder %s214, %s228
    %p230 = scmp.eq.s32.totalorder %s26, 0
    %p231 = por %p229, %p230
    %s233 = sadd.s32 %s232, 1
    %p236 = scmp.eq.s32.totalorder %s20, 1
    %p237 = scmp.ne.s32.totalorder %s232, %s234
    %p238 = scmp.eq.s32.totalorder %s20, 0
    %p239 = por %p237, %p238
    %p240 = scmp.ne.s32.totalorder %s232, %s234
    %p241 = scmp.eq.s32.totalorder %s25, 1
    %p242 = por %p240, %p241
    %p243 = scmp.ne.s32.totalorder %s234, %s235
    %p244 = scmp.eq.s32.totalorder %s25, 0
    %p245 = por %p243, %p244
    %p246 = scmp.ne.s32.totalorder %s234, %s235
    %p247 = scmp.eq.s32.totalorder %s26, 1
    %p248 = por %p246, %p247
    %p250 = scmp.ne.s32.totalorder %s235, %s249
    %p251 = scmp.eq.s32.totalorder %s26, 0
    %p252 = por %p250, %p251
    %s254 = sadd.s32 %s253, 1
    %p257 = scmp.eq.s32.totalorder %s20, 1
    %p258 = scmp.ne.s32.totalorder %s253, %s255
    %p259 = scmp.eq.s32.totalorder %s20, 0
    %p260 = por %p258, %p259
    %p261 = scmp.ne.s32.totalorder %s253, %s255
    %p262 = scmp.eq.s32.totalorder %s25, 1
    %p263 = por %p261, %p262
    %p264 = scmp.ne.s32.totalorder %s255, %s256
    %p265 = scmp.eq.s32.totalorder %s25, 0
    %p266 = por %p264, %p265
    %p267 = scmp.ne.s32.totalorder %s255, %s256
    %p268 = scmp.eq.s32.totalorder %s26, 1
    %p269 = por %p267, %p268
    %p271 = scmp.ne.s32.totalorder %s256, %s270
    %p272 = scmp.eq.s32.totalorder %s26, 0
    %p273 = por %p271, %p272
    %s275 = sadd.s32 %s274, 1
    %p278 = scmp.eq.s32.totalorder %s20, 1
    %p279 = scmp.ne.s32.totalorder %s274, %s276
    %p280 = scmp.eq.s32.totalorder %s20, 0
    %p281 = por %p279, %p280
    %p282 = scmp.ne.s32.totalorder %s274, %s276
    %p283 = scmp.eq.s32.totalorder %s25, 1
    %p284 = por %p282, %p283
    %p285 = scmp.ne.s32.totalorder %s276, %s277
    %p286 = scmp.eq.s32.totalorder %s25, 0
    %p287 = por %p285, %p286
    %p288 = scmp.ne.s32.totalorder %s276, %s277
    %p289 = scmp.eq.s32.totalorder %s26, 1
    %p290 = por %p288, %p289
    %p292 = scmp.ne.s32.totalorder %s277, %s291
    %p293 = scmp.eq.s32.totalorder %s26, 0
    %p294 = por %p292, %p293
    %s296 = sadd.s32 %s295, 1
    %p299 = scmp.eq.s32.totalorder %s20, 1
    %p300 = scmp.ne.s32.totalorder %s295, %s297
    %p301 = scmp.eq.s32.totalorder %s20, 0
    %p302 = por %p300, %p301
    %p303 = scmp.ne.s32.totalorder %s295, %s297
    %p304 = scmp.eq.s32.totalorder %s25, 1
    %p305 = por %p303, %p304
    %p306 = scmp.ne.s32.totalorder %s297, %s298
    %p307 = scmp.eq.s32.totalorder %s25, 0
    %p308 = por %p306, %p307
    %p309 = scmp.ne.s32.totalorder %s297, %s298
    %p310 = scmp.eq.s32.totalorder %s26, 1
    %p311 = por %p309, %p310
    %p313 = scmp.ne.s32.totalorder %s298, %s312
    %p314 = scmp.eq.s32.totalorder %s26, 0
    %p315 = por %p313, %p314
    %s317 = sadd.s32 %s316, 1
    %p320 = scmp.eq.s32.totalorder %s20, 1
    %p321 = scmp.ne.s32.totalorder %s316, %s318
    %p322 = scmp.eq.s32.totalorder %s20, 0
    %p323 = por %p321, %p322
    %p324 = scmp.ne.s32.totalorder %s316, %s318
    %p325 = scmp.eq.s32.totalorder %s25, 1
    %p326 = por %p324, %p325
    %p327 = scmp.ne.s32.totalorder %s318, %s319
    %p328 = scmp.eq.s32.totalorder %s25, 0
    %p329 = por %p327, %p328
    %p330 = scmp.ne.s32.totalorder %s318, %s319
    %p331 = scmp.eq.s32.totalorder %s26, 1
    %p332 = por %p330, %p331
    %p334 = scmp.ne.s32.totalorder %s319, %s333
    %p335 = scmp.eq.s32.totalorder %s26, 0
    %p336 = por %p334, %p335
    %s337 = ssub.s32 %s20, %s27
    %p338 = scmp.eq.s32.totalorder %s337, 0
    %s340 = sadd.s32 %s339, 1
    %s341 = scalar_select %p338, %s339, %s340
    %p344 = pneg %p338
    %p345 = scmp.eq.s32.totalorder %s20, 1
    %p346 = por %p344, %p345
    %p347 = scmp.ne.s32.totalorder %s339, %s342
    %p348 = scmp.eq.s32.totalorder %s20, 0
    %p349 = por %p347, %p348
    %p350 = scmp.ne.s32.totalorder %s339, %s342
    %p351 = scmp.eq.s32.totalorder %s25, 1
    %p352 = por %p350, %p351
    %p353 = scmp.ne.s32.totalorder %s342, %s343
    %p354 = scmp.eq.s32.totalorder %s25, 0
    %p355 = por %p353, %p354
    %p356 = scmp.ne.s32.totalorder %s342, %s343
    %p357 = scmp.eq.s32.totalorder %s26, 1
    %p358 = por %p356, %p357
    %p360 = scmp.ne.s32.totalorder %s343, %s359
    %p361 = scmp.eq.s32.totalorder %s26, 0
    %p362 = por %p360, %p361
    %p363 = scmp.le.s32.totalorder 1, %s20
    %p364 = scmp.lt.s32.totalorder %s20, 3
    %p365 = pnand %p363, %p364
    %p366 = pneg %p365
    // Predicated region
    $region9: #{tpu_custom_call.1} parent=5 // pred_check
      _
    $region10: #{tpu_custom_call.1} parent=5 // pred_check_branch
      %368 = sbr.rel (%p365) target = $region12
    $region11: #{tpu_custom_call.1} parent=5 // pred_region
      %s369 = ssub.s32 %s20, 1
      // Predicated region
      $region13: #{tpu_custom_call.1} parent=11 // pred_check
        %p370 = pneg %p119
      $region14: #{tpu_custom_call.1} parent=11 // pred_check_branch
        %372 = sbr.rel (%p370) target = $region16
      $region15: #{tpu_custom_call.1} parent=11 // pred_region
        _
      $region16: #{tpu_custom_call.1} parent=11 // pred_fallthru
        _
      // Predicated region
      $region17: #{tpu_custom_call.1} parent=11 // pred_check
        %p373 = pneg %p140
      $region18: #{tpu_custom_call.1} parent=11 // pred_check_branch
        %375 = sbr.rel (%p373) target = $region20
      $region19: #{tpu_custom_call.1} parent=11 // pred_region
        _
      $region20: #{tpu_custom_call.1} parent=11 // pred_fallthru
        _
      // Predicated region
      $region21: #{tpu_custom_call.1} parent=11 // pred_check
        %p376 = pneg %p161
      $region22: #{tpu_custom_call.1} parent=11 // pred_check_branch
        %378 = sbr.rel (%p376) target = $region24
      $region23: #{tpu_custom_call.1} parent=11 // pred_region
        _
      $region24: #{tpu_custom_call.1} parent=11 // pred_fallthru
        _
      // Predicated region
      $region25: #{tpu_custom_call.1} parent=11 // pred_check
        %p379 = pneg %p182
      $region26: #{tpu_custom_call.1} parent=11 // pred_check_branch
        %381 = sbr.rel (%p379) target = $region28
      $region27: #{tpu_custom_call.1} parent=11 // pred_region
        _
      $region28: #{tpu_custom_call.1} parent=11 // pred_fallthru
        _
      // Predicated region
      $region29: #{tpu_custom_call.1} parent=11 // pred_check
        %p382 = pneg %p203
      $region30: #{tpu_custom_call.1} parent=11 // pred_check_branch
        %384 = sbr.rel (%p382) target = $region32
      $region31: #{tpu_custom_call.1} parent=11 // pred_region
        _
      $region32: #{tpu_custom_call.1} parent=11 // pred_fallthru
        _
      // Predicated region
      $region33: #{tpu_custom_call.1} parent=11 // pred_check
        %p385 = pneg %p224
      $region34: #{tpu_custom_call.1} parent=11 // pred_check_branch
        %387 = sbr.rel (%p385) target = $region36
      $region35: #{tpu_custom_call.1} parent=11 // pred_region
        _
      $region36: #{tpu_custom_call.1} parent=11 // pred_fallthru
        _
      // Predicated region
      $region37: #{tpu_custom_call.1} parent=11 // pred_check
        %p388 = pneg %p245
      $region38: #{tpu_custom_call.1} parent=11 // pred_check_branch
        %390 = sbr.rel (%p388) target = $region40
      $region39: #{tpu_custom_call.1} parent=11 // pred_region
        _
      $region40: #{tpu_custom_call.1} parent=11 // pred_fallthru
        _
      // Predicated region
      $region41: #{tpu_custom_call.1} parent=11 // pred_check
        %p391 = pneg %p266
      $region42: #{tpu_custom_call.1} parent=11 // pred_check_branch
        %393 = sbr.rel (%p391) target = $region44
      $region43: #{tpu_custom_call.1} parent=11 // pred_region
        _
      $region44: #{tpu_custom_call.1} parent=11 // pred_fallthru
        _
      // Predicated region
      $region45: #{tpu_custom_call.1} parent=11 // pred_check
        %p394 = pneg %p287
      $region46: #{tpu_custom_call.1} parent=11 // pred_check_branch
        %396 = sbr.rel (%p394) target = $region48
      $region47: #{tpu_custom_call.1} parent=11 // pred_region
        _
      $region48: #{tpu_custom_call.1} parent=11 // pred_fallthru
        _
      // Predicated region
      $region49: #{tpu_custom_call.1} parent=11 // pred_check
        %p397 = pneg %p308
      $region50: #{tpu_custom_call.1} parent=11 // pred_check_branch
        %399 = sbr.rel (%p397) target = $region52
      $region51: #{tpu_custom_call.1} parent=11 // pred_region
        _
      $region52: #{tpu_custom_call.1} parent=11 // pred_fallthru
        _
      // Predicated region
      $region53: #{tpu_custom_call.1} parent=11 // pred_check
        %p400 = pneg %p329
      $region54: #{tpu_custom_call.1} parent=11 // pred_check_branch
        %402 = sbr.rel (%p400) target = $region56
      $region55: #{tpu_custom_call.1} parent=11 // pred_region
        _
      $region56: #{tpu_custom_call.1} parent=11 // pred_fallthru
        _
    $region12: #{tpu_custom_call.1} parent=5 // pred_fallthru
      _
    %p403 = scmp.lt.s32.totalorder %s20, 2
    // Predicated region
    $region57: #{tpu_custom_call.1} parent=5 // pred_check
      %p404 = pneg %p403
    $region58: #{tpu_custom_call.1} parent=5 // pred_check_branch
      %406 = sbr.rel (%p404) target = $region60
    $region59: #{tpu_custom_call.1} parent=5 // pred_region
      // Predicated region
      $region61: #{tpu_custom_call.1} parent=59 // pred_check
        %p407 = pneg %p40
      $region62: #{tpu_custom_call.1} parent=59 // pred_check_branch
        %409 = sbr.rel (%p407) target = $region64
      $region63: #{tpu_custom_call.1} parent=59 // pred_region
        %s410 = smul.u32 4, %s20
        %p411 = scmp.lt.s32.totalorder %s410, 7
        %s412 = scalar_select %p411, %s410, 7
        %s413 = smul.addr %s412, 8
        %s414 = scalar_lea.vmem %s0, %s413
        %s415 = smul.u32 4, %s20
      $region64: #{tpu_custom_call.1} parent=59 // pred_fallthru
        _
      // Predicated region
      $region65: #{tpu_custom_call.1} parent=59 // pred_check
        %p416 = pneg %p66
      $region66: #{tpu_custom_call.1} parent=59 // pred_check_branch
        %418 = sbr.rel (%p416) target = $region68
      $region67: #{tpu_custom_call.1} parent=59 // pred_region
        %s419 = smul.u32 32, %s20
        %p420 = scmp.lt.s32.totalorder %s419, 63
        %s421 = scalar_select %p420, %s419, 63
        %s422 = smul.addr %s421, 8
        %s423 = scalar_lea.vmem %s1, %s422
        %s424 = smul.u32 32, %s20
      $region68: #{tpu_custom_call.1} parent=59 // pred_fallthru
        _
      // Predicated region
      $region69: #{tpu_custom_call.1} parent=59 // pred_check
        %p425 = pneg %p92
      $region70: #{tpu_custom_call.1} parent=59 // pred_check_branch
        %427 = sbr.rel (%p425) target = $region72
      $region71: #{tpu_custom_call.1} parent=59 // pred_region
        %s428 = smul.u32 32, %s20
        %p429 = scmp.lt.s32.totalorder %s428, 63
        %s430 = scalar_select %p429, %s428, 63
        %s431 = smul.addr %s430, 8
        %s432 = scalar_lea.vmem %s2, %s431
        %s433 = smul.u32 32, %s20
      $region72: #{tpu_custom_call.1} parent=59 // pred_fallthru
        _
    $region60: #{tpu_custom_call.1} parent=5 // pred_fallthru
      _
    %p434 = scmp.le.s32.totalorder 1, %s20
    %p435 = scmp.lt.s32.totalorder %s20, 3
    %p436 = pnand %p434, %p435
    %p437 = pneg %p436
    // Predicated region
    $region73: #{tpu_custom_call.1} parent=5 // pred_check
      _
    $region74: #{tpu_custom_call.1} parent=5 // pred_check_branch
      %439 = sbr.rel (%p436) target = $region76
    $region75: #{tpu_custom_call.1} parent=5 // pred_region
      %s440 = ssub.s32 %s20, 1
      %s441 = smul.u32 4, %s25
      %p442 = scmp.lt.s32.totalorder %s441, 7
      %s443 = scalar_select %p442, %s441, 7
      %s444 = smul.addr %s443, 8
      %s445 = scalar_lea.vmem %s0, %s444
      %p446 = pneg %p46
      %p447 = pneg %p43
      %s448 = smul.u32 32, %s25
      %p449 = scmp.lt.s32.totalorder %s448, 63
      %s450 = scalar_select %p449, %s448, 63
      %s451 = smul.addr %s450, 8
      %s452 = scalar_lea.vmem %s1, %s451
      %p453 = pneg %p72
      %p454 = pneg %p69
      %s455 = smul.u32 32, %s25
      %p456 = scmp.lt.s32.totalorder %s455, 63
      %s457 = scalar_select %p456, %s455, 63
      %s458 = smul.addr %s457, 8
      %s459 = scalar_lea.vmem %s2, %s458
      %p460 = pneg %p98
      %p461 = pneg %p95
      %p462 = pneg %p119
      %p463 = pneg %p116
      %p464 = pneg %p140
      %p465 = pneg %p137
      %p466 = pneg %p161
      %p467 = pneg %p158
      %p468 = pneg %p182
      %p469 = pneg %p179
      %p470 = pneg %p203
      %p471 = pneg %p200
      %p472 = pneg %p224
      %p473 = pneg %p221
      %p474 = pneg %p245
      %p475 = pneg %p242
      %p476 = pneg %p266
      %p477 = pneg %p263
      %p478 = pneg %p287
      %p479 = pneg %p284
      %p480 = pneg %p308
      %p481 = pneg %p305
      %p482 = pneg %p329
      %p483 = pneg %p326
      %p484 = pneg %p355
      %p485 = pneg %p352
      %s486 = smul.u32 4, %s25
      %p487 = scmp.lt.s32.totalorder %s486, 7
      %s488 = scalar_select %p487, %s486, 7
      %s489 = smul.addr %s488, 8
      %s490 = scalar_lea.vmem %s14, %s489
      %s491 = smul.u32 4, %s25
      %p492 = scmp.lt.s32.totalorder %s491, 7
      %s493 = scalar_select %p492, %s491, 7
      %s494 = smul.addr %s493, 8
      %s495 = scalar_lea.vmem %s0, %s494
      %s496 = smul.u32 4, %s25
      %s497 = smul.u32 32, %s25
      %p498 = scmp.lt.s32.totalorder %s497, 63
      %s499 = scalar_select %p498, %s497, 63
      %s500 = smul.addr %s499, 8
      %s501 = scalar_lea.vmem %s1, %s500
      %s502 = smul.u32 32, %s25
      %s503 = smul.u32 32, %s25
      %p504 = scmp.lt.s32.totalorder %s503, 63
      %s505 = scalar_select %p504, %s503, 63
      %s506 = smul.addr %s505, 8
      %s507 = scalar_lea.vmem %s2, %s506
      %s508 = smul.u32 32, %s25
      %s509 = smul.u32 4, %s25
      %p510 = scmp.lt.s32.totalorder %s509, 7
      %s511 = scalar_select %p510, %s509, 7
      %s512 = smul.addr %s511, 8
      %s513 = scalar_lea.vmem %s14, %s512
      %s514 = smul.u32 4, %s25
      %v516 = vld [vmem:[%s495] sm:$0xff]
      %v517 = vld [vmem:[%s495 + $0x8] sm:$0xff]
      %v518 = vld [vmem:[%s495 + $0x10] sm:$0xff]
      %v519 = vld [vmem:[%s495 + $0x18] sm:$0xff]
      %v520 = vpack.c.bf16 %v517, %v516
      %v521 = vpack.c.bf16 %v519, %v518
      %v522 = vld [vmem:[%s4] sm:$0xff]
      %v523 = vld [vmem:[%s4 + $0x8] sm:$0xff]
      %v524 = vpack.c.bf16 %v523, %v522
      %v525 = vld [vmem:[%s5] sm:$0x1]
      %v527 = vperm.slane %v525, 0
      %vm529 = vcmask 130048
      %v531 = vsel %vm529, %v520, 0
      %v534 = vsel %vm529, %v521, 0
      %536 = vmatpush.bf16.msra.mxu0 0
      %537 = vmatpush.bf16.msra.mxu0 0
      %538 = vmatpush.bf16.msra.mxu0 0
      %539 = vmatpush.bf16.msra.mxu0 0
      %540 = vmatpush.bf16.msra.mxu0 0
      %541 = vmatpush.bf16.msra.mxu0 0
      %542 = vmatpush.bf16.msra.mxu0 0
      %543 = vmatpush.bf16.msra.mxu0 %v524
      %544 = vmatmul.bf16.gmra.mxu0 %v531
      %v545 = vpop.f32.mrf.mxu0
      %v546 = vadd.f32 %v527, %v545
      %v547 = vpop.f32.mrf.mxu0
      %v548 = vadd.f32 %v527, %v547
      %549 = vmatmul.bf16.gmra.mxu0 %v534
      %v550 = vpop.f32.mrf.mxu0
      %v551 = vadd.f32 %v527, %v550
      %v552 = vpop.f32.mrf.mxu0
      %v553 = vadd.f32 %v527, %v552
      %554 = vdwg.mxu0
      %v555 = vld [vmem:[%s507] sm:$0xff]
      %v556 = vld [vmem:[%s507 + $0x8] sm:$0xff]
      %v557 = vld [vmem:[%s507 + $0x10] sm:$0xff]
      %v558 = vld [vmem:[%s507 + $0x18] sm:$0xff]
      %v559 = vld [vmem:[%s507 + $0x20] sm:$0xff]
      %v560 = vld [vmem:[%s507 + $0x28] sm:$0xff]
      %v561 = vld [vmem:[%s507 + $0x30] sm:$0xff]
      %v562 = vld [vmem:[%s507 + $0x38] sm:$0xff]
      %v563 = vld [vmem:[%s507 + $0x40] sm:$0xff]
      %v564 = vld [vmem:[%s507 + $0x48] sm:$0xff]
      %v565 = vld [vmem:[%s507 + $0x50] sm:$0xff]
      %v566 = vld [vmem:[%s507 + $0x58] sm:$0xff]
      %v567 = vld [vmem:[%s507 + $0x60] sm:$0xff]
      %v568 = vld [vmem:[%s507 + $0x68] sm:$0xff]
      %v569 = vld [vmem:[%s507 + $0x70] sm:$0xff]
      %v570 = vld [vmem:[%s507 + $0x78] sm:$0xff]
      %v571 = vld [vmem:[%s507 + $0x80] sm:$0xff]
      %v572 = vld [vmem:[%s507 + $0x88] sm:$0xff]
      %v573 = vld [vmem:[%s507 + $0x90] sm:$0xff]
      %v574 = vld [vmem:[%s507 + $0x98] sm:$0xff]
      %v575 = vld [vmem:[%s507 + $0xa0] sm:$0xff]
      %v576 = vld [vmem:[%s507 + $0xa8] sm:$0xff]
      %v577 = vld [vmem:[%s507 + $0xb0] sm:$0xff]
      %v578 = vld [vmem:[%s507 + $0xb8] sm:$0xff]
      %v579 = vld [vmem:[%s507 + $0xc0] sm:$0xff]
      %v580 = vld [vmem:[%s507 + $0xc8] sm:$0xff]
      %v581 = vld [vmem:[%s507 + $0xd0] sm:$0xff]
      %v582 = vld [vmem:[%s507 + $0xd8] sm:$0xff]
      %v583 = vld [vmem:[%s507 + $0xe0] sm:$0xff]
      %v584 = vld [vmem:[%s507 + $0xe8] sm:$0xff]
      %v585 = vld [vmem:[%s507 + $0xf0] sm:$0xff]
      %v586 = vld [vmem:[%s507 + $0xf8] sm:$0xff]
      %v587 = vmul.f32 %v555, %v555
      %v588 = vmul.f32 %v556, %v556
      %v589 = vmul.f32 %v557, %v557
      %v590 = vmul.f32 %v558, %v558
      %v591 = vmul.f32 %v559, %v559
      %v592 = vmul.f32 %v560, %v560
      %v593 = vmul.f32 %v561, %v561
      %v594 = vmul.f32 %v562, %v562
      %v595 = vmul.f32 %v563, %v563
      %v596 = vmul.f32 %v564, %v564
      %v597 = vmul.f32 %v565, %v565
      %v598 = vmul.f32 %v566, %v566
      %v599 = vmul.f32 %v567, %v567
      %v600 = vmul.f32 %v568, %v568
      %v601 = vmul.f32 %v569, %v569
      %v602 = vmul.f32 %v570, %v570
      %v603 = vmul.f32 %v571, %v571
      %v604 = vmul.f32 %v572, %v572
      %v605 = vmul.f32 %v573, %v573
      %v606 = vmul.f32 %v574, %v574
      %v607 = vmul.f32 %v575, %v575
      %v608 = vmul.f32 %v576, %v576
      %v609 = vmul.f32 %v577, %v577
      %v610 = vmul.f32 %v578, %v578
      %v611 = vmul.f32 %v579, %v579
      %v612 = vmul.f32 %v580, %v580
      %v613 = vmul.f32 %v581, %v581
      %v614 = vmul.f32 %v582, %v582
      %v615 = vmul.f32 %v583, %v583
      %v616 = vmul.f32 %v584, %v584
      %v617 = vmul.f32 %v585, %v585
      %v618 = vmul.f32 %v586, %v586
      %vm619 = vcmask 64512
      %v620 = vsel %vm619, %v587, 0.0
      %621 = vadd.xlane.f32.xlu0 %v620
      %v622 = vpop.xlane.xlu0 %621
      %v623 = vsel %vm619, %v588, 0.0
      %624 = vadd.xlane.f32.xlu0 %v623
      %v625 = vpop.xlane.xlu0 %624
      %v626 = vsel %vm619, %v589, 0.0
      %627 = vadd.xlane.f32.xlu0 %v626
      %v628 = vpop.xlane.xlu0 %627
      %v629 = vsel %vm619, %v590, 0.0
      %630 = vadd.xlane.f32.xlu0 %v629
      %v631 = vpop.xlane.xlu0 %630
      %v632 = vsel %vm619, %v591, 0.0
      %633 = vadd.xlane.f32.xlu0 %v632
      %v634 = vpop.xlane.xlu0 %633
      %v635 = vsel %vm619, %v592, 0.0
      %636 = vadd.xlane.f32.xlu0 %v635
      %v637 = vpop.xlane.xlu0 %636
      %v638 = vsel %vm619, %v593, 0.0
      %639 = vadd.xlane.f32.xlu0 %v638
      %v640 = vpop.xlane.xlu0 %639
      %v641 = vsel %vm619, %v594, 0.0
      %642 = vadd.xlane.f32.xlu0 %v641
      %v643 = vpop.xlane.xlu0 %642
      %v644 = vsel %vm619, %v595, 0.0
      %645 = vadd.xlane.f32.xlu0 %v644
      %v646 = vpop.xlane.xlu0 %645
      %v647 = vsel %vm619, %v596, 0.0
      %648 = vadd.xlane.f32.xlu0 %v647
      %v649 = vpop.xlane.xlu0 %648
      %v650 = vsel %vm619, %v597, 0.0
      %651 = vadd.xlane.f32.xlu0 %v650
      %v652 = vpop.xlane.xlu0 %651
      %v653 = vsel %vm619, %v598, 0.0
      %654 = vadd.xlane.f32.xlu0 %v653
      %v655 = vpop.xlane.xlu0 %654
      %v656 = vsel %vm619, %v599, 0.0
      %657 = vadd.xlane.f32.xlu0 %v656
      %v658 = vpop.xlane.xlu0 %657
      %v659 = vsel %vm619, %v600, 0.0
      %660 = vadd.xlane.f32.xlu0 %v659
      %v661 = vpop.xlane.xlu0 %660
      %v662 = vsel %vm619, %v601, 0.0
      %663 = vadd.xlane.f32.xlu0 %v662
      %v664 = vpop.xlane.xlu0 %663
      %v665 = vsel %vm619, %v602, 0.0
      %666 = vadd.xlane.f32.xlu0 %v665
      %v667 = vpop.xlane.xlu0 %666
      %v668 = vsel %vm619, %v603, 0.0
      %669 = vadd.xlane.f32.xlu0 %v668
      %v670 = vpop.xlane.xlu0 %669
      %v671 = vsel %vm619, %v604, 0.0
      %672 = vadd.xlane.f32.xlu0 %v671
      %v673 = vpop.xlane.xlu0 %672
      %v674 = vsel %vm619, %v605, 0.0
      %675 = vadd.xlane.f32.xlu0 %v674
      %v676 = vpop.xlane.xlu0 %675
      %v677 = vsel %vm619, %v606, 0.0
      %678 = vadd.xlane.f32.xlu0 %v677
      %v679 = vpop.xlane.xlu0 %678
      %v680 = vsel %vm619, %v607, 0.0
      %681 = vadd.xlane.f32.xlu0 %v680
      %v682 = vpop.xlane.xlu0 %681
      %v683 = vsel %vm619, %v608, 0.0
      %684 = vadd.xlane.f32.xlu0 %v683
      %v685 = vpop.xlane.xlu0 %684
      %v686 = vsel %vm619, %v609, 0.0
      %687 = vadd.xlane.f32.xlu0 %v686
      %v688 = vpop.xlane.xlu0 %687
      %v689 = vsel %vm619, %v610, 0.0
      %690 = vadd.xlane.f32.xlu0 %v689
      %v691 = vpop.xlane.xlu0 %690
      %v692 = vsel %vm619, %v611, 0.0
      %693 = vadd.xlane.f32.xlu0 %v692
      %v694 = vpop.xlane.xlu0 %693
      %v695 = vsel %vm619, %v612, 0.0
      %696 = vadd.xlane.f32.xlu0 %v695
      %v697 = vpop.xlane.xlu0 %696
      %v698 = vsel %vm619, %v613, 0.0
      %699 = vadd.xlane.f32.xlu0 %v698
      %v700 = vpop.xlane.xlu0 %699
      %v701 = vsel %vm619, %v614, 0.0
      %702 = vadd.xlane.f32.xlu0 %v701
      %v703 = vpop.xlane.xlu0 %702
      %v704 = vsel %vm619, %v615, 0.0
      %705 = vadd.xlane.f32.xlu0 %v704
      %v706 = vpop.xlane.xlu0 %705
      %v707 = vsel %vm619, %v616, 0.0
      %708 = vadd.xlane.f32.xlu0 %v707
      %v709 = vpop.xlane.xlu0 %708
      %v710 = vsel %vm619, %v617, 0.0
      %711 = vadd.xlane.f32.xlu0 %v710
      %v712 = vpop.xlane.xlu0 %711
      %v713 = vsel %vm619, %v618, 0.0
      %714 = vadd.xlane.f32.xlu0 %v713
      %v715 = vpop.xlane.xlu0 %714
      %v716 = vmax.f32 %v622, 1e-24
      %v717 = vmax.f32 %v625, 1e-24
      %v718 = vmax.f32 %v628, 1e-24
      %v719 = vmax.f32 %v631, 1e-24
      %v720 = vmax.f32 %v634, 1e-24
      %v721 = vmax.f32 %v637, 1e-24
      %v722 = vmax.f32 %v640, 1e-24
      %v723 = vmax.f32 %v643, 1e-24
      %v724 = vmax.f32 %v646, 1e-24
      %v725 = vmax.f32 %v649, 1e-24
      %v726 = vmax.f32 %v652, 1e-24
      %v727 = vmax.f32 %v655, 1e-24
      %v728 = vmax.f32 %v658, 1e-24
      %v729 = vmax.f32 %v661, 1e-24
      %v730 = vmax.f32 %v664, 1e-24
      %v731 = vmax.f32 %v667, 1e-24
      %v732 = vmax.f32 %v670, 1e-24
      %v733 = vmax.f32 %v673, 1e-24
      %v734 = vmax.f32 %v676, 1e-24
      %v735 = vmax.f32 %v679, 1e-24
      %v736 = vmax.f32 %v682, 1e-24
      %v737 = vmax.f32 %v685, 1e-24
      %v738 = vmax.f32 %v688, 1e-24
      %v739 = vmax.f32 %v691, 1e-24
      %v740 = vmax.f32 %v694, 1e-24
      %v741 = vmax.f32 %v697, 1e-24
      %v742 = vmax.f32 %v700, 1e-24
      %v743 = vmax.f32 %v703, 1e-24
      %v744 = vmax.f32 %v706, 1e-24
      %v745 = vmax.f32 %v709, 1e-24
      %v746 = vmax.f32 %v712, 1e-24
      %v747 = vmax.f32 %v715, 1e-24
      %v748 = vrsqrt.pop %v716
      %v749 = vmul.f32 %v748, %v716
      %v750 = vmul.f32 %v749, %v748
      %v751 = vmul.f32 0.5, %v750
      %v752 = vsub.f32 1.5, %v751
      %v753 = vmul.f32 %v748, %v752
      %vm754 = vweird.f32 %v716
      %vm755 = vweird.f32 %v748
      %vm756 = vmor %vm754, %vm755
      %v757 = vsel %vm756, %v748, %v753
      %v758 = vrsqrt.pop %v717
      %v759 = vmul.f32 %v758, %v717
      %v760 = vmul.f32 %v759, %v758
      %v761 = vmul.f32 0.5, %v760
      %v762 = vsub.f32 1.5, %v761
      %v763 = vmul.f32 %v758, %v762
      %vm764 = vweird.f32 %v717
      %vm765 = vweird.f32 %v758
      %vm766 = vmor %vm764, %vm765
      %v767 = vsel %vm766, %v758, %v763
      %v768 = vrsqrt.pop %v718
      %v769 = vmul.f32 %v768, %v718
      %v770 = vmul.f32 %v769, %v768
      %v771 = vmul.f32 0.5, %v770
      %v772 = vsub.f32 1.5, %v771
      %v773 = vmul.f32 %v768, %v772
      %vm774 = vweird.f32 %v718
      %vm775 = vweird.f32 %v768
      %vm776 = vmor %vm774, %vm775
      %v777 = vsel %vm776, %v768, %v773
      %v778 = vrsqrt.pop %v719
      %v779 = vmul.f32 %v778, %v719
      %v780 = vmul.f32 %v779, %v778
      %v781 = vmul.f32 0.5, %v780
      %v782 = vsub.f32 1.5, %v781
      %v783 = vmul.f32 %v778, %v782
      %vm784 = vweird.f32 %v719
      %vm785 = vweird.f32 %v778
      %vm786 = vmor %vm784, %vm785
      %v787 = vsel %vm786, %v778, %v783
      %v788 = vrsqrt.pop %v720
      %v789 = vmul.f32 %v788, %v720
      %v790 = vmul.f32 %v789, %v788
      %v791 = vmul.f32 0.5, %v790
      %v792 = vsub.f32 1.5, %v791
      %v793 = vmul.f32 %v788, %v792
      %vm794 = vweird.f32 %v720
      %vm795 = vweird.f32 %v788
      %vm796 = vmor %vm794, %vm795
      %v797 = vsel %vm796, %v788, %v793
      %v798 = vrsqrt.pop %v721
      %v799 = vmul.f32 %v798, %v721
      %v800 = vmul.f32 %v799, %v798
      %v801 = vmul.f32 0.5, %v800
      %v802 = vsub.f32 1.5, %v801
      %v803 = vmul.f32 %v798, %v802
      %vm804 = vweird.f32 %v721
      %vm805 = vweird.f32 %v798
      %vm806 = vmor %vm804, %vm805
      %v807 = vsel %vm806, %v798, %v803
      %v808 = vrsqrt.pop %v722
      %v809 = vmul.f32 %v808, %v722
      %v810 = vmul.f32 %v809, %v808
      %v811 = vmul.f32 0.5, %v810
      %v812 = vsub.f32 1.5, %v811
      %v813 = vmul.f32 %v808, %v812
      %vm814 = vweird.f32 %v722
      %vm815 = vweird.f32 %v808
      %vm816 = vmor %vm814, %vm815
      %v817 = vsel %vm816, %v808, %v813
      %v818 = vrsqrt.pop %v723
      %v819 = vmul.f32 %v818, %v723
      %v820 = vmul.f32 %v819, %v818
      %v821 = vmul.f32 0.5, %v820
      %v822 = vsub.f32 1.5, %v821
      %v823 = vmul.f32 %v818, %v822
      %vm824 = vweird.f32 %v723
      %vm825 = vweird.f32 %v818
      %vm826 = vmor %vm824, %vm825
      %v827 = vsel %vm826, %v818, %v823
      %v828 = vrsqrt.pop %v724
      %v829 = vmul.f32 %v828, %v724
      %v830 = vmul.f32 %v829, %v828
      %v831 = vmul.f32 0.5, %v830
      %v832 = vsub.f32 1.5, %v831
      %v833 = vmul.f32 %v828, %v832
      %vm834 = vweird.f32 %v724
      %vm835 = vweird.f32 %v828
      %vm836 = vmor %vm834, %vm835
      %v837 = vsel %vm836, %v828, %v833
      %v838 = vrsqrt.pop %v725
      %v839 = vmul.f32 %v838, %v725
      %v840 = vmul.f32 %v839, %v838
      %v841 = vmul.f32 0.5, %v840
      %v842 = vsub.f32 1.5, %v841
      %v843 = vmul.f32 %v838, %v842
      %vm844 = vweird.f32 %v725
      %vm845 = vweird.f32 %v838
      %vm846 = vmor %vm844, %vm845
      %v847 = vsel %vm846, %v838, %v843
      %v848 = vrsqrt.pop %v726
      %v849 = vmul.f32 %v848, %v726
      %v850 = vmul.f32 %v849, %v848
      %v851 = vmul.f32 0.5, %v850
      %v852 = vsub.f32 1.5, %v851
      %v853 = vmul.f32 %v848, %v852
      %vm854 = vweird.f32 %v726
      %vm855 = vweird.f32 %v848
      %vm856 = vmor %vm854, %vm855
      %v857 = vsel %vm856, %v848, %v853
      %v858 = vrsqrt.pop %v727
      %v859 = vmul.f32 %v858, %v727
      %v860 = vmul.f32 %v859, %v858
      %v861 = vmul.f32 0.5, %v860
      %v862 = vsub.f32 1.5, %v861
      %v863 = vmul.f32 %v858, %v862
      %vm864 = vweird.f32 %v727
      %vm865 = vweird.f32 %v858
      %vm866 = vmor %vm864, %vm865
      %v867 = vsel %vm866, %v858, %v863
      %v868 = vrsqrt.pop %v728
      %v869 = vmul.f32 %v868, %v728
      %v870 = vmul.f32 %v869, %v868
      %v871 = vmul.f32 0.5, %v870
      %v872 = vsub.f32 1.5, %v871
      %v873 = vmul.f32 %v868, %v872
      %vm874 = vweird.f32 %v728
      %vm875 = vweird.f32 %v868
      %vm876 = vmor %vm874, %vm875
      %v877 = vsel %vm876, %v868, %v873
      %v878 = vrsqrt.pop %v729
      %v879 = vmul.f32 %v878, %v729
      %v880 = vmul.f32 %v879, %v878
      %v881 = vmul.f32 0.5, %v880
      %v882 = vsub.f32 1.5, %v881
      %v883 = vmul.f32 %v878, %v882
      %vm884 = vweird.f32 %v729
      %vm885 = vweird.f32 %v878
      %vm886 = vmor %vm884, %vm885
      %v887 = vsel %vm886, %v878, %v883
      %v888 = vrsqrt.pop %v730
      %v889 = vmul.f32 %v888, %v730
      %v890 = vmul.f32 %v889, %v888
      %v891 = vmul.f32 0.5, %v890
      %v892 = vsub.f32 1.5, %v891
      %v893 = vmul.f32 %v888, %v892
      %vm894 = vweird.f32 %v730
      %vm895 = vweird.f32 %v888
      %vm896 = vmor %vm894, %vm895
      %v897 = vsel %vm896, %v888, %v893
      %v898 = vrsqrt.pop %v731
      %v899 = vmul.f32 %v898, %v731
      %v900 = vmul.f32 %v899, %v898
      %v901 = vmul.f32 0.5, %v900
      %v902 = vsub.f32 1.5, %v901
      %v903 = vmul.f32 %v898, %v902
      %vm904 = vweird.f32 %v731
      %vm905 = vweird.f32 %v898
      %vm906 = vmor %vm904, %vm905
      %v907 = vsel %vm906, %v898, %v903
      %v908 = vrsqrt.pop %v732
      %v909 = vmul.f32 %v908, %v732
      %v910 = vmul.f32 %v909, %v908
      %v911 = vmul.f32 0.5, %v910
      %v912 = vsub.f32 1.5, %v911
      %v913 = vmul.f32 %v908, %v912
      %vm914 = vweird.f32 %v732
      %vm915 = vweird.f32 %v908
      %vm916 = vmor %vm914, %vm915
      %v917 = vsel %vm916, %v908, %v913
      %v918 = vrsqrt.pop %v733
      %v919 = vmul.f32 %v918, %v733
      %v920 = vmul.f32 %v919, %v918
      %v921 = vmul.f32 0.5, %v920
      %v922 = vsub.f32 1.5, %v921
      %v923 = vmul.f32 %v918, %v922
      %vm924 = vweird.f32 %v733
      %vm925 = vweird.f32 %v918
      %vm926 = vmor %vm924, %vm925
      %v927 = vsel %vm926, %v918, %v923
      %v928 = vrsqrt.pop %v734
      %v929 = vmul.f32 %v928, %v734
      %v930 = vmul.f32 %v929, %v928
      %v931 = vmul.f32 0.5, %v930
      %v932 = vsub.f32 1.5, %v931
      %v933 = vmul.f32 %v928, %v932
      %vm934 = vweird.f32 %v734
      %vm935 = vweird.f32 %v928
      %vm936 = vmor %vm934, %vm935
      %v937 = vsel %vm936, %v928, %v933
      %v938 = vrsqrt.pop %v735
      %v939 = vmul.f32 %v938, %v735
      %v940 = vmul.f32 %v939, %v938
      %v941 = vmul.f32 0.5, %v940
      %v942 = vsub.f32 1.5, %v941
      %v943 = vmul.f32 %v938, %v942
      %vm944 = vweird.f32 %v735
      %vm945 = vweird.f32 %v938
      %vm946 = vmor %vm944, %vm945
      %v947 = vsel %vm946, %v938, %v943
      %v948 = vrsqrt.pop %v736
      %v949 = vmul.f32 %v948, %v736
      %v950 = vmul.f32 %v949, %v948
      %v951 = vmul.f32 0.5, %v950
      %v952 = vsub.f32 1.5, %v951
      %v953 = vmul.f32 %v948, %v952
      %vm954 = vweird.f32 %v736
      %vm955 = vweird.f32 %v948
      %vm956 = vmor %vm954, %vm955
      %v957 = vsel %vm956, %v948, %v953
      %v958 = vrsqrt.pop %v737
      %v959 = vmul.f32 %v958, %v737
      %v960 = vmul.f32 %v959, %v958
      %v961 = vmul.f32 0.5, %v960
      %v962 = vsub.f32 1.5, %v961
      %v963 = vmul.f32 %v958, %v962
      %vm964 = vweird.f32 %v737
      %vm965 = vweird.f32 %v958
      %vm966 = vmor %vm964, %vm965
      %v967 = vsel %vm966, %v958, %v963
      %v968 = vrsqrt.pop %v738
      %v969 = vmul.f32 %v968, %v738
      %v970 = vmul.f32 %v969, %v968
      %v971 = vmul.f32 0.5, %v970
      %v972 = vsub.f32 1.5, %v971
      %v973 = vmul.f32 %v968, %v972
      %vm974 = vweird.f32 %v738
      %vm975 = vweird.f32 %v968
      %vm976 = vmor %vm974, %vm975
      %v977 = vsel %vm976, %v968, %v973
      %v978 = vrsqrt.pop %v739
      %v979 = vmul.f32 %v978, %v739
      %v980 = vmul.f32 %v979, %v978
      %v981 = vmul.f32 0.5, %v980
      %v982 = vsub.f32 1.5, %v981
      %v983 = vmul.f32 %v978, %v982
      %vm984 = vweird.f32 %v739
      %vm985 = vweird.f32 %v978
      %vm986 = vmor %vm984, %vm985
      %v987 = vsel %vm986, %v978, %v983
      %v988 = vrsqrt.pop %v740
      %v989 = vmul.f32 %v988, %v740
      %v990 = vmul.f32 %v989, %v988
      %v991 = vmul.f32 0.5, %v990
      %v992 = vsub.f32 1.5, %v991
      %v993 = vmul.f32 %v988, %v992
      %vm994 = vweird.f32 %v740
      %vm995 = vweird.f32 %v988
      %vm996 = vmor %vm994, %vm995
      %v997 = vsel %vm996, %v988, %v993
      %v998 = vrsqrt.pop %v741
      %v999 = vmul.f32 %v998, %v741
      %v1000 = vmul.f32 %v999, %v998
      %v1001 = vmul.f32 0.5, %v1000
      %v1002 = vsub.f32 1.5, %v1001
      %v1003 = vmul.f32 %v998, %v1002
      %vm1004 = vweird.f32 %v741
      %vm1005 = vweird.f32 %v998
      %vm1006 = vmor %vm1004, %vm1005
      %v1007 = vsel %vm1006, %v998, %v1003
      %v1008 = vrsqrt.pop %v742
      %v1009 = vmul.f32 %v1008, %v742
      %v1010 = vmul.f32 %v1009, %v1008
      %v1011 = vmul.f32 0.5, %v1010
      %v1012 = vsub.f32 1.5, %v1011
      %v1013 = vmul.f32 %v1008, %v1012
      %vm1014 = vweird.f32 %v742
      %vm1015 = vweird.f32 %v1008
      %vm1016 = vmor %vm1014, %vm1015
      %v1017 = vsel %vm1016, %v1008, %v1013
      %v1018 = vrsqrt.pop %v743
      %v1019 = vmul.f32 %v1018, %v743
      %v1020 = vmul.f32 %v1019, %v1018
      %v1021 = vmul.f32 0.5, %v1020
      %v1022 = vsub.f32 1.5, %v1021
      %v1023 = vmul.f32 %v1018, %v1022
      %vm1024 = vweird.f32 %v743
      %vm1025 = vweird.f32 %v1018
      %vm1026 = vmor %vm1024, %vm1025
      %v1027 = vsel %vm1026, %v1018, %v1023
      %v1028 = vrsqrt.pop %v744
      %v1029 = vmul.f32 %v1028, %v744
      %v1030 = vmul.f32 %v1029, %v1028
      %v1031 = vmul.f32 0.5, %v1030
      %v1032 = vsub.f32 1.5, %v1031
      %v1033 = vmul.f32 %v1028, %v1032
      %vm1034 = vweird.f32 %v744
      %vm1035 = vweird.f32 %v1028
      %vm1036 = vmor %vm1034, %vm1035
      %v1037 = vsel %vm1036, %v1028, %v1033
      %v1038 = vrsqrt.pop %v745
      %v1039 = vmul.f32 %v1038, %v745
      %v1040 = vmul.f32 %v1039, %v1038
      %v1041 = vmul.f32 0.5, %v1040
      %v1042 = vsub.f32 1.5, %v1041
      %v1043 = vmul.f32 %v1038, %v1042
      %vm1044 = vweird.f32 %v745
      %vm1045 = vweird.f32 %v1038
      %vm1046 = vmor %vm1044, %vm1045
      %v1047 = vsel %vm1046, %v1038, %v1043
      %v1048 = vrsqrt.pop %v746
      %v1049 = vmul.f32 %v1048, %v746
      %v1050 = vmul.f32 %v1049, %v1048
      %v1051 = vmul.f32 0.5, %v1050
      %v1052 = vsub.f32 1.5, %v1051
      %v1053 = vmul.f32 %v1048, %v1052
      %vm1054 = vweird.f32 %v746
      %vm1055 = vweird.f32 %v1048
      %vm1056 = vmor %vm1054, %vm1055
      %v1057 = vsel %vm1056, %v1048, %v1053
      %v1058 = vrsqrt.pop %v747
      %v1059 = vmul.f32 %v1058, %v747
      %v1060 = vmul.f32 %v1059, %v1058
      %v1061 = vmul.f32 0.5, %v1060
      %v1062 = vsub.f32 1.5, %v1061
      %v1063 = vmul.f32 %v1058, %v1062
      %vm1064 = vweird.f32 %v747
      %vm1065 = vweird.f32 %v1058
      %vm1066 = vmor %vm1064, %vm1065
      %v1067 = vsel %vm1066, %v1058, %v1063
      %v1068 = vmul.f32 %v555, %v757
      %v1069 = vmul.f32 %v556, %v767
      %v1070 = vmul.f32 %v557, %v777
      %v1071 = vmul.f32 %v558, %v787
      %v1072 = vmul.f32 %v559, %v797
      %v1073 = vmul.f32 %v560, %v807
      %v1074 = vmul.f32 %v561, %v817
      %v1075 = vmul.f32 %v562, %v827
      %v1076 = vmul.f32 %v563, %v837
      %v1077 = vmul.f32 %v564, %v847
      %v1078 = vmul.f32 %v565, %v857
      %v1079 = vmul.f32 %v566, %v867
      %v1080 = vmul.f32 %v567, %v877
      %v1081 = vmul.f32 %v568, %v887
      %v1082 = vmul.f32 %v569, %v897
      %v1083 = vmul.f32 %v570, %v907
      %v1084 = vmul.f32 %v571, %v917
      %v1085 = vmul.f32 %v572, %v927
      %v1086 = vmul.f32 %v573, %v937
      %v1087 = vmul.f32 %v574, %v947
      %v1088 = vmul.f32 %v575, %v957
      %v1089 = vmul.f32 %v576, %v967
      %v1090 = vmul.f32 %v577, %v977
      %v1091 = vmul.f32 %v578, %v987
      %v1092 = vmul.f32 %v579, %v997
      %v1093 = vmul.f32 %v580, %v1007
      %v1094 = vmul.f32 %v581, %v1017
      %v1095 = vmul.f32 %v582, %v1027
      %v1096 = vmul.f32 %v583, %v1037
      %v1097 = vmul.f32 %v584, %v1047
      %v1098 = vmul.f32 %v585, %v1057
      %v1099 = vmul.f32 %v586, %v1067
      %v1100 = vpack.c.bf16 %v1069, %v1068
      %v1101 = vpack.c.bf16 %v1071, %v1070
      %v1102 = vpack.c.bf16 %v1073, %v1072
      %v1103 = vpack.c.bf16 %v1075, %v1074
      %v1104 = vpack.c.bf16 %v1077, %v1076
      %v1105 = vpack.c.bf16 %v1079, %v1078
      %v1106 = vpack.c.bf16 %v1081, %v1080
      %v1107 = vpack.c.bf16 %v1083, %v1082
      %v1108 = vpack.c.bf16 %v1085, %v1084
      %v1109 = vpack.c.bf16 %v1087, %v1086
      %v1110 = vpack.c.bf16 %v1089, %v1088
      %v1111 = vpack.c.bf16 %v1091, %v1090
      %v1112 = vpack.c.bf16 %v1093, %v1092
      %v1113 = vpack.c.bf16 %v1095, %v1094
      %v1114 = vpack.c.bf16 %v1097, %v1096
      %v1115 = vpack.c.bf16 %v1099, %v1098
      %v1116 = vld [vmem:[%s3] sm:$0xff]
      %v1117 = vpack.c.bf16 %v1116, %v1116
      %v1119 = vsel %vm619, %v1100, 0
      %v1122 = vsel %vm619, %v1101, 0
      %v1125 = vsel %vm619, %v1102, 0
      %v1128 = vsel %vm619, %v1103, 0
      %v1131 = vsel %vm619, %v1104, 0
      %v1134 = vsel %vm619, %v1105, 0
      %v1137 = vsel %vm619, %v1106, 0
      %v1140 = vsel %vm619, %v1107, 0
      %v1143 = vsel %vm619, %v1108, 0
      %v1146 = vsel %vm619, %v1109, 0
      %v1149 = vsel %vm619, %v1110, 0
      %v1152 = vsel %vm619, %v1111, 0
      %v1155 = vsel %vm619, %v1112, 0
      %v1158 = vsel %vm619, %v1113, 0
      %v1161 = vsel %vm619, %v1114, 0
      %v1164 = vsel %vm619, %v1115, 0
      %vm1166 = vcmask 1043456
      %v1168 = vsel %vm1166, %v1117, 0
      %1170 = vmatpush.bf16.msra.mxu0 0
      %1171 = vmatpush.bf16.msra.mxu0 0
      %1172 = vmatpush.bf16.msra.mxu0 0
      %1173 = vmatpush.bf16.msra.mxu0 0
      %1174 = vmatpush.bf16.msra.mxu0 0
      %1175 = vmatpush.bf16.msra.mxu0 0
      %1176 = vmatpush.bf16.msra.mxu0 0
      %1177 = vmatpush.bf16.msra.mxu0 %v1168
      %1178 = vmatmul.bf16.gmra.mxu0 %v1119
      %v1179 = vpop.f32.mrf.mxu0
      %v1180 = vadd.f32 0.0, %v1179
      %v1181 = vpop.f32.mrf.mxu0
      %v1182 = vadd.f32 0.0, %v1181
      %1183 = vmatmul.bf16.gmra.mxu0 %v1122
      %v1184 = vpop.f32.mrf.mxu0
      %v1185 = vadd.f32 0.0, %v1184
      %v1186 = vpop.f32.mrf.mxu0
      %v1187 = vadd.f32 0.0, %v1186
      %1188 = vmatmul.bf16.gmra.mxu0 %v1125
      %v1189 = vpop.f32.mrf.mxu0
      %v1190 = vadd.f32 0.0, %v1189
      %v1191 = vpop.f32.mrf.mxu0
      %v1192 = vadd.f32 0.0, %v1191
      %1193 = vmatmul.bf16.gmra.mxu0 %v1128
      %v1194 = vpop.f32.mrf.mxu0
      %v1195 = vadd.f32 0.0, %v1194
      %v1196 = vpop.f32.mrf.mxu0
      %v1197 = vadd.f32 0.0, %v1196
      %1198 = vmatmul.bf16.gmra.mxu0 %v1131
      %v1199 = vpop.f32.mrf.mxu0
      %v1200 = vadd.f32 0.0, %v1199
      %v1201 = vpop.f32.mrf.mxu0
      %v1202 = vadd.f32 0.0, %v1201
      %1203 = vmatmul.bf16.gmra.mxu0 %v1134
      %v1204 = vpop.f32.mrf.mxu0
      %v1205 = vadd.f32 0.0, %v1204
      %v1206 = vpop.f32.mrf.mxu0
      %v1207 = vadd.f32 0.0, %v1206
      %1208 = vmatmul.bf16.gmra.mxu0 %v1137
      %v1209 = vpop.f32.mrf.mxu0
      %v1210 = vadd.f32 0.0, %v1209
      %v1211 = vpop.f32.mrf.mxu0
      %v1212 = vadd.f32 0.0, %v1211
      %1213 = vmatmul.bf16.gmra.mxu0 %v1140
      %v1214 = vpop.f32.mrf.mxu0
      %v1215 = vadd.f32 0.0, %v1214
      %v1216 = vpop.f32.mrf.mxu0
      %v1217 = vadd.f32 0.0, %v1216
      %1218 = vmatmul.bf16.gmra.mxu0 %v1143
      %v1219 = vpop.f32.mrf.mxu0
      %v1220 = vadd.f32 0.0, %v1219
      %v1221 = vpop.f32.mrf.mxu0
      %v1222 = vadd.f32 0.0, %v1221
      %1223 = vmatmul.bf16.gmra.mxu0 %v1146
      %v1224 = vpop.f32.mrf.mxu0
      %v1225 = vadd.f32 0.0, %v1224
      %v1226 = vpop.f32.mrf.mxu0
      %v1227 = vadd.f32 0.0, %v1226
      %1228 = vmatmul.bf16.gmra.mxu0 %v1149
      %v1229 = vpop.f32.mrf.mxu0
      %v1230 = vadd.f32 0.0, %v1229
      %v1231 = vpop.f32.mrf.mxu0
      %v1232 = vadd.f32 0.0, %v1231
      %1233 = vmatmul.bf16.gmra.mxu0 %v1152
      %v1234 = vpop.f32.mrf.mxu0
      %v1235 = vadd.f32 0.0, %v1234
      %v1236 = vpop.f32.mrf.mxu0
      %v1237 = vadd.f32 0.0, %v1236
      %1238 = vmatmul.bf16.gmra.mxu0 %v1155
      %v1239 = vpop.f32.mrf.mxu0
      %v1240 = vadd.f32 0.0, %v1239
      %v1241 = vpop.f32.mrf.mxu0
      %v1242 = vadd.f32 0.0, %v1241
      %1243 = vmatmul.bf16.gmra.mxu0 %v1158
      %v1244 = vpop.f32.mrf.mxu0
      %v1245 = vadd.f32 0.0, %v1244
      %v1246 = vpop.f32.mrf.mxu0
      %v1247 = vadd.f32 0.0, %v1246
      %1248 = vmatmul.bf16.gmra.mxu0 %v1161
      %v1249 = vpop.f32.mrf.mxu0
      %v1250 = vadd.f32 0.0, %v1249
      %v1251 = vpop.f32.mrf.mxu0
      %v1252 = vadd.f32 0.0, %v1251
      %1253 = vmatmul.bf16.gmra.mxu0 %v1164
      %v1254 = vpop.f32.mrf.mxu0
      %v1255 = vadd.f32 0.0, %v1254
      %v1256 = vpop.f32.mrf.mxu0
      %v1257 = vadd.f32 0.0, %v1256
      %1258 = vdwg.mxu0
      %v1259 = vmax.f32 %v1180, 0.0
      %v1260 = vmax.f32 %v1182, 0.0
      %v1261 = vmax.f32 %v1185, 0.0
      %v1262 = vmax.f32 %v1187, 0.0
      %v1263 = vmax.f32 %v1190, 0.0
      %v1264 = vmax.f32 %v1192, 0.0
      %v1265 = vmax.f32 %v1195, 0.0
      %v1266 = vmax.f32 %v1197, 0.0
      %v1267 = vmax.f32 %v1200, 0.0
      %v1268 = vmax.f32 %v1202, 0.0
      %v1269 = vmax.f32 %v1205, 0.0
      %v1270 = vmax.f32 %v1207, 0.0
      %v1271 = vmax.f32 %v1210, 0.0
      %v1272 = vmax.f32 %v1212, 0.0
      %v1273 = vmax.f32 %v1215, 0.0
      %v1274 = vmax.f32 %v1217, 0.0
      %v1275 = vmax.f32 %v1220, 0.0
      %v1276 = vmax.f32 %v1222, 0.0
      %v1277 = vmax.f32 %v1225, 0.0
      %v1278 = vmax.f32 %v1227, 0.0
      %v1279 = vmax.f32 %v1230, 0.0
      %v1280 = vmax.f32 %v1232, 0.0
      %v1281 = vmax.f32 %v1235, 0.0
      %v1282 = vmax.f32 %v1237, 0.0
      %v1283 = vmax.f32 %v1240, 0.0
      %v1284 = vmax.f32 %v1242, 0.0
      %v1285 = vmax.f32 %v1245, 0.0
      %v1286 = vmax.f32 %v1247, 0.0
      %v1287 = vmax.f32 %v1250, 0.0
      %v1288 = vmax.f32 %v1252, 0.0
      %v1289 = vmax.f32 %v1255, 0.0
      %v1290 = vmax.f32 %v1257, 0.0
      %v1291 = vld [vmem:[%s501] sm:$0xff]
      %v1292 = vld [vmem:[%s501 + $0x8] sm:$0xff]
      %v1293 = vld [vmem:[%s501 + $0x10] sm:$0xff]
      %v1294 = vld [vmem:[%s501 + $0x18] sm:$0xff]
      %v1295 = vld [vmem:[%s501 + $0x20] sm:$0xff]
      %v1296 = vld [vmem:[%s501 + $0x28] sm:$0xff]
      %v1297 = vld [vmem:[%s501 + $0x30] sm:$0xff]
      %v1298 = vld [vmem:[%s501 + $0x38] sm:$0xff]
      %v1299 = vld [vmem:[%s501 + $0x40] sm:$0xff]
      %v1300 = vld [vmem:[%s501 + $0x48] sm:$0xff]
      %v1301 = vld [vmem:[%s501 + $0x50] sm:$0xff]
      %v1302 = vld [vmem:[%s501 + $0x58] sm:$0xff]
      %v1303 = vld [vmem:[%s501 + $0x60] sm:$0xff]
      %v1304 = vld [vmem:[%s501 + $0x68] sm:$0xff]
      %v1305 = vld [vmem:[%s501 + $0x70] sm:$0xff]
      %v1306 = vld [vmem:[%s501 + $0x78] sm:$0xff]
      %v1307 = vld [vmem:[%s501 + $0x80] sm:$0xff]
      %v1308 = vld [vmem:[%s501 + $0x88] sm:$0xff]
      %v1309 = vld [vmem:[%s501 + $0x90] sm:$0xff]
      %v1310 = vld [vmem:[%s501 + $0x98] sm:$0xff]
      %v1311 = vld [vmem:[%s501 + $0xa0] sm:$0xff]
      %v1312 = vld [vmem:[%s501 + $0xa8] sm:$0xff]
      %v1313 = vld [vmem:[%s501 + $0xb0] sm:$0xff]
      %v1314 = vld [vmem:[%s501 + $0xb8] sm:$0xff]
      %v1315 = vld [vmem:[%s501 + $0xc0] sm:$0xff]
      %v1316 = vld [vmem:[%s501 + $0xc8] sm:$0xff]
      %v1317 = vld [vmem:[%s501 + $0xd0] sm:$0xff]
      %v1318 = vld [vmem:[%s501 + $0xd8] sm:$0xff]
      %v1319 = vld [vmem:[%s501 + $0xe0] sm:$0xff]
      %v1320 = vld [vmem:[%s501 + $0xe8] sm:$0xff]
      %v1321 = vld [vmem:[%s501 + $0xf0] sm:$0xff]
      %v1322 = vld [vmem:[%s501 + $0xf8] sm:$0xff]
      %v1323 = vlaneseq
      %v1324 = vand.u32 %v1323, 127
      %1325 = vset.pattern.permute.xlu0 0
      %1326 = vperm.xlu0 %1325, %v1291
      %v1327 = vpop.permute.xlu0 %1326
      %1328 = vset.pattern.permute.xlu0 0
      %1329 = vperm.xlu0 %1328, %v1292
      %v1330 = vpop.permute.xlu0 %1329
      %1331 = vset.pattern.permute.xlu0 0
      %1332 = vperm.xlu0 %1331, %v1293
      %v1333 = vpop.permute.xlu0 %1332
      %1334 = vset.pattern.permute.xlu0 0
      %1335 = vperm.xlu0 %1334, %v1294
      %v1336 = vpop.permute.xlu0 %1335
      %1337 = vset.pattern.permute.xlu0 0
      %1338 = vperm.xlu0 %1337, %v1295
      %v1339 = vpop.permute.xlu0 %1338
      %1340 = vset.pattern.permute.xlu0 0
      %1341 = vperm.xlu0 %1340, %v1296
      %v1342 = vpop.permute.xlu0 %1341
      %1343 = vset.pattern.permute.xlu0 0
      %1344 = vperm.xlu0 %1343, %v1297
      %v1345 = vpop.permute.xlu0 %1344
      %1346 = vset.pattern.permute.xlu0 0
      %1347 = vperm.xlu0 %1346, %v1298
      %v1348 = vpop.permute.xlu0 %1347
      %1349 = vset.pattern.permute.xlu0 0
      %1350 = vperm.xlu0 %1349, %v1299
      %v1351 = vpop.permute.xlu0 %1350
      %1352 = vset.pattern.permute.xlu0 0
      %1353 = vperm.xlu0 %1352, %v1300
      %v1354 = vpop.permute.xlu0 %1353
      %1355 = vset.pattern.permute.xlu0 0
      %1356 = vperm.xlu0 %1355, %v1301
      %v1357 = vpop.permute.xlu0 %1356
      %1358 = vset.pattern.permute.xlu0 0
      %1359 = vperm.xlu0 %1358, %v1302
      %v1360 = vpop.permute.xlu0 %1359
      %1361 = vset.pattern.permute.xlu0 0
      %1362 = vperm.xlu0 %1361, %v1303
      %v1363 = vpop.permute.xlu0 %1362
      %1364 = vset.pattern.permute.xlu0 0
      %1365 = vperm.xlu0 %1364, %v1304
      %v1366 = vpop.permute.xlu0 %1365
      %1367 = vset.pattern.permute.xlu0 0
      %1368 = vperm.xlu0 %1367, %v1305
      %v1369 = vpop.permute.xlu0 %1368
      %1370 = vset.pattern.permute.xlu0 0
      %1371 = vperm.xlu0 %1370, %v1306
      %v1372 = vpop.permute.xlu0 %1371
      %vm1373 = vcmp.eq.s32.totalorder %v1327, %v1324
      %vm1374 = vcmp.eq.s32.totalorder %v1330, %v1324
      %vm1375 = vcmp.eq.s32.totalorder %v1333, %v1324
      %vm1376 = vcmp.eq.s32.totalorder %v1336, %v1324
      %vm1377 = vcmp.eq.s32.totalorder %v1339, %v1324
      %vm1378 = vcmp.eq.s32.totalorder %v1342, %v1324
      %vm1379 = vcmp.eq.s32.totalorder %v1345, %v1324
      %vm1380 = vcmp.eq.s32.totalorder %v1348, %v1324
      %vm1381 = vcmp.eq.s32.totalorder %v1351, %v1324
      %vm1382 = vcmp.eq.s32.totalorder %v1354, %v1324
      %vm1383 = vcmp.eq.s32.totalorder %v1357, %v1324
      %vm1384 = vcmp.eq.s32.totalorder %v1360, %v1324
      %vm1385 = vcmp.eq.s32.totalorder %v1363, %v1324
      %vm1386 = vcmp.eq.s32.totalorder %v1366, %v1324
      %vm1387 = vcmp.eq.s32.totalorder %v1369, %v1324
      %vm1388 = vcmp.eq.s32.totalorder %v1372, %v1324
      %v1389 = vsel %vm1373, 1, 0
      %v1390 = vsel %vm1374, 1, 0
      %v1391 = vsel %vm1375, 1, 0
      %v1392 = vsel %vm1376, 1, 0
      %v1393 = vsel %vm1377, 1, 0
      %v1394 = vsel %vm1378, 1, 0
      %v1395 = vsel %vm1379, 1, 0
      %v1396 = vsel %vm1380, 1, 0
      %v1397 = vsel %vm1381, 1, 0
      %v1398 = vsel %vm1382, 1, 0
      %v1399 = vsel %vm1383, 1, 0
      %v1400 = vsel %vm1384, 1, 0
      %v1401 = vsel %vm1385, 1, 0
      %v1402 = vsel %vm1386, 1, 0
      %v1403 = vsel %vm1387, 1, 0
      %v1404 = vsel %vm1388, 1, 0
      %v1405 = vcvt.s32.f32 %v1389
      %v1406 = vcvt.s32.f32 %v1390
      %v1407 = vcvt.s32.f32 %v1391
      %v1408 = vcvt.s32.f32 %v1392
      %v1409 = vcvt.s32.f32 %v1393
      %v1410 = vcvt.s32.f32 %v1394
      %v1411 = vcvt.s32.f32 %v1395
      %v1412 = vcvt.s32.f32 %v1396
      %v1413 = vcvt.s32.f32 %v1397
      %v1414 = vcvt.s32.f32 %v1398
      %v1415 = vcvt.s32.f32 %v1399
      %v1416 = vcvt.s32.f32 %v1400
      %v1417 = vcvt.s32.f32 %v1401
      %v1418 = vcvt.s32.f32 %v1402
      %v1419 = vcvt.s32.f32 %v1403
      %v1420 = vcvt.s32.f32 %v1404
      %v1421 = vpack.c.bf16 %v1406, %v1405
      %v1422 = vpack.c.bf16 %v1408, %v1407
      %v1423 = vpack.c.bf16 %v1410, %v1409
      %v1424 = vpack.c.bf16 %v1412, %v1411
      %v1425 = vpack.c.bf16 %v1414, %v1413
      %v1426 = vpack.c.bf16 %v1416, %v1415
      %v1427 = vpack.c.bf16 %v1418, %v1417
      %v1428 = vpack.c.bf16 %v1420, %v1419
      %v1429 = vpack.c.bf16 %v548, %v546
      %1431 = vrot.lane.b32.xlu0 %v1429, 96
      %v1432 = vpop.permute.xlu0 %1431
      %v1435 = vsel %vm529, %v1421, 0
      %v1438 = vsel %vm529, %v1422, 0
      %v1441 = vsel %vm529, %v1423, 0
      %v1444 = vsel %vm529, %v1424, 0
      %v1447 = vsel %vm529, %v1425, 0
      %v1450 = vsel %vm529, %v1426, 0
      %v1453 = vsel %vm529, %v1427, 0
      %v1456 = vsel %vm529, %v1428, 0
      %1458 = vmatpush.bf16.msra.mxu0 0
      %1459 = vmatpush.bf16.msra.mxu0 0
      %1460 = vmatpush.bf16.msra.mxu0 0
      %1461 = vmatpush.bf16.msra.mxu0 0
      %1462 = vmatpush.bf16.msra.mxu0 0
      %1463 = vmatpush.bf16.msra.mxu0 0
      %1464 = vmatpush.bf16.msra.mxu0 0
      %1465 = vmatpush.bf16.msra.mxu0 %v1432
      %1466 = vmatmul.bf16.gmra.mxu0 %v1435
      %v1467 = vpop.f32.mrf.mxu0
      %v1468 = vadd.f32 0.0, %v1467
      %v1469 = vpop.f32.mrf.mxu0
      %v1470 = vadd.f32 0.0, %v1469
      %1471 = vmatmul.bf16.gmra.mxu0 %v1438
      %v1472 = vpop.f32.mrf.mxu0
      %v1473 = vadd.f32 0.0, %v1472
      %v1474 = vpop.f32.mrf.mxu0
      %v1475 = vadd.f32 0.0, %v1474
      %1476 = vmatmul.bf16.gmra.mxu0 %v1441
      %v1477 = vpop.f32.mrf.mxu0
      %v1478 = vadd.f32 0.0, %v1477
      %v1479 = vpop.f32.mrf.mxu0
      %v1480 = vadd.f32 0.0, %v1479
      %1481 = vmatmul.bf16.gmra.mxu0 %v1444
      %v1482 = vpop.f32.mrf.mxu0
      %v1483 = vadd.f32 0.0, %v1482
      %v1484 = vpop.f32.mrf.mxu0
      %v1485 = vadd.f32 0.0, %v1484
      %1486 = vmatmul.bf16.gmra.mxu0 %v1447
      %v1487 = vpop.f32.mrf.mxu0
      %v1488 = vadd.f32 0.0, %v1487
      %v1489 = vpop.f32.mrf.mxu0
      %v1490 = vadd.f32 0.0, %v1489
      %1491 = vmatmul.bf16.gmra.mxu0 %v1450
      %v1492 = vpop.f32.mrf.mxu0
      %v1493 = vadd.f32 0.0, %v1492
      %v1494 = vpop.f32.mrf.mxu0
      %v1495 = vadd.f32 0.0, %v1494
      %1496 = vmatmul.bf16.gmra.mxu0 %v1453
      %v1497 = vpop.f32.mrf.mxu0
      %v1498 = vadd.f32 0.0, %v1497
      %v1499 = vpop.f32.mrf.mxu0
      %v1500 = vadd.f32 0.0, %v1499
      %1501 = vmatmul.bf16.gmra.mxu0 %v1456
      %v1502 = vpop.f32.mrf.mxu0
      %v1503 = vadd.f32 0.0, %v1502
      %v1504 = vpop.f32.mrf.mxu0
      %v1505 = vadd.f32 0.0, %v1504
      %1506 = vdwg.mxu0
      %v1507 = vmul.f32 %v1259, %v1468
      %v1508 = vmul.f32 %v1260, %v1470
      %v1509 = vmul.f32 %v1261, %v1473
      %v1510 = vmul.f32 %v1262, %v1475
      %v1511 = vmul.f32 %v1263, %v1478
      %v1512 = vmul.f32 %v1264, %v1480
      %v1513 = vmul.f32 %v1265, %v1483
      %v1514 = vmul.f32 %v1266, %v1485
      %v1515 = vmul.f32 %v1267, %v1488
      %v1516 = vmul.f32 %v1268, %v1490
      %v1517 = vmul.f32 %v1269, %v1493
      %v1518 = vmul.f32 %v1270, %v1495
      %v1519 = vmul.f32 %v1271, %v1498
      %v1520 = vmul.f32 %v1272, %v1500
      %v1521 = vmul.f32 %v1273, %v1503
      %v1522 = vmul.f32 %v1274, %v1505
      %vm1523 = vcmask 523264
      %v1524 = vsel %vm1523, %v1507, -inf
      %v1525 = vrot.slane %v1524, 4
      %v1526 = vmax.f32 %v1524, %v1525
      %v1527 = vrot.slane %v1526, 2
      %v1528 = vmax.f32 %v1526, %v1527
      %v1529 = vrot.slane %v1528, 1
      %v1530 = vmax.f32 %v1528, %v1529
      %v1531 = vsel %vm1523, %v1508, -inf
      %v1532 = vrot.slane %v1531, 4
      %v1533 = vmax.f32 %v1531, %v1532
      %v1534 = vrot.slane %v1533, 2
      %v1535 = vmax.f32 %v1533, %v1534
      %v1536 = vrot.slane %v1535, 1
      %v1537 = vmax.f32 %v1535, %v1536
      %v1538 = vsel %vm1523, %v1509, -inf
      %v1539 = vrot.slane %v1538, 4
      %v1540 = vmax.f32 %v1538, %v1539
      %v1541 = vrot.slane %v1540, 2
      %v1542 = vmax.f32 %v1540, %v1541
      %v1543 = vrot.slane %v1542, 1
      %v1544 = vmax.f32 %v1542, %v1543
      %v1545 = vsel %vm1523, %v1510, -inf
      %v1546 = vrot.slane %v1545, 4
      %v1547 = vmax.f32 %v1545, %v1546
      %v1548 = vrot.slane %v1547, 2
      %v1549 = vmax.f32 %v1547, %v1548
      %v1550 = vrot.slane %v1549, 1
      %v1551 = vmax.f32 %v1549, %v1550
      %v1552 = vsel %vm1523, %v1511, -inf
      %v1553 = vrot.slane %v1552, 4
      %v1554 = vmax.f32 %v1552, %v1553
      %v1555 = vrot.slane %v1554, 2
      %v1556 = vmax.f32 %v1554, %v1555
      %v1557 = vrot.slane %v1556, 1
      %v1558 = vmax.f32 %v1556, %v1557
      %v1559 = vsel %vm1523, %v1512, -inf
      %v1560 = vrot.slane %v1559, 4
      %v1561 = vmax.f32 %v1559, %v1560
      %v1562 = vrot.slane %v1561, 2
      %v1563 = vmax.f32 %v1561, %v1562
      %v1564 = vrot.slane %v1563, 1
      %v1565 = vmax.f32 %v1563, %v1564
      %v1566 = vsel %vm1523, %v1513, -inf
      %v1567 = vrot.slane %v1566, 4
      %v1568 = vmax.f32 %v1566, %v1567
      %v1569 = vrot.slane %v1568, 2
      %v1570 = vmax.f32 %v1568, %v1569
      %v1571 = vrot.slane %v1570, 1
      %v1572 = vmax.f32 %v1570, %v1571
      %v1573 = vsel %vm1523, %v1514, -inf
      %v1574 = vrot.slane %v1573, 4
      %v1575 = vmax.f32 %v1573, %v1574
      %v1576 = vrot.slane %v1575, 2
      %v1577 = vmax.f32 %v1575, %v1576
      %v1578 = vrot.slane %v1577, 1
      %v1579 = vmax.f32 %v1577, %v1578
      %v1580 = vsel %vm1523, %v1515, -inf
      %v1581 = vrot.slane %v1580, 4
      %v1582 = vmax.f32 %v1580, %v1581
      %v1583 = vrot.slane %v1582, 2
      %v1584 = vmax.f32 %v1582, %v1583
      %v1585 = vrot.slane %v1584, 1
      %v1586 = vmax.f32 %v1584, %v1585
      %v1587 = vsel %vm1523, %v1516, -inf
      %v1588 = vrot.slane %v1587, 4
      %v1589 = vmax.f32 %v1587, %v1588
      %v1590 = vrot.slane %v1589, 2
      %v1591 = vmax.f32 %v1589, %v1590
      %v1592 = vrot.slane %v1591, 1
      %v1593 = vmax.f32 %v1591, %v1592
      %v1594 = vsel %vm1523, %v1517, -inf
      %v1595 = vrot.slane %v1594, 4
      %v1596 = vmax.f32 %v1594, %v1595
      %v1597 = vrot.slane %v1596, 2
      %v1598 = vmax.f32 %v1596, %v1597
      %v1599 = vrot.slane %v1598, 1
      %v1600 = vmax.f32 %v1598, %v1599
      %v1601 = vsel %vm1523, %v1518, -inf
      %v1602 = vrot.slane %v1601, 4
      %v1603 = vmax.f32 %v1601, %v1602
      %v1604 = vrot.slane %v1603, 2
      %v1605 = vmax.f32 %v1603, %v1604
      %v1606 = vrot.slane %v1605, 1
      %v1607 = vmax.f32 %v1605, %v1606
      %v1608 = vsel %vm1523, %v1519, -inf
      %v1609 = vrot.slane %v1608, 4
      %v1610 = vmax.f32 %v1608, %v1609
      %v1611 = vrot.slane %v1610, 2
      %v1612 = vmax.f32 %v1610, %v1611
      %v1613 = vrot.slane %v1612, 1
      %v1614 = vmax.f32 %v1612, %v1613
      %v1615 = vsel %vm1523, %v1520, -inf
      %v1616 = vrot.slane %v1615, 4
      %v1617 = vmax.f32 %v1615, %v1616
      %v1618 = vrot.slane %v1617, 2
      %v1619 = vmax.f32 %v1617, %v1618
      %v1620 = vrot.slane %v1619, 1
      %v1621 = vmax.f32 %v1619, %v1620
      %v1622 = vsel %vm1523, %v1521, -inf
      %v1623 = vrot.slane %v1622, 4
      %v1624 = vmax.f32 %v1622, %v1623
      %v1625 = vrot.slane %v1624, 2
      %v1626 = vmax.f32 %v1624, %v1625
      %v1627 = vrot.slane %v1626, 1
      %v1628 = vmax.f32 %v1626, %v1627
      %v1629 = vsel %vm1523, %v1522, -inf
      %v1630 = vrot.slane %v1629, 4
      %v1631 = vmax.f32 %v1629, %v1630
      %v1632 = vrot.slane %v1631, 2
      %v1633 = vmax.f32 %v1631, %v1632
      %v1634 = vrot.slane %v1633, 1
      %v1635 = vmax.f32 %v1633, %v1634
      %1652 = vrot.lane.b32.xlu0 %v1530, 96
      %v1653 = vpop.permute.xlu0 %1652
      %1654 = vrot.lane.b32.xlu0 %v1537, 96
      %v1655 = vpop.permute.xlu0 %1654
      %1656 = vrot.lane.b32.xlu0 %v1544, 96
      %v1657 = vpop.permute.xlu0 %1656
      %1658 = vrot.lane.b32.xlu0 %v1551, 96
      %v1659 = vpop.permute.xlu0 %1658
      %1660 = vrot.lane.b32.xlu0 %v1558, 96
      %v1661 = vpop.permute.xlu0 %1660
      %1662 = vrot.lane.b32.xlu0 %v1565, 96
      %v1663 = vpop.permute.xlu0 %1662
      %1664 = vrot.lane.b32.xlu0 %v1572, 96
      %v1665 = vpop.permute.xlu0 %1664
      %1666 = vrot.lane.b32.xlu0 %v1579, 96
      %v1667 = vpop.permute.xlu0 %1666
      %1668 = vrot.lane.b32.xlu0 %v1586, 96
      %v1669 = vpop.permute.xlu0 %1668
      %1670 = vrot.lane.b32.xlu0 %v1593, 96
      %v1671 = vpop.permute.xlu0 %1670
      %1672 = vrot.lane.b32.xlu0 %v1600, 96
      %v1673 = vpop.permute.xlu0 %1672
      %1674 = vrot.lane.b32.xlu0 %v1607, 96
      %v1675 = vpop.permute.xlu0 %1674
      %1676 = vrot.lane.b32.xlu0 %v1614, 96
      %v1677 = vpop.permute.xlu0 %1676
      %1678 = vrot.lane.b32.xlu0 %v1621, 96
      %v1679 = vpop.permute.xlu0 %1678
      %1680 = vrot.lane.b32.xlu0 %v1628, 96
      %v1681 = vpop.permute.xlu0 %1680
      %1682 = vrot.lane.b32.xlu0 %v1635, 96
      %v1683 = vpop.permute.xlu0 %1682
      %v1700 = vadd.f32 %v1530, %v1653
      %v1701 = vadd.f32 %v1537, %v1655
      %v1702 = vadd.f32 %v1544, %v1657
      %v1703 = vadd.f32 %v1551, %v1659
      %v1704 = vadd.f32 %v1558, %v1661
      %v1705 = vadd.f32 %v1565, %v1663
      %v1706 = vadd.f32 %v1572, %v1665
      %v1707 = vadd.f32 %v1579, %v1667
      %v1708 = vadd.f32 %v1586, %v1669
      %v1709 = vadd.f32 %v1593, %v1671
      %v1710 = vadd.f32 %v1600, %v1673
      %v1711 = vadd.f32 %v1607, %v1675
      %v1712 = vadd.f32 %v1614, %v1677
      %v1713 = vadd.f32 %v1621, %v1679
      %v1714 = vadd.f32 %v1628, %v1681
      %v1715 = vadd.f32 %v1635, %v1683
      %v1732 = vrot.slane %v1701, 7
      %vm1733 = vcmask 1041409
      %v1734 = vsel %vm1733, %v1732, %v1700
      %v1735 = vrot.slane %v1702, 6
      %vm1736 = vcmask 1042434
      %v1737 = vsel %vm1736, %v1735, %v1734
      %v1738 = vrot.slane %v1703, 5
      %vm1739 = vcmask 1043459
      %v1740 = vsel %vm1739, %v1738, %v1737
      %v1741 = vrot.slane %v1704, 4
      %vm1742 = vcmask 1044484
      %v1743 = vsel %vm1742, %v1741, %v1740
      %v1744 = vrot.slane %v1705, 3
      %vm1745 = vcmask 1045509
      %v1746 = vsel %vm1745, %v1744, %v1743
      %v1747 = vrot.slane %v1706, 2
      %vm1748 = vcmask 1046534
      %v1749 = vsel %vm1748, %v1747, %v1746
      %v1750 = vrot.slane %v1707, 1
      %vm1751 = vcmask 1047559
      %v1752 = vsel %vm1751, %v1750, %v1749
      %v1753 = vrot.slane %v1709, 7
      %v1754 = vsel %vm1733, %v1753, %v1708
      %v1755 = vrot.slane %v1710, 6
      %v1756 = vsel %vm1736, %v1755, %v1754
      %v1757 = vrot.slane %v1711, 5
      %v1758 = vsel %vm1739, %v1757, %v1756
      %v1759 = vrot.slane %v1712, 4
      %v1760 = vsel %vm1742, %v1759, %v1758
      %v1761 = vrot.slane %v1713, 3
      %v1762 = vsel %vm1745, %v1761, %v1760
      %v1763 = vrot.slane %v1714, 2
      %v1764 = vsel %vm1748, %v1763, %v1762
      %v1765 = vrot.slane %v1715, 1
      %v1766 = vsel %vm1751, %v1765, %v1764
      %v1769 = vadd.f32 %v546, %v1752
      %v1770 = vadd.f32 %v548, %v1766
      %vm1771 = vcmask 261120
      %1772 = vst.msk [vmem:[#allocation2] sm:$0xff] %vm1771, %v1769
      %1773 = vst.msk [vmem:[#allocation2 + $0x8] sm:$0xff] %vm1771, %v1770
      %1774 = vset.pattern.permute.xlu0 0
      %1775 = vperm.xlu0 %1774, %v1307
      %v1776 = vpop.permute.xlu0 %1775
      %1777 = vset.pattern.permute.xlu0 0
      %1778 = vperm.xlu0 %1777, %v1308
      %v1779 = vpop.permute.xlu0 %1778
      %1780 = vset.pattern.permute.xlu0 0
      %1781 = vperm.xlu0 %1780, %v1309
      %v1782 = vpop.permute.xlu0 %1781
      %1783 = vset.pattern.permute.xlu0 0
      %1784 = vperm.xlu0 %1783, %v1310
      %v1785 = vpop.permute.xlu0 %1784
      %1786 = vset.pattern.permute.xlu0 0
      %1787 = vperm.xlu0 %1786, %v1311
      %v1788 = vpop.permute.xlu0 %1787
      %1789 = vset.pattern.permute.xlu0 0
      %1790 = vperm.xlu0 %1789, %v1312
      %v1791 = vpop.permute.xlu0 %1790
      %1792 = vset.pattern.permute.xlu0 0
      %1793 = vperm.xlu0 %1792, %v1313
      %v1794 = vpop.permute.xlu0 %1793
      %1795 = vset.pattern.permute.xlu0 0
      %1796 = vperm.xlu0 %1795, %v1314
      %v1797 = vpop.permute.xlu0 %1796
      %1798 = vset.pattern.permute.xlu0 0
      %1799 = vperm.xlu0 %1798, %v1315
      %v1800 = vpop.permute.xlu0 %1799
      %1801 = vset.pattern.permute.xlu0 0
      %1802 = vperm.xlu0 %1801, %v1316
      %v1803 = vpop.permute.xlu0 %1802
      %1804 = vset.pattern.permute.xlu0 0
      %1805 = vperm.xlu0 %1804, %v1317
      %v1806 = vpop.permute.xlu0 %1805
      %1807 = vset.pattern.permute.xlu0 0
      %1808 = vperm.xlu0 %1807, %v1318
      %v1809 = vpop.permute.xlu0 %1808
      %1810 = vset.pattern.permute.xlu0 0
      %1811 = vperm.xlu0 %1810, %v1319
      %v1812 = vpop.permute.xlu0 %1811
      %1813 = vset.pattern.permute.xlu0 0
      %1814 = vperm.xlu0 %1813, %v1320
      %v1815 = vpop.permute.xlu0 %1814
      %1816 = vset.pattern.permute.xlu0 0
      %1817 = vperm.xlu0 %1816, %v1321
      %v1818 = vpop.permute.xlu0 %1817
      %1819 = vset.pattern.permute.xlu0 0
      %1820 = vperm.xlu0 %1819, %v1322
      %v1821 = vpop.permute.xlu0 %1820
      %vm1822 = vcmp.eq.s32.totalorder %v1776, %v1324
      %vm1823 = vcmp.eq.s32.totalorder %v1779, %v1324
      %vm1824 = vcmp.eq.s32.totalorder %v1782, %v1324
      %vm1825 = vcmp.eq.s32.totalorder %v1785, %v1324
      %vm1826 = vcmp.eq.s32.totalorder %v1788, %v1324
      %vm1827 = vcmp.eq.s32.totalorder %v1791, %v1324
      %vm1828 = vcmp.eq.s32.totalorder %v1794, %v1324
      %vm1829 = vcmp.eq.s32.totalorder %v1797, %v1324
      %vm1830 = vcmp.eq.s32.totalorder %v1800, %v1324
      %vm1831 = vcmp.eq.s32.totalorder %v1803, %v1324
      %vm1832 = vcmp.eq.s32.totalorder %v1806, %v1324
      %vm1833 = vcmp.eq.s32.totalorder %v1809, %v1324
      %vm1834 = vcmp.eq.s32.totalorder %v1812, %v1324
      %vm1835 = vcmp.eq.s32.totalorder %v1815, %v1324
      %vm1836 = vcmp.eq.s32.totalorder %v1818, %v1324
      %vm1837 = vcmp.eq.s32.totalorder %v1821, %v1324
      %v1838 = vsel %vm1822, 1, 0
      %v1839 = vsel %vm1823, 1, 0
      %v1840 = vsel %vm1824, 1, 0
      %v1841 = vsel %vm1825, 1, 0
      %v1842 = vsel %vm1826, 1, 0
      %v1843 = vsel %vm1827, 1, 0
      %v1844 = vsel %vm1828, 1, 0
      %v1845 = vsel %vm1829, 1, 0
      %v1846 = vsel %vm1830, 1, 0
      %v1847 = vsel %vm1831, 1, 0
      %v1848 = vsel %vm1832, 1, 0
      %v1849 = vsel %vm1833, 1, 0
      %v1850 = vsel %vm1834, 1, 0
      %v1851 = vsel %vm1835, 1, 0
      %v1852 = vsel %vm1836, 1, 0
      %v1853 = vsel %vm1837, 1, 0
      %v1854 = vcvt.s32.f32 %v1838
      %v1855 = vcvt.s32.f32 %v1839
      %v1856 = vcvt.s32.f32 %v1840
      %v1857 = vcvt.s32.f32 %v1841
      %v1858 = vcvt.s32.f32 %v1842
      %v1859 = vcvt.s32.f32 %v1843
      %v1860 = vcvt.s32.f32 %v1844
      %v1861 = vcvt.s32.f32 %v1845
      %v1862 = vcvt.s32.f32 %v1846
      %v1863 = vcvt.s32.f32 %v1847
      %v1864 = vcvt.s32.f32 %v1848
      %v1865 = vcvt.s32.f32 %v1849
      %v1866 = vcvt.s32.f32 %v1850
      %v1867 = vcvt.s32.f32 %v1851
      %v1868 = vcvt.s32.f32 %v1852
      %v1869 = vcvt.s32.f32 %v1853
      %v1870 = vpack.c.bf16 %v1855, %v1854
      %v1871 = vpack.c.bf16 %v1857, %v1856
      %v1872 = vpack.c.bf16 %v1859, %v1858
      %v1873 = vpack.c.bf16 %v1861, %v1860
      %v1874 = vpack.c.bf16 %v1863, %v1862
      %v1875 = vpack.c.bf16 %v1865, %v1864
      %v1876 = vpack.c.bf16 %v1867, %v1866
      %v1877 = vpack.c.bf16 %v1869, %v1868
      %v1878 = vpack.c.bf16 %v553, %v551
      %1880 = vrot.lane.b32.xlu0 %v1878, 96
      %v1881 = vpop.permute.xlu0 %1880
      %v1884 = vsel %vm529, %v1870, 0
      %v1887 = vsel %vm529, %v1871, 0
      %v1890 = vsel %vm529, %v1872, 0
      %v1893 = vsel %vm529, %v1873, 0
      %v1896 = vsel %vm529, %v1874, 0
      %v1899 = vsel %vm529, %v1875, 0
      %v1902 = vsel %vm529, %v1876, 0
      %v1905 = vsel %vm529, %v1877, 0
      %1907 = vmatpush.bf16.msra.mxu0 0
      %1908 = vmatpush.bf16.msra.mxu0 0
      %1909 = vmatpush.bf16.msra.mxu0 0
      %1910 = vmatpush.bf16.msra.mxu0 0
      %1911 = vmatpush.bf16.msra.mxu0 0
      %1912 = vmatpush.bf16.msra.mxu0 0
      %1913 = vmatpush.bf16.msra.mxu0 0
      %1914 = vmatpush.bf16.msra.mxu0 %v1881
      %1915 = vmatmul.bf16.gmra.mxu0 %v1884
      %v1916 = vpop.f32.mrf.mxu0
      %v1917 = vadd.f32 0.0, %v1916
      %v1918 = vpop.f32.mrf.mxu0
      %v1919 = vadd.f32 0.0, %v1918
      %1920 = vmatmul.bf16.gmra.mxu0 %v1887
      %v1921 = vpop.f32.mrf.mxu0
      %v1922 = vadd.f32 0.0, %v1921
      %v1923 = vpop.f32.mrf.mxu0
      %v1924 = vadd.f32 0.0, %v1923
      %1925 = vmatmul.bf16.gmra.mxu0 %v1890
      %v1926 = vpop.f32.mrf.mxu0
      %v1927 = vadd.f32 0.0, %v1926
      %v1928 = vpop.f32.mrf.mxu0
      %v1929 = vadd.f32 0.0, %v1928
      %1930 = vmatmul.bf16.gmra.mxu0 %v1893
      %v1931 = vpop.f32.mrf.mxu0
      %v1932 = vadd.f32 0.0, %v1931
      %v1933 = vpop.f32.mrf.mxu0
      %v1934 = vadd.f32 0.0, %v1933
      %1935 = vmatmul.bf16.gmra.mxu0 %v1896
      %v1936 = vpop.f32.mrf.mxu0
      %v1937 = vadd.f32 0.0, %v1936
      %v1938 = vpop.f32.mrf.mxu0
      %v1939 = vadd.f32 0.0, %v1938
      %1940 = vmatmul.bf16.gmra.mxu0 %v1899
      %v1941 = vpop.f32.mrf.mxu0
      %v1942 = vadd.f32 0.0, %v1941
      %v1943 = vpop.f32.mrf.mxu0
      %v1944 = vadd.f32 0.0, %v1943
      %1945 = vmatmul.bf16.gmra.mxu0 %v1902
      %v1946 = vpop.f32.mrf.mxu0
      %v1947 = vadd.f32 0.0, %v1946
      %v1948 = vpop.f32.mrf.mxu0
      %v1949 = vadd.f32 0.0, %v1948
      %1950 = vmatmul.bf16.gmra.mxu0 %v1905
      %v1951 = vpop.f32.mrf.mxu0
      %v1952 = vadd.f32 0.0, %v1951
      %v1953 = vpop.f32.mrf.mxu0
      %v1954 = vadd.f32 0.0, %v1953
      %1955 = vdwg.mxu0
      %v1956 = vmul.f32 %v1275, %v1917
      %v1957 = vmul.f32 %v1276, %v1919
      %v1958 = vmul.f32 %v1277, %v1922
      %v1959 = vmul.f32 %v1278, %v1924
      %v1960 = vmul.f32 %v1279, %v1927
      %v1961 = vmul.f32 %v1280, %v1929
      %v1962 = vmul.f32 %v1281, %v1932
      %v1963 = vmul.f32 %v1282, %v1934
      %v1964 = vmul.f32 %v1283, %v1937
      %v1965 = vmul.f32 %v1284, %v1939
      %v1966 = vmul.f32 %v1285, %v1942
      %v1967 = vmul.f32 %v1286, %v1944
      %v1968 = vmul.f32 %v1287, %v1947
      %v1969 = vmul.f32 %v1288, %v1949
      %v1970 = vmul.f32 %v1289, %v1952
      %v1971 = vmul.f32 %v1290, %v1954
      %v1972 = vsel %vm1523, %v1956, -inf
      %v1973 = vrot.slane %v1972, 4
      %v1974 = vmax.f32 %v1972, %v1973
      %v1975 = vrot.slane %v1974, 2
      %v1976 = vmax.f32 %v1974, %v1975
      %v1977 = vrot.slane %v1976, 1
      %v1978 = vmax.f32 %v1976, %v1977
      %v1979 = vsel %vm1523, %v1957, -inf
      %v1980 = vrot.slane %v1979, 4
      %v1981 = vmax.f32 %v1979, %v1980
      %v1982 = vrot.slane %v1981, 2
      %v1983 = vmax.f32 %v1981, %v1982
      %v1984 = vrot.slane %v1983, 1
      %v1985 = vmax.f32 %v1983, %v1984
      %v1986 = vsel %vm1523, %v1958, -inf
      %v1987 = vrot.slane %v1986, 4
      %v1988 = vmax.f32 %v1986, %v1987
      %v1989 = vrot.slane %v1988, 2
      %v1990 = vmax.f32 %v1988, %v1989
      %v1991 = vrot.slane %v1990, 1
      %v1992 = vmax.f32 %v1990, %v1991
      %v1993 = vsel %vm1523, %v1959, -inf
      %v1994 = vrot.slane %v1993, 4
      %v1995 = vmax.f32 %v1993, %v1994
      %v1996 = vrot.slane %v1995, 2
      %v1997 = vmax.f32 %v1995, %v1996
      %v1998 = vrot.slane %v1997, 1
      %v1999 = vmax.f32 %v1997, %v1998
      %v2000 = vsel %vm1523, %v1960, -inf
      %v2001 = vrot.slane %v2000, 4
      %v2002 = vmax.f32 %v2000, %v2001
      %v2003 = vrot.slane %v2002, 2
      %v2004 = vmax.f32 %v2002, %v2003
      %v2005 = vrot.slane %v2004, 1
      %v2006 = vmax.f32 %v2004, %v2005
      %v2007 = vsel %vm1523, %v1961, -inf
      %v2008 = vrot.slane %v2007, 4
      %v2009 = vmax.f32 %v2007, %v2008
      %v2010 = vrot.slane %v2009, 2
      %v2011 = vmax.f32 %v2009, %v2010
      %v2012 = vrot.slane %v2011, 1
      %v2013 = vmax.f32 %v2011, %v2012
      %v2014 = vsel %vm1523, %v1962, -inf
      %v2015 = vrot.slane %v2014, 4
      %v2016 = vmax.f32 %v2014, %v2015
      %v2017 = vrot.slane %v2016, 2
      %v2018 = vmax.f32 %v2016, %v2017
      %v2019 = vrot.slane %v2018, 1
      %v2020 = vmax.f32 %v2018, %v2019
      %v2021 = vsel %vm1523, %v1963, -inf
      %v2022 = vrot.slane %v2021, 4
      %v2023 = vmax.f32 %v2021, %v2022
      %v2024 = vrot.slane %v2023, 2
      %v2025 = vmax.f32 %v2023, %v2024
      %v2026 = vrot.slane %v2025, 1
      %v2027 = vmax.f32 %v2025, %v2026
      %v2028 = vsel %vm1523, %v1964, -inf
      %v2029 = vrot.slane %v2028, 4
      %v2030 = vmax.f32 %v2028, %v2029
      %v2031 = vrot.slane %v2030, 2
      %v2032 = vmax.f32 %v2030, %v2031
      %v2033 = vrot.slane %v2032, 1
      %v2034 = vmax.f32 %v2032, %v2033
      %v2035 = vsel %vm1523, %v1965, -inf
      %v2036 = vrot.slane %v2035, 4
      %v2037 = vmax.f32 %v2035, %v2036
      %v2038 = vrot.slane %v2037, 2
      %v2039 = vmax.f32 %v2037, %v2038
      %v2040 = vrot.slane %v2039, 1
      %v2041 = vmax.f32 %v2039, %v2040
      %v2042 = vsel %vm1523, %v1966, -inf
      %v2043 = vrot.slane %v2042, 4
      %v2044 = vmax.f32 %v2042, %v2043
      %v2045 = vrot.slane %v2044, 2
      %v2046 = vmax.f32 %v2044, %v2045
      %v2047 = vrot.slane %v2046, 1
      %v2048 = vmax.f32 %v2046, %v2047
      %v2049 = vsel %vm1523, %v1967, -inf
      %v2050 = vrot.slane %v2049, 4
      %v2051 = vmax.f32 %v2049, %v2050
      %v2052 = vrot.slane %v2051, 2
      %v2053 = vmax.f32 %v2051, %v2052
      %v2054 = vrot.slane %v2053, 1
      %v2055 = vmax.f32 %v2053, %v2054
      %v2056 = vsel %vm1523, %v1968, -inf
      %v2057 = vrot.slane %v2056, 4
      %v2058 = vmax.f32 %v2056, %v2057
      %v2059 = vrot.slane %v2058, 2
      %v2060 = vmax.f32 %v2058, %v2059
      %v2061 = vrot.slane %v2060, 1
      %v2062 = vmax.f32 %v2060, %v2061
      %v2063 = vsel %vm1523, %v1969, -inf
      %v2064 = vrot.slane %v2063, 4
      %v2065 = vmax.f32 %v2063, %v2064
      %v2066 = vrot.slane %v2065, 2
      %v2067 = vmax.f32 %v2065, %v2066
      %v2068 = vrot.slane %v2067, 1
      %v2069 = vmax.f32 %v2067, %v2068
      %v2070 = vsel %vm1523, %v1970, -inf
      %v2071 = vrot.slane %v2070, 4
      %v2072 = vmax.f32 %v2070, %v2071
      %v2073 = vrot.slane %v2072, 2
      %v2074 = vmax.f32 %v2072, %v2073
      %v2075 = vrot.slane %v2074, 1
      %v2076 = vmax.f32 %v2074, %v2075
      %v2077 = vsel %vm1523, %v1971, -inf
      %v2078 = vrot.slane %v2077, 4
      %v2079 = vmax.f32 %v2077, %v2078
      %v2080 = vrot.slane %v2079, 2
      %v2081 = vmax.f32 %v2079, %v2080
      %v2082 = vrot.slane %v2081, 1
      %v2083 = vmax.f32 %v2081, %v2082
      %2100 = vrot.lane.b32.xlu0 %v1978, 96
      %v2101 = vpop.permute.xlu0 %2100
      %2102 = vrot.lane.b32.xlu0 %v1985, 96
      %v2103 = vpop.permute.xlu0 %2102
      %2104 = vrot.lane.b32.xlu0 %v1992, 96
      %v2105 = vpop.permute.xlu0 %2104
      %2106 = vrot.lane.b32.xlu0 %v1999, 96
      %v2107 = vpop.permute.xlu0 %2106
      %2108 = vrot.lane.b32.xlu0 %v2006, 96
      %v2109 = vpop.permute.xlu0 %2108
      %2110 = vrot.lane.b32.xlu0 %v2013, 96
      %v2111 = vpop.permute.xlu0 %2110
      %2112 = vrot.lane.b32.xlu0 %v2020, 96
      %v2113 = vpop.permute.xlu0 %2112
      %2114 = vrot.lane.b32.xlu0 %v2027, 96
      %v2115 = vpop.permute.xlu0 %2114
      %2116 = vrot.lane.b32.xlu0 %v2034, 96
      %v2117 = vpop.permute.xlu0 %2116
      %2118 = vrot.lane.b32.xlu0 %v2041, 96
      %v2119 = vpop.permute.xlu0 %2118
      %2120 = vrot.lane.b32.xlu0 %v2048, 96
      %v2121 = vpop.permute.xlu0 %2120
      %2122 = vrot.lane.b32.xlu0 %v2055, 96
      %v2123 = vpop.permute.xlu0 %2122
      %2124 = vrot.lane.b32.xlu0 %v2062, 96
      %v2125 = vpop.permute.xlu0 %2124
      %2126 = vrot.lane.b32.xlu0 %v2069, 96
      %v2127 = vpop.permute.xlu0 %2126
      %2128 = vrot.lane.b32.xlu0 %v2076, 96
      %v2129 = vpop.permute.xlu0 %2128
      %2130 = vrot.lane.b32.xlu0 %v2083, 96
      %v2131 = vpop.permute.xlu0 %2130
      %v2148 = vadd.f32 %v1978, %v2101
      %v2149 = vadd.f32 %v1985, %v2103
      %v2150 = vadd.f32 %v1992, %v2105
      %v2151 = vadd.f32 %v1999, %v2107
      %v2152 = vadd.f32 %v2006, %v2109
      %v2153 = vadd.f32 %v2013, %v2111
      %v2154 = vadd.f32 %v2020, %v2113
      %v2155 = vadd.f32 %v2027, %v2115
      %v2156 = vadd.f32 %v2034, %v2117
      %v2157 = vadd.f32 %v2041, %v2119
      %v2158 = vadd.f32 %v2048, %v2121
      %v2159 = vadd.f32 %v2055, %v2123
      %v2160 = vadd.f32 %v2062, %v2125
      %v2161 = vadd.f32 %v2069, %v2127
      %v2162 = vadd.f32 %v2076, %v2129
      %v2163 = vadd.f32 %v2083, %v2131
      %v2180 = vrot.slane %v2149, 7
      %v2181 = vsel %vm1733, %v2180, %v2148
      %v2182 = vrot.slane %v2150, 6
      %v2183 = vsel %vm1736, %v2182, %v2181
      %v2184 = vrot.slane %v2151, 5
      %v2185 = vsel %vm1739, %v2184, %v2183
      %v2186 = vrot.slane %v2152, 4
      %v2187 = vsel %vm1742, %v2186, %v2185
      %v2188 = vrot.slane %v2153, 3
      %v2189 = vsel %vm1745, %v2188, %v2187
      %v2190 = vrot.slane %v2154, 2
      %v2191 = vsel %vm1748, %v2190, %v2189
      %v2192 = vrot.slane %v2155, 1
      %v2193 = vsel %vm1751, %v2192, %v2191
      %v2194 = vrot.slane %v2157, 7
      %v2195 = vsel %vm1733, %v2194, %v2156
      %v2196 = vrot.slane %v2158, 6
      %v2197 = vsel %vm1736, %v2196, %v2195
      %v2198 = vrot.slane %v2159, 5
      %v2199 = vsel %vm1739, %v2198, %v2197
      %v2200 = vrot.slane %v2160, 4
      %v2201 = vsel %vm1742, %v2200, %v2199
      %v2202 = vrot.slane %v2161, 3
      %v2203 = vsel %vm1745, %v2202, %v2201
      %v2204 = vrot.slane %v2162, 2
      %v2205 = vsel %vm1748, %v2204, %v2203
      %v2206 = vrot.slane %v2163, 1
      %v2207 = vsel %vm1751, %v2206, %v2205
      %v2210 = vadd.f32 %v551, %v2193
      %v2211 = vadd.f32 %v553, %v2207
      %2212 = vst.msk [vmem:[#allocation2 + $0x10] sm:$0xff] %vm1771, %v2210
      %2213 = vst.msk [vmem:[#allocation2 + $0x18] sm:$0xff] %vm1771, %v2211
      %v2214 = vld [vmem:[#allocation2] sm:$0xff]
      %v2215 = vld [vmem:[#allocation2 + $0x8] sm:$0xff]
      %v2216 = vld [vmem:[#allocation2 + $0x10] sm:$0xff]
      %v2217 = vld [vmem:[#allocation2 + $0x18] sm:$0xff]
      %v2218 = vpack.c.bf16 %v2215, %v2214
      %v2219 = vpack.c.bf16 %v2217, %v2216
      %v2220 = vld [vmem:[%s6] sm:$0xff]
      %v2221 = vld [vmem:[%s6 + $0x8] sm:$0xff]
      %v2222 = vld [vmem:[%s6 + $0x10] sm:$0xff]
      %v2223 = vld [vmem:[%s6 + $0x18] sm:$0xff]
      %v2224 = vpack.c.bf16 %v2221, %v2220
      %v2225 = vpack.c.bf16 %v2223, %v2222
      %v2226 = vld [vmem:[%s7] sm:$0x1]
      %v2228 = vperm.slane %v2226, 0
      %v2231 = vsel %vm1771, %v2218, 0
      %v2234 = vsel %vm1771, %v2219, 0
      %2236 = vmatpush.bf16.msra.mxu0 0
      %2237 = vmatpush.bf16.msra.mxu0 0
      %2238 = vmatpush.bf16.msra.mxu0 0
      %2239 = vmatpush.bf16.msra.mxu0 0
      %2240 = vmatpush.bf16.msra.mxu0 0
      %2241 = vmatpush.bf16.msra.mxu0 0
      %2242 = vmatpush.bf16.msra.mxu0 %v2225
      %2243 = vmatpush.bf16.msra.mxu0 %v2224
      %2244 = vmatmul.bf16.gmra.mxu0 %v2231
      %v2245 = vpop.f32.mrf.mxu0
      %v2246 = vadd.f32 %v2228, %v2245
      %v2247 = vpop.f32.mrf.mxu0
      %v2248 = vadd.f32 %v2228, %v2247
      %2249 = vmatmul.bf16.gmra.mxu0 %v2234
      %v2250 = vpop.f32.mrf.mxu0
      %v2251 = vadd.f32 %v2228, %v2250
      %v2252 = vpop.f32.mrf.mxu0
      %v2253 = vadd.f32 %v2228, %v2252
      %2254 = vdwg.mxu0
      %v2255 = vld [vmem:[%s8] sm:$0xff]
      %v2256 = vld [vmem:[%s8 + $0x8] sm:$0xff]
      %v2257 = vld [vmem:[%s8 + $0x10] sm:$0xff]
      %v2258 = vld [vmem:[%s8 + $0x18] sm:$0xff]
      %v2259 = vpack.c.bf16 %v2256, %v2255
      %v2260 = vpack.c.bf16 %v2258, %v2257
      %v2261 = vld [vmem:[%s9] sm:$0x1]
      %v2263 = vperm.slane %v2261, 0
      %2265 = vmatpush.bf16.msra.mxu0 0
      %2266 = vmatpush.bf16.msra.mxu0 0
      %2267 = vmatpush.bf16.msra.mxu0 0
      %2268 = vmatpush.bf16.msra.mxu0 0
      %2269 = vmatpush.bf16.msra.mxu0 0
      %2270 = vmatpush.bf16.msra.mxu0 0
      %2271 = vmatpush.bf16.msra.mxu0 %v2260
      %2272 = vmatpush.bf16.msra.mxu0 %v2259
      %2273 = vmatmul.bf16.gmra.mxu0 %v2231
      %v2274 = vpop.f32.mrf.mxu0
      %v2275 = vadd.f32 %v2263, %v2274
      %v2276 = vpop.f32.mrf.mxu0
      %v2277 = vadd.f32 %v2263, %v2276
      %2278 = vmatmul.bf16.gmra.mxu0 %v2234
      %v2279 = vpop.f32.mrf.mxu0
      %v2280 = vadd.f32 %v2263, %v2279
      %v2281 = vpop.f32.mrf.mxu0
      %v2282 = vadd.f32 %v2263, %v2281
      %2283 = vdwg.mxu0
      %v2284 = vld [vmem:[%s10] sm:$0xff]
      %v2285 = vld [vmem:[%s10 + $0x8] sm:$0xff]
      %v2286 = vld [vmem:[%s10 + $0x10] sm:$0xff]
      %v2287 = vld [vmem:[%s10 + $0x18] sm:$0xff]
      %v2288 = vpack.c.bf16 %v2285, %v2284
      %v2289 = vpack.c.bf16 %v2287, %v2286
      %v2290 = vld [vmem:[%s11] sm:$0x1]
      %v2292 = vperm.slane %v2290, 0
      %2294 = vmatpush.bf16.msra.mxu0 0
      %2295 = vmatpush.bf16.msra.mxu0 0
      %2296 = vmatpush.bf16.msra.mxu0 0
      %2297 = vmatpush.bf16.msra.mxu0 0
      %2298 = vmatpush.bf16.msra.mxu0 0
      %2299 = vmatpush.bf16.msra.mxu0 0
      %2300 = vmatpush.bf16.msra.mxu0 %v2289
      %2301 = vmatpush.bf16.msra.mxu0 %v2288
      %2302 = vmatmul.bf16.gmra.mxu0 %v2231
      %v2303 = vpop.f32.mrf.mxu0
      %v2304 = vadd.f32 %v2292, %v2303
      %v2305 = vpop.f32.mrf.mxu0
      %v2306 = vadd.f32 %v2292, %v2305
      %2307 = vmatmul.bf16.gmra.mxu0 %v2234
      %v2308 = vpop.f32.mrf.mxu0
      %v2309 = vadd.f32 %v2292, %v2308
      %v2310 = vpop.f32.mrf.mxu0
      %v2311 = vadd.f32 %v2292, %v2310
      %2312 = vdwg.mxu0
      %v2313 = vpack.c.bf16 %v2248, %v2246
      %v2314 = vpack.c.bf16 %v2277, %v2275
      %v2315 = vpack.c.bf16 %v2306, %v2304
      %v2317 = vsel %vm619, %v2313, 0
      %v2320 = vsel %vm619, %v2314, 0
      %2322 = vmatpush.bf16.xpose.msra.mxu0 0
      %2323 = vmatpush.bf16.xpose.msra.mxu0 0
      %2324 = vmatpush.bf16.xpose.msra.mxu0 0
      %2325 = vmatpush.bf16.xpose.msra.mxu0 0
      %2326 = vmatpush.bf16.xpose.msra.mxu0 0
      %2327 = vmatpush.bf16.xpose.msra.mxu0 0
      %2328 = vmatpush.bf16.xpose.msra.mxu0 0
      %2329 = vmatpush.bf16.xpose.msra.mxu0 %v2320
      %2330 = vmatmul.bf16.gmra.mxu0 %v2317
      %v2331 = vpop.f32.mrf.mxu0
      %v2332 = vadd.f32 0.0, %v2331
      %v2333 = vpop.f32.mrf.mxu0
      %v2334 = vadd.f32 0.0, %v2333
      %2335 = vdwg.mxu0
      %v2336 = vmul.f32 %v2332, 0.35355338
      %v2337 = vmul.f32 %v2334, 0.35355338
      %v2338 = vsel %vm529, %v2336, -inf
      %2339 = vmax.xlane.f32.xlu0 %v2338
      %v2340 = vpop.xlane.xlu0 %2339
      %v2341 = vsel %vm529, %v2337, -inf
      %2342 = vmax.xlane.f32.xlu0 %v2341
      %v2343 = vpop.xlane.xlu0 %2342
      %v2344 = vsub.f32 %v2336, %v2340
      %v2345 = vsub.f32 %v2337, %v2343
      %v2346 = vmul.f32 %v2344, 1.442695
      %v2347 = vpow.pop %v2346
      %v2348 = vmul.f32 %v2345, 1.442695
      %v2349 = vpow.pop %v2348
      %v2350 = vsel %vm529, %v2347, 0.0
      %2351 = vadd.xlane.f32.xlu0 %v2350
      %v2352 = vpop.xlane.xlu0 %2351
      %v2353 = vsel %vm529, %v2349, 0.0
      %2354 = vadd.xlane.f32.xlu0 %v2353
      %v2355 = vpop.xlane.xlu0 %2354
      %v2356 = vrcp.pop %v2352
      %v2357 = vmul.f32 %v2352, %v2356
      %v2358 = vsub.f32 1.0, %v2357
      %v2359 = vmul.f32 %v2356, %v2358
      %v2360 = vadd.f32 %v2356, %v2359
      %vm2361 = vweird.f32 %v2352
      %vm2362 = vweird.f32 %v2356
      %vm2363 = vmor %vm2361, %vm2362
      %v2364 = vsel %vm2363, %v2356, %v2360
      %v2365 = vand.u32 2147483647, %v2352
      %vm2366 = vcmp.eq.f32.partialorder %v2365, 8.507059e+37
      %v2367 = vand.u32 %v2352, 2147483648
      %v2368 = vor.u32 1.1754944e-38, %v2367
      %v2369 = vsel %vm2366, %v2368, %v2364
      %v2370 = vmul.f32 %v2347, %v2369
      %v2371 = vrcp.pop %v2355
      %v2372 = vmul.f32 %v2355, %v2371
      %v2373 = vsub.f32 1.0, %v2372
      %v2374 = vmul.f32 %v2371, %v2373
      %v2375 = vadd.f32 %v2371, %v2374
      %vm2376 = vweird.f32 %v2355
      %vm2377 = vweird.f32 %v2371
      %vm2378 = vmor %vm2376, %vm2377
      %v2379 = vsel %vm2378, %v2371, %v2375
      %v2380 = vand.u32 2147483647, %v2355
      %vm2381 = vcmp.eq.f32.partialorder %v2380, 8.507059e+37
      %v2382 = vand.u32 %v2355, 2147483648
      %v2383 = vor.u32 1.1754944e-38, %v2382
      %v2384 = vsel %vm2381, %v2383, %v2379
      %v2385 = vmul.f32 %v2349, %v2384
      %v2386 = vpack.c.bf16 %v2385, %v2370
      %v2388 = vsel %vm529, %v2386, 0
      %2390 = vmatpush.bf16.msra.mxu0 0
      %2391 = vmatpush.bf16.msra.mxu0 0
      %2392 = vmatpush.bf16.msra.mxu0 0
      %2393 = vmatpush.bf16.msra.mxu0 0
      %2394 = vmatpush.bf16.msra.mxu0 0
      %2395 = vmatpush.bf16.msra.mxu0 0
      %2396 = vmatpush.bf16.msra.mxu0 0
      %2397 = vmatpush.bf16.msra.mxu0 %v2315
      %2398 = vmatmul.bf16.gmra.mxu0 %v2388
      %v2399 = vpop.f32.mrf.mxu0
      %v2400 = vadd.f32 0.0, %v2399
      %v2401 = vpop.f32.mrf.mxu0
      %v2402 = vadd.f32 0.0, %v2401
      %2403 = vdwg.mxu0
      %2404 = vst.msk [vmem:[#allocation3] sm:$0xff] %vm619, %v2400
      %2405 = vst.msk [vmem:[#allocation3 + $0x8] sm:$0xff] %vm619, %v2402
      %2407 = vrot.lane.b32.xlu0 %v2313, 120
      %v2408 = vpop.permute.xlu0 %2407
      %2410 = vrot.lane.b32.xlu0 %v2314, 120
      %v2411 = vpop.permute.xlu0 %2410
      %v2413 = vsel %vm619, %v2408, 0
      %v2416 = vsel %vm619, %v2411, 0
      %2418 = vmatpush.bf16.xpose.msra.mxu0 0
      %2419 = vmatpush.bf16.xpose.msra.mxu0 0
      %2420 = vmatpush.bf16.xpose.msra.mxu0 0
      %2421 = vmatpush.bf16.xpose.msra.mxu0 0
      %2422 = vmatpush.bf16.xpose.msra.mxu0 0
      %2423 = vmatpush.bf16.xpose.msra.mxu0 0
      %2424 = vmatpush.bf16.xpose.msra.mxu0 0
      %2425 = vmatpush.bf16.xpose.msra.mxu0 %v2416
      %2426 = vmatmul.bf16.gmra.mxu0 %v2413
      %v2427 = vpop.f32.mrf.mxu0
      %v2428 = vadd.f32 0.0, %v2427
      %v2429 = vpop.f32.mrf.mxu0
      %v2430 = vadd.f32 0.0, %v2429
      %2431 = vdwg.mxu0
      %v2432 = vmul.f32 %v2428, 0.35355338
      %v2433 = vmul.f32 %v2430, 0.35355338
      %v2434 = vsel %vm529, %v2432, -inf
      %2435 = vmax.xlane.f32.xlu0 %v2434
      %v2436 = vpop.xlane.xlu0 %2435
      %v2437 = vsel %vm529, %v2433, -inf
      %2438 = vmax.xlane.f32.xlu0 %v2437
      %v2439 = vpop.xlane.xlu0 %2438
      %v2440 = vsub.f32 %v2432, %v2436
      %v2441 = vsub.f32 %v2433, %v2439
      %v2442 = vmul.f32 %v2440, 1.442695
      %v2443 = vpow.pop %v2442
      %v2444 = vmul.f32 %v2441, 1.442695
      %v2445 = vpow.pop %v2444
      %v2446 = vsel %vm529, %v2443, 0.0
      %2447 = vadd.xlane.f32.xlu0 %v2446
      %v2448 = vpop.xlane.xlu0 %2447
      %v2449 = vsel %vm529, %v2445, 0.0
      %2450 = vadd.xlane.f32.xlu0 %v2449
      %v2451 = vpop.xlane.xlu0 %2450
      %v2452 = vrcp.pop %v2448
      %v2453 = vmul.f32 %v2448, %v2452
      %v2454 = vsub.f32 1.0, %v2453
      %v2455 = vmul.f32 %v2452, %v2454
      %v2456 = vadd.f32 %v2452, %v2455
      %vm2457 = vweird.f32 %v2448
      %vm2458 = vweird.f32 %v2452
      %vm2459 = vmor %vm2457, %vm2458
      %v2460 = vsel %vm2459, %v2452, %v2456
      %v2461 = vand.u32 2147483647, %v2448
      %vm2462 = vcmp.eq.f32.partialorder %v2461, 8.507059e+37
      %v2463 = vand.u32 %v2448, 2147483648
      %v2464 = vor.u32 1.1754944e-38, %v2463
      %v2465 = vsel %vm2462, %v2464, %v2460
      %v2466 = vmul.f32 %v2443, %v2465
      %v2467 = vrcp.pop %v2451
      %v2468 = vmul.f32 %v2451, %v2467
      %v2469 = vsub.f32 1.0, %v2468
      %v2470 = vmul.f32 %v2467, %v2469
      %v2471 = vadd.f32 %v2467, %v2470
      %vm2472 = vweird.f32 %v2451
      %vm2473 = vweird.f32 %v2467
      %vm2474 = vmor %vm2472, %vm2473
      %v2475 = vsel %vm2474, %v2467, %v2471
      %v2476 = vand.u32 2147483647, %v2451
      %vm2477 = vcmp.eq.f32.partialorder %v2476, 8.507059e+37
      %v2478 = vand.u32 %v2451, 2147483648
      %v2479 = vor.u32 1.1754944e-38, %v2478
      %v2480 = vsel %vm2477, %v2479, %v2475
      %v2481 = vmul.f32 %v2445, %v2480
      %v2482 = vpack.c.bf16 %v2481, %v2466
      %2484 = vrot.lane.b32.xlu0 %v2315, 120
      %v2485 = vpop.permute.xlu0 %2484
      %v2488 = vsel %vm529, %v2482, 0
      %2490 = vmatpush.bf16.msra.mxu0 0
      %2491 = vmatpush.bf16.msra.mxu0 0
      %2492 = vmatpush.bf16.msra.mxu0 0
      %2493 = vmatpush.bf16.msra.mxu0 0
      %2494 = vmatpush.bf16.msra.mxu0 0
      %2495 = vmatpush.bf16.msra.mxu0 0
      %2496 = vmatpush.bf16.msra.mxu0 0
      %2497 = vmatpush.bf16.msra.mxu0 %v2485
      %2498 = vmatmul.bf16.gmra.mxu0 %v2488
      %v2499 = vpop.f32.mrf.mxu0
      %v2500 = vadd.f32 0.0, %v2499
      %v2501 = vpop.f32.mrf.mxu0
      %v2502 = vadd.f32 0.0, %v2501
      %2503 = vdwg.mxu0
      %2506 = vrot.lane.b32.xlu0 %v2500, 8
      %v2507 = vpop.permute.xlu0 %2506
      %2508 = vrot.lane.b32.xlu0 %v2502, 8
      %v2509 = vpop.permute.xlu0 %2508
      %vm2512 = vcmask 130112
      %2513 = vst.msk [vmem:[#allocation3] sm:$0xff] %vm2512, %v2507
      %2514 = vst.msk [vmem:[#allocation3 + $0x8] sm:$0xff] %vm2512, %v2509
      %2515 = vrot.lane.b32.xlu0 %v2313, 112
      %v2516 = vpop.permute.xlu0 %2515
      %2517 = vrot.lane.b32.xlu0 %v2314, 112
      %v2518 = vpop.permute.xlu0 %2517
      %v2520 = vsel %vm619, %v2516, 0
      %v2523 = vsel %vm619, %v2518, 0
      %2525 = vmatpush.bf16.xpose.msra.mxu0 0
      %2526 = vmatpush.bf16.xpose.msra.mxu0 0
      %2527 = vmatpush.bf16.xpose.msra.mxu0 0
      %2528 = vmatpush.bf16.xpose.msra.mxu0 0
      %2529 = vmatpush.bf16.xpose.msra.mxu0 0
      %2530 = vmatpush.bf16.xpose.msra.mxu0 0
      %2531 = vmatpush.bf16.xpose.msra.mxu0 0
      %2532 = vmatpush.bf16.xpose.msra.mxu0 %v2523
      %2533 = vmatmul.bf16.gmra.mxu0 %v2520
      %v2534 = vpop.f32.mrf.mxu0
      %v2535 = vadd.f32 0.0, %v2534
      %v2536 = vpop.f32.mrf.mxu0
      %v2537 = vadd.f32 0.0, %v2536
      %2538 = vdwg.mxu0
      %v2539 = vmul.f32 %v2535, 0.35355338
      %v2540 = vmul.f32 %v2537, 0.35355338
      %v2541 = vsel %vm529, %v2539, -inf
      %2542 = vmax.xlane.f32.xlu0 %v2541
      %v2543 = vpop.xlane.xlu0 %2542
      %v2544 = vsel %vm529, %v2540, -inf
      %2545 = vmax.xlane.f32.xlu0 %v2544
      %v2546 = vpop.xlane.xlu0 %2545
      %v2547 = vsub.f32 %v2539, %v2543
      %v2548 = vsub.f32 %v2540, %v2546
      %v2549 = vmul.f32 %v2547, 1.442695
      %v2550 = vpow.pop %v2549
      %v2551 = vmul.f32 %v2548, 1.442695
      %v2552 = vpow.pop %v2551
      %v2553 = vsel %vm529, %v2550, 0.0
      %2554 = vadd.xlane.f32.xlu0 %v2553
      %v2555 = vpop.xlane.xlu0 %2554
      %v2556 = vsel %vm529, %v2552, 0.0
      %2557 = vadd.xlane.f32.xlu0 %v2556
      %v2558 = vpop.xlane.xlu0 %2557
      %v2559 = vrcp.pop %v2555
      %v2560 = vmul.f32 %v2555, %v2559
      %v2561 = vsub.f32 1.0, %v2560
      %v2562 = vmul.f32 %v2559, %v2561
      %v2563 = vadd.f32 %v2559, %v2562
      %vm2564 = vweird.f32 %v2555
      %vm2565 = vweird.f32 %v2559
      %vm2566 = vmor %vm2564, %vm2565
      %v2567 = vsel %vm2566, %v2559, %v2563
      %v2568 = vand.u32 2147483647, %v2555
      %vm2569 = vcmp.eq.f32.partialorder %v2568, 8.507059e+37
      %v2570 = vand.u32 %v2555, 2147483648
      %v2571 = vor.u32 1.1754944e-38, %v2570
      %v2572 = vsel %vm2569, %v2571, %v2567
      %v2573 = vmul.f32 %v2550, %v2572
      %v2574 = vrcp.pop %v2558
      %v2575 = vmul.f32 %v2558, %v2574
      %v2576 = vsub.f32 1.0, %v2575
      %v2577 = vmul.f32 %v2574, %v2576
      %v2578 = vadd.f32 %v2574, %v2577
      %vm2579 = vweird.f32 %v2558
      %vm2580 = vweird.f32 %v2574
      %vm2581 = vmor %vm2579, %vm2580
      %v2582 = vsel %vm2581, %v2574, %v2578
      %v2583 = vand.u32 2147483647, %v2558
      %vm2584 = vcmp.eq.f32.partialorder %v2583, 8.507059e+37
      %v2585 = vand.u32 %v2558, 2147483648
      %v2586 = vor.u32 1.1754944e-38, %v2585
      %v2587 = vsel %vm2584, %v2586, %v2582
      %v2588 = vmul.f32 %v2552, %v2587
      %v2589 = vpack.c.bf16 %v2588, %v2573
      %2590 = vrot.lane.b32.xlu0 %v2315, 112
      %v2591 = vpop.permute.xlu0 %2590
      %v2594 = vsel %vm529, %v2589, 0
      %2596 = vmatpush.bf16.msra.mxu0 0
      %2597 = vmatpush.bf16.msra.mxu0 0
      %2598 = vmatpush.bf16.msra.mxu0 0
      %2599 = vmatpush.bf16.msra.mxu0 0
      %2600 = vmatpush.bf16.msra.mxu0 0
      %2601 = vmatpush.bf16.msra.mxu0 0
      %2602 = vmatpush.bf16.msra.mxu0 0
      %2603 = vmatpush.bf16.msra.mxu0 %v2591
      %2604 = vmatmul.bf16.gmra.mxu0 %v2594
      %v2605 = vpop.f32.mrf.mxu0
      %v2606 = vadd.f32 0.0, %v2605
      %v2607 = vpop.f32.mrf.mxu0
      %v2608 = vadd.f32 0.0, %v2607
      %2609 = vdwg.mxu0
      %2612 = vrot.lane.b32.xlu0 %v2606, 16
      %v2613 = vpop.permute.xlu0 %2612
      %2614 = vrot.lane.b32.xlu0 %v2608, 16
      %v2615 = vpop.permute.xlu0 %2614
      %vm2618 = vcmask 195712
      %2619 = vst.msk [vmem:[#allocation3] sm:$0xff] %vm2618, %v2613
      %2620 = vst.msk [vmem:[#allocation3 + $0x8] sm:$0xff] %vm2618, %v2615
      %2621 = vrot.lane.b32.xlu0 %v2313, 104
      %v2622 = vpop.permute.xlu0 %2621
      %2623 = vrot.lane.b32.xlu0 %v2314, 104
      %v2624 = vpop.permute.xlu0 %2623
      %v2626 = vsel %vm619, %v2622, 0
      %v2629 = vsel %vm619, %v2624, 0
      %2631 = vmatpush.bf16.xpose.msra.mxu0 0
      %2632 = vmatpush.bf16.xpose.msra.mxu0 0
      %2633 = vmatpush.bf16.xpose.msra.mxu0 0
      %2634 = vmatpush.bf16.xpose.msra.mxu0 0
      %2635 = vmatpush.bf16.xpose.msra.mxu0 0
      %2636 = vmatpush.bf16.xpose.msra.mxu0 0
      %2637 = vmatpush.bf16.xpose.msra.mxu0 0
      %2638 = vmatpush.bf16.xpose.msra.mxu0 %v2629
      %2639 = vmatmul.bf16.gmra.mxu0 %v2626
      %v2640 = vpop.f32.mrf.mxu0
      %v2641 = vadd.f32 0.0, %v2640
      %v2642 = vpop.f32.mrf.mxu0
      %v2643 = vadd.f32 0.0, %v2642
      %2644 = vdwg.mxu0
      %v2645 = vmul.f32 %v2641, 0.35355338
      %v2646 = vmul.f32 %v2643, 0.35355338
      %v2647 = vsel %vm529, %v2645, -inf
      %2648 = vmax.xlane.f32.xlu0 %v2647
      %v2649 = vpop.xlane.xlu0 %2648
      %v2650 = vsel %vm529, %v2646, -inf
      %2651 = vmax.xlane.f32.xlu0 %v2650
      %v2652 = vpop.xlane.xlu0 %2651
      %v2653 = vsub.f32 %v2645, %v2649
      %v2654 = vsub.f32 %v2646, %v2652
      %v2655 = vmul.f32 %v2653, 1.442695
      %v2656 = vpow.pop %v2655
      %v2657 = vmul.f32 %v2654, 1.442695
      %v2658 = vpow.pop %v2657
      %v2659 = vsel %vm529, %v2656, 0.0
      %2660 = vadd.xlane.f32.xlu0 %v2659
      %v2661 = vpop.xlane.xlu0 %2660
      %v2662 = vsel %vm529, %v2658, 0.0
      %2663 = vadd.xlane.f32.xlu0 %v2662
      %v2664 = vpop.xlane.xlu0 %2663
      %v2665 = vrcp.pop %v2661
      %v2666 = vmul.f32 %v2661, %v2665
      %v2667 = vsub.f32 1.0, %v2666
      %v2668 = vmul.f32 %v2665, %v2667
      %v2669 = vadd.f32 %v2665, %v2668
      %vm2670 = vweird.f32 %v2661
      %vm2671 = vweird.f32 %v2665
      %vm2672 = vmor %vm2670, %vm2671
      %v2673 = vsel %vm2672, %v2665, %v2669
      %v2674 = vand.u32 2147483647, %v2661
      %vm2675 = vcmp.eq.f32.partialorder %v2674, 8.507059e+37
      %v2676 = vand.u32 %v2661, 2147483648
      %v2677 = vor.u32 1.1754944e-38, %v2676
      %v2678 = vsel %vm2675, %v2677, %v2673
      %v2679 = vmul.f32 %v2656, %v2678
      %v2680 = vrcp.pop %v2664
      %v2681 = vmul.f32 %v2664, %v2680
      %v2682 = vsub.f32 1.0, %v2681
      %v2683 = vmul.f32 %v2680, %v2682
      %v2684 = vadd.f32 %v2680, %v2683
      %vm2685 = vweird.f32 %v2664
      %vm2686 = vweird.f32 %v2680
      %vm2687 = vmor %vm2685, %vm2686
      %v2688 = vsel %vm2687, %v2680, %v2684
      %v2689 = vand.u32 2147483647, %v2664
      %vm2690 = vcmp.eq.f32.partialorder %v2689, 8.507059e+37
      %v2691 = vand.u32 %v2664, 2147483648
      %v2692 = vor.u32 1.1754944e-38, %v2691
      %v2693 = vsel %vm2690, %v2692, %v2688
      %v2694 = vmul.f32 %v2658, %v2693
      %v2695 = vpack.c.bf16 %v2694, %v2679
      %2696 = vrot.lane.b32.xlu0 %v2315, 104
      %v2697 = vpop.permute.xlu0 %2696
      %v2700 = vsel %vm529, %v2695, 0
      %2702 = vmatpush.bf16.msra.mxu0 0
      %2703 = vmatpush.bf16.msra.mxu0 0
      %2704 = vmatpush.bf16.msra.mxu0 0
      %2705 = vmatpush.bf16.msra.mxu0 0
      %2706 = vmatpush.bf16.msra.mxu0 0
      %2707 = vmatpush.bf16.msra.mxu0 0
      %2708 = vmatpush.bf16.msra.mxu0 0
      %2709 = vmatpush.bf16.msra.mxu0 %v2697
      %2710 = vmatmul.bf16.gmra.mxu0 %v2700
      %v2711 = vpop.f32.mrf.mxu0
      %v2712 = vadd.f32 0.0, %v2711
      %v2713 = vpop.f32.mrf.mxu0
      %v2714 = vadd.f32 0.0, %v2713
      %2715 = vdwg.mxu0
      %2718 = vrot.lane.b32.xlu0 %v2712, 24
      %v2719 = vpop.permute.xlu0 %2718
      %2720 = vrot.lane.b32.xlu0 %v2714, 24
      %v2721 = vpop.permute.xlu0 %2720
      %vm2724 = vcmask 261312
      %2725 = vst.msk [vmem:[#allocation3] sm:$0xff] %vm2724, %v2719
      %2726 = vst.msk [vmem:[#allocation3 + $0x8] sm:$0xff] %vm2724, %v2721
      %v2727 = vpack.c.bf16 %v2253, %v2251
      %v2728 = vpack.c.bf16 %v2282, %v2280
      %v2729 = vpack.c.bf16 %v2311, %v2309
      %v2731 = vsel %vm619, %v2727, 0
      %v2734 = vsel %vm619, %v2728, 0
      %2736 = vmatpush.bf16.xpose.msra.mxu0 0
      %2737 = vmatpush.bf16.xpose.msra.mxu0 0
      %2738 = vmatpush.bf16.xpose.msra.mxu0 0
      %2739 = vmatpush.bf16.xpose.msra.mxu0 0
      %2740 = vmatpush.bf16.xpose.msra.mxu0 0
      %2741 = vmatpush.bf16.xpose.msra.mxu0 0
      %2742 = vmatpush.bf16.xpose.msra.mxu0 0
      %2743 = vmatpush.bf16.xpose.msra.mxu0 %v2734
      %2744 = vmatmul.bf16.gmra.mxu0 %v2731
      %v2745 = vpop.f32.mrf.mxu0
      %v2746 = vadd.f32 0.0, %v2745
      %v2747 = vpop.f32.mrf.mxu0
      %v2748 = vadd.f32 0.0, %v2747
      %2749 = vdwg.mxu0
      %v2750 = vmul.f32 %v2746, 0.35355338
      %v2751 = vmul.f32 %v2748, 0.35355338
      %v2752 = vsel %vm529, %v2750, -inf
      %2753 = vmax.xlane.f32.xlu0 %v2752
      %v2754 = vpop.xlane.xlu0 %2753
      %v2755 = vsel %vm529, %v2751, -inf
      %2756 = vmax.xlane.f32.xlu0 %v2755
      %v2757 = vpop.xlane.xlu0 %2756
      %v2758 = vsub.f32 %v2750, %v2754
      %v2759 = vsub.f32 %v2751, %v2757
      %v2760 = vmul.f32 %v2758, 1.442695
      %v2761 = vpow.pop %v2760
      %v2762 = vmul.f32 %v2759, 1.442695
      %v2763 = vpow.pop %v2762
      %v2764 = vsel %vm529, %v2761, 0.0
      %2765 = vadd.xlane.f32.xlu0 %v2764
      %v2766 = vpop.xlane.xlu0 %2765
      %v2767 = vsel %vm529, %v2763, 0.0
      %2768 = vadd.xlane.f32.xlu0 %v2767
      %v2769 = vpop.xlane.xlu0 %2768
      %v2770 = vrcp.pop %v2766
      %v2771 = vmul.f32 %v2766, %v2770
      %v2772 = vsub.f32 1.0, %v2771
      %v2773 = vmul.f32 %v2770, %v2772
      %v2774 = vadd.f32 %v2770, %v2773
      %vm2775 = vweird.f32 %v2766
      %vm2776 = vweird.f32 %v2770
      %vm2777 = vmor %vm2775, %vm2776
      %v2778 = vsel %vm2777, %v2770, %v2774
      %v2779 = vand.u32 2147483647, %v2766
      %vm2780 = vcmp.eq.f32.partialorder %v2779, 8.507059e+37
      %v2781 = vand.u32 %v2766, 2147483648
      %v2782 = vor.u32 1.1754944e-38, %v2781
      %v2783 = vsel %vm2780, %v2782, %v2778
      %v2784 = vmul.f32 %v2761, %v2783
      %v2785 = vrcp.pop %v2769
      %v2786 = vmul.f32 %v2769, %v2785
      %v2787 = vsub.f32 1.0, %v2786
      %v2788 = vmul.f32 %v2785, %v2787
      %v2789 = vadd.f32 %v2785, %v2788
      %vm2790 = vweird.f32 %v2769
      %vm2791 = vweird.f32 %v2785
      %vm2792 = vmor %vm2790, %vm2791
      %v2793 = vsel %vm2792, %v2785, %v2789
      %v2794 = vand.u32 2147483647, %v2769
      %vm2795 = vcmp.eq.f32.partialorder %v2794, 8.507059e+37
      %v2796 = vand.u32 %v2769, 2147483648
      %v2797 = vor.u32 1.1754944e-38, %v2796
      %v2798 = vsel %vm2795, %v2797, %v2793
      %v2799 = vmul.f32 %v2763, %v2798
      %v2800 = vpack.c.bf16 %v2799, %v2784
      %v2802 = vsel %vm529, %v2800, 0
      %2804 = vmatpush.bf16.msra.mxu0 0
      %2805 = vmatpush.bf16.msra.mxu0 0
      %2806 = vmatpush.bf16.msra.mxu0 0
      %2807 = vmatpush.bf16.msra.mxu0 0
      %2808 = vmatpush.bf16.msra.mxu0 0
      %2809 = vmatpush.bf16.msra.mxu0 0
      %2810 = vmatpush.bf16.msra.mxu0 0
      %2811 = vmatpush.bf16.msra.mxu0 %v2729
      %2812 = vmatmul.bf16.gmra.mxu0 %v2802
      %v2813 = vpop.f32.mrf.mxu0
      %v2814 = vadd.f32 0.0, %v2813
      %v2815 = vpop.f32.mrf.mxu0
      %v2816 = vadd.f32 0.0, %v2815
      %2817 = vdwg.mxu0
      %2818 = vst.msk [vmem:[#allocation3 + $0x10] sm:$0xff] %vm619, %v2814
      %2819 = vst.msk [vmem:[#allocation3 + $0x18] sm:$0xff] %vm619, %v2816
      %2821 = vrot.lane.b32.xlu0 %v2727, 120
      %v2822 = vpop.permute.xlu0 %2821
      %2824 = vrot.lane.b32.xlu0 %v2728, 120
      %v2825 = vpop.permute.xlu0 %2824
      %v2827 = vsel %vm619, %v2822, 0
      %v2830 = vsel %vm619, %v2825, 0
      %2832 = vmatpush.bf16.xpose.msra.mxu0 0
      %2833 = vmatpush.bf16.xpose.msra.mxu0 0
      %2834 = vmatpush.bf16.xpose.msra.mxu0 0
      %2835 = vmatpush.bf16.xpose.msra.mxu0 0
      %2836 = vmatpush.bf16.xpose.msra.mxu0 0
      %2837 = vmatpush.bf16.xpose.msra.mxu0 0
      %2838 = vmatpush.bf16.xpose.msra.mxu0 0
      %2839 = vmatpush.bf16.xpose.msra.mxu0 %v2830
      %2840 = vmatmul.bf16.gmra.mxu0 %v2827
      %v2841 = vpop.f32.mrf.mxu0
      %v2842 = vadd.f32 0.0, %v2841
      %v2843 = vpop.f32.mrf.mxu0
      %v2844 = vadd.f32 0.0, %v2843
      %2845 = vdwg.mxu0
      %v2846 = vmul.f32 %v2842, 0.35355338
      %v2847 = vmul.f32 %v2844, 0.35355338
      %v2848 = vsel %vm529, %v2846, -inf
      %2849 = vmax.xlane.f32.xlu0 %v2848
      %v2850 = vpop.xlane.xlu0 %2849
      %v2851 = vsel %vm529, %v2847, -inf
      %2852 = vmax.xlane.f32.xlu0 %v2851
      %v2853 = vpop.xlane.xlu0 %2852
      %v2854 = vsub.f32 %v2846, %v2850
      %v2855 = vsub.f32 %v2847, %v2853
      %v2856 = vmul.f32 %v2854, 1.442695
      %v2857 = vpow.pop %v2856
      %v2858 = vmul.f32 %v2855, 1.442695
      %v2859 = vpow.pop %v2858
      %v2860 = vsel %vm529, %v2857, 0.0
      %2861 = vadd.xlane.f32.xlu0 %v2860
      %v2862 = vpop.xlane.xlu0 %2861
      %v2863 = vsel %vm529, %v2859, 0.0
      %2864 = vadd.xlane.f32.xlu0 %v2863
      %v2865 = vpop.xlane.xlu0 %2864
      %v2866 = vrcp.pop %v2862
      %v2867 = vmul.f32 %v2862, %v2866
      %v2868 = vsub.f32 1.0, %v2867
      %v2869 = vmul.f32 %v2866, %v2868
      %v2870 = vadd.f32 %v2866, %v2869
      %vm2871 = vweird.f32 %v2862
      %vm2872 = vweird.f32 %v2866
      %vm2873 = vmor %vm2871, %vm2872
      %v2874 = vsel %vm2873, %v2866, %v2870
      %v2875 = vand.u32 2147483647, %v2862
      %vm2876 = vcmp.eq.f32.partialorder %v2875, 8.507059e+37
      %v2877 = vand.u32 %v2862, 2147483648
      %v2878 = vor.u32 1.1754944e-38, %v2877
      %v2879 = vsel %vm2876, %v2878, %v2874
      %v2880 = vmul.f32 %v2857, %v2879
      %v2881 = vrcp.pop %v2865
      %v2882 = vmul.f32 %v2865, %v2881
      %v2883 = vsub.f32 1.0, %v2882
      %v2884 = vmul.f32 %v2881, %v2883
      %v2885 = vadd.f32 %v2881, %v2884
      %vm2886 = vweird.f32 %v2865
      %vm2887 = vweird.f32 %v2881
      %vm2888 = vmor %vm2886, %vm2887
      %v2889 = vsel %vm2888, %v2881, %v2885
      %v2890 = vand.u32 2147483647, %v2865
      %vm2891 = vcmp.eq.f32.partialorder %v2890, 8.507059e+37
      %v2892 = vand.u32 %v2865, 2147483648
      %v2893 = vor.u32 1.1754944e-38, %v2892
      %v2894 = vsel %vm2891, %v2893, %v2889
      %v2895 = vmul.f32 %v2859, %v2894
      %v2896 = vpack.c.bf16 %v2895, %v2880
      %2898 = vrot.lane.b32.xlu0 %v2729, 120
      %v2899 = vpop.permute.xlu0 %2898
      %v2902 = vsel %vm529, %v2896, 0
      %2904 = vmatpush.bf16.msra.mxu0 0
      %2905 = vmatpush.bf16.msra.mxu0 0
      %2906 = vmatpush.bf16.msra.mxu0 0
      %2907 = vmatpush.bf16.msra.mxu0 0
      %2908 = vmatpush.bf16.msra.mxu0 0
      %2909 = vmatpush.bf16.msra.mxu0 0
      %2910 = vmatpush.bf16.msra.mxu0 0
      %2911 = vmatpush.bf16.msra.mxu0 %v2899
      %2912 = vmatmul.bf16.gmra.mxu0 %v2902
      %v2913 = vpop.f32.mrf.mxu0
      %v2914 = vadd.f32 0.0, %v2913
      %v2915 = vpop.f32.mrf.mxu0
      %v2916 = vadd.f32 0.0, %v2915
      %2917 = vdwg.mxu0
      %2920 = vrot.lane.b32.xlu0 %v2914, 8
      %v2921 = vpop.permute.xlu0 %2920
      %2922 = vrot.lane.b32.xlu0 %v2916, 8
      %v2923 = vpop.permute.xlu0 %2922
      %2926 = vst.msk [vmem:[#allocation3 + $0x10] sm:$0xff] %vm2512, %v2921
      %2927 = vst.msk [vmem:[#allocation3 + $0x18] sm:$0xff] %vm2512, %v2923
      %2928 = vrot.lane.b32.xlu0 %v2727, 112
      %v2929 = vpop.permute.xlu0 %2928
      %2930 = vrot.lane.b32.xlu0 %v2728, 112
      %v2931 = vpop.permute.xlu0 %2930
      %v2933 = vsel %vm619, %v2929, 0
      %v2936 = vsel %vm619, %v2931, 0
      %2938 = vmatpush.bf16.xpose.msra.mxu0 0
      %2939 = vmatpush.bf16.xpose.msra.mxu0 0
      %2940 = vmatpush.bf16.xpose.msra.mxu0 0
      %2941 = vmatpush.bf16.xpose.msra.mxu0 0
      %2942 = vmatpush.bf16.xpose.msra.mxu0 0
      %2943 = vmatpush.bf16.xpose.msra.mxu0 0
      %2944 = vmatpush.bf16.xpose.msra.mxu0 0
      %2945 = vmatpush.bf16.xpose.msra.mxu0 %v2936
      %2946 = vmatmul.bf16.gmra.mxu0 %v2933
      %v2947 = vpop.f32.mrf.mxu0
      %v2948 = vadd.f32 0.0, %v2947
      %v2949 = vpop.f32.mrf.mxu0
      %v2950 = vadd.f32 0.0, %v2949
      %2951 = vdwg.mxu0
      %v2952 = vmul.f32 %v2948, 0.35355338
      %v2953 = vmul.f32 %v2950, 0.35355338
      %v2954 = vsel %vm529, %v2952, -inf
      %2955 = vmax.xlane.f32.xlu0 %v2954
      %v2956 = vpop.xlane.xlu0 %2955
      %v2957 = vsel %vm529, %v2953, -inf
      %2958 = vmax.xlane.f32.xlu0 %v2957
      %v2959 = vpop.xlane.xlu0 %2958
      %v2960 = vsub.f32 %v2952, %v2956
      %v2961 = vsub.f32 %v2953, %v2959
      %v2962 = vmul.f32 %v2960, 1.442695
      %v2963 = vpow.pop %v2962
      %v2964 = vmul.f32 %v2961, 1.442695
      %v2965 = vpow.pop %v2964
      %v2966 = vsel %vm529, %v2963, 0.0
      %2967 = vadd.xlane.f32.xlu0 %v2966
      %v2968 = vpop.xlane.xlu0 %2967
      %v2969 = vsel %vm529, %v2965, 0.0
      %2970 = vadd.xlane.f32.xlu0 %v2969
      %v2971 = vpop.xlane.xlu0 %2970
      %v2972 = vrcp.pop %v2968
      %v2973 = vmul.f32 %v2968, %v2972
      %v2974 = vsub.f32 1.0, %v2973
      %v2975 = vmul.f32 %v2972, %v2974
      %v2976 = vadd.f32 %v2972, %v2975
      %vm2977 = vweird.f32 %v2968
      %vm2978 = vweird.f32 %v2972
      %vm2979 = vmor %vm2977, %vm2978
      %v2980 = vsel %vm2979, %v2972, %v2976
      %v2981 = vand.u32 2147483647, %v2968
      %vm2982 = vcmp.eq.f32.partialorder %v2981, 8.507059e+37
      %v2983 = vand.u32 %v2968, 2147483648
      %v2984 = vor.u32 1.1754944e-38, %v2983
      %v2985 = vsel %vm2982, %v2984, %v2980
      %v2986 = vmul.f32 %v2963, %v2985
      %v2987 = vrcp.pop %v2971
      %v2988 = vmul.f32 %v2971, %v2987
      %v2989 = vsub.f32 1.0, %v2988
      %v2990 = vmul.f32 %v2987, %v2989
      %v2991 = vadd.f32 %v2987, %v2990
      %vm2992 = vweird.f32 %v2971
      %vm2993 = vweird.f32 %v2987
      %vm2994 = vmor %vm2992, %vm2993
      %v2995 = vsel %vm2994, %v2987, %v2991
      %v2996 = vand.u32 2147483647, %v2971
      %vm2997 = vcmp.eq.f32.partialorder %v2996, 8.507059e+37
      %v2998 = vand.u32 %v2971, 2147483648
      %v2999 = vor.u32 1.1754944e-38, %v2998
      %v3000 = vsel %vm2997, %v2999, %v2995
      %v3001 = vmul.f32 %v2965, %v3000
      %v3002 = vpack.c.bf16 %v3001, %v2986
      %3003 = vrot.lane.b32.xlu0 %v2729, 112
      %v3004 = vpop.permute.xlu0 %3003
      %v3007 = vsel %vm529, %v3002, 0
      %3009 = vmatpush.bf16.msra.mxu0 0
      %3010 = vmatpush.bf16.msra.mxu0 0
      %3011 = vmatpush.bf16.msra.mxu0 0
      %3012 = vmatpush.bf16.msra.mxu0 0
      %3013 = vmatpush.bf16.msra.mxu0 0
      %3014 = vmatpush.bf16.msra.mxu0 0
      %3015 = vmatpush.bf16.msra.mxu0 0
      %3016 = vmatpush.bf16.msra.mxu0 %v3004
      %3017 = vmatmul.bf16.gmra.mxu0 %v3007
      %v3018 = vpop.f32.mrf.mxu0
      %v3019 = vadd.f32 0.0, %v3018
      %v3020 = vpop.f32.mrf.mxu0
      %v3021 = vadd.f32 0.0, %v3020
      %3022 = vdwg.mxu0
      %3025 = vrot.lane.b32.xlu0 %v3019, 16
      %v3026 = vpop.permute.xlu0 %3025
      %3027 = vrot.lane.b32.xlu0 %v3021, 16
      %v3028 = vpop.permute.xlu0 %3027
      %3031 = vst.msk [vmem:[#allocation3 + $0x10] sm:$0xff] %vm2618, %v3026
      %3032 = vst.msk [vmem:[#allocation3 + $0x18] sm:$0xff] %vm2618, %v3028
      %3033 = vrot.lane.b32.xlu0 %v2727, 104
      %v3034 = vpop.permute.xlu0 %3033
      %3035 = vrot.lane.b32.xlu0 %v2728, 104
      %v3036 = vpop.permute.xlu0 %3035
      %v3038 = vsel %vm619, %v3034, 0
      %v3041 = vsel %vm619, %v3036, 0
      %3043 = vmatpush.bf16.xpose.msra.mxu0 0
      %3044 = vmatpush.bf16.xpose.msra.mxu0 0
      %3045 = vmatpush.bf16.xpose.msra.mxu0 0
      %3046 = vmatpush.bf16.xpose.msra.mxu0 0
      %3047 = vmatpush.bf16.xpose.msra.mxu0 0
      %3048 = vmatpush.bf16.xpose.msra.mxu0 0
      %3049 = vmatpush.bf16.xpose.msra.mxu0 0
      %3050 = vmatpush.bf16.xpose.msra.mxu0 %v3041
      %3051 = vmatmul.bf16.gmra.mxu0 %v3038
      %v3052 = vpop.f32.mrf.mxu0
      %v3053 = vadd.f32 0.0, %v3052
      %v3054 = vpop.f32.mrf.mxu0
      %v3055 = vadd.f32 0.0, %v3054
      %3056 = vdwg.mxu0
      %v3057 = vmul.f32 %v3053, 0.35355338
      %v3058 = vmul.f32 %v3055, 0.35355338
      %v3059 = vsel %vm529, %v3057, -inf
      %3060 = vmax.xlane.f32.xlu0 %v3059
      %v3061 = vpop.xlane.xlu0 %3060
      %v3062 = vsel %vm529, %v3058, -inf
      %3063 = vmax.xlane.f32.xlu0 %v3062
      %v3064 = vpop.xlane.xlu0 %3063
      %v3065 = vsub.f32 %v3057, %v3061
      %v3066 = vsub.f32 %v3058, %v3064
      %v3067 = vmul.f32 %v3065, 1.442695
      %v3068 = vpow.pop %v3067
      %v3069 = vmul.f32 %v3066, 1.442695
      %v3070 = vpow.pop %v3069
      %v3071 = vsel %vm529, %v3068, 0.0
      %3072 = vadd.xlane.f32.xlu0 %v3071
      %v3073 = vpop.xlane.xlu0 %3072
      %v3074 = vsel %vm529, %v3070, 0.0
      %3075 = vadd.xlane.f32.xlu0 %v3074
      %v3076 = vpop.xlane.xlu0 %3075
      %v3077 = vrcp.pop %v3073
      %v3078 = vmul.f32 %v3073, %v3077
      %v3079 = vsub.f32 1.0, %v3078
      %v3080 = vmul.f32 %v3077, %v3079
      %v3081 = vadd.f32 %v3077, %v3080
      %vm3082 = vweird.f32 %v3073
      %vm3083 = vweird.f32 %v3077
      %vm3084 = vmor %vm3082, %vm3083
      %v3085 = vsel %vm3084, %v3077, %v3081
      %v3086 = vand.u32 2147483647, %v3073
      %vm3087 = vcmp.eq.f32.partialorder %v3086, 8.507059e+37
      %v3088 = vand.u32 %v3073, 2147483648
      %v3089 = vor.u32 1.1754944e-38, %v3088
      %v3090 = vsel %vm3087, %v3089, %v3085
      %v3091 = vmul.f32 %v3068, %v3090
      %v3092 = vrcp.pop %v3076
      %v3093 = vmul.f32 %v3076, %v3092
      %v3094 = vsub.f32 1.0, %v3093
      %v3095 = vmul.f32 %v3092, %v3094
      %v3096 = vadd.f32 %v3092, %v3095
      %vm3097 = vweird.f32 %v3076
      %vm3098 = vweird.f32 %v3092
      %vm3099 = vmor %vm3097, %vm3098
      %v3100 = vsel %vm3099, %v3092, %v3096
      %v3101 = vand.u32 2147483647, %v3076
      %vm3102 = vcmp.eq.f32.partialorder %v3101, 8.507059e+37
      %v3103 = vand.u32 %v3076, 2147483648
      %v3104 = vor.u32 1.1754944e-38, %v3103
      %v3105 = vsel %vm3102, %v3104, %v3100
      %v3106 = vmul.f32 %v3070, %v3105
      %v3107 = vpack.c.bf16 %v3106, %v3091
      %3108 = vrot.lane.b32.xlu0 %v2729, 104
      %v3109 = vpop.permute.xlu0 %3108
      %v3112 = vsel %vm529, %v3107, 0
      %3114 = vmatpush.bf16.msra.mxu0 0
      %3115 = vmatpush.bf16.msra.mxu0 0
      %3116 = vmatpush.bf16.msra.mxu0 0
      %3117 = vmatpush.bf16.msra.mxu0 0
      %3118 = vmatpush.bf16.msra.mxu0 0
      %3119 = vmatpush.bf16.msra.mxu0 0
      %3120 = vmatpush.bf16.msra.mxu0 0
      %3121 = vmatpush.bf16.msra.mxu0 %v3109
      %3122 = vmatmul.bf16.gmra.mxu0 %v3112
      %v3123 = vpop.f32.mrf.mxu0
      %v3124 = vadd.f32 0.0, %v3123
      %v3125 = vpop.f32.mrf.mxu0
      %v3126 = vadd.f32 0.0, %v3125
      %3127 = vdwg.mxu0
      %3130 = vrot.lane.b32.xlu0 %v3124, 24
      %v3131 = vpop.permute.xlu0 %3130
      %3132 = vrot.lane.b32.xlu0 %v3126, 24
      %v3133 = vpop.permute.xlu0 %3132
      %3136 = vst.msk [vmem:[#allocation3 + $0x10] sm:$0xff] %vm2724, %v3131
      %3137 = vst.msk [vmem:[#allocation3 + $0x18] sm:$0xff] %vm2724, %v3133
      %v3138 = vld [vmem:[#allocation3] sm:$0xff]
      %v3139 = vld [vmem:[#allocation3 + $0x8] sm:$0xff]
      %v3140 = vld [vmem:[#allocation3 + $0x10] sm:$0xff]
      %v3141 = vld [vmem:[#allocation3 + $0x18] sm:$0xff]
      %v3142 = vpack.c.bf16 %v3139, %v3138
      %v3143 = vpack.c.bf16 %v3141, %v3140
      %v3144 = vld [vmem:[%s12] sm:$0xff]
      %v3145 = vld [vmem:[%s12 + $0x8] sm:$0xff]
      %v3146 = vld [vmem:[%s12 + $0x10] sm:$0xff]
      %v3147 = vld [vmem:[%s12 + $0x18] sm:$0xff]
      %v3148 = vpack.c.bf16 %v3145, %v3144
      %v3149 = vpack.c.bf16 %v3147, %v3146
      %v3150 = vld [vmem:[%s13] sm:$0x1]
      %v3152 = vperm.slane %v3150, 0
      %v3155 = vsel %vm1771, %v3142, 0
      %v3158 = vsel %vm1771, %v3143, 0
      %3160 = vmatpush.bf16.msra.mxu0 0
      %3161 = vmatpush.bf16.msra.mxu0 0
      %3162 = vmatpush.bf16.msra.mxu0 0
      %3163 = vmatpush.bf16.msra.mxu0 0
      %3164 = vmatpush.bf16.msra.mxu0 0
      %3165 = vmatpush.bf16.msra.mxu0 0
      %3166 = vmatpush.bf16.msra.mxu0 %v3149
      %3167 = vmatpush.bf16.msra.mxu0 %v3148
      %3168 = vmatmul.bf16.gmra.mxu0 %v3155
      %v3169 = vpop.f32.mrf.mxu0
      %v3170 = vadd.f32 %v3152, %v3169
      %v3171 = vpop.f32.mrf.mxu0
      %v3172 = vadd.f32 %v3152, %v3171
      %3173 = vmatmul.bf16.gmra.mxu0 %v3158
      %v3174 = vpop.f32.mrf.mxu0
      %v3175 = vadd.f32 %v3152, %v3174
      %v3176 = vpop.f32.mrf.mxu0
      %v3177 = vadd.f32 %v3152, %v3176
      %3178 = vdwg.mxu0
      %3179 = vst.msk [vmem:[%s513] sm:$0xff] %vm1771, %v3170
      %3180 = vst.msk [vmem:[%s513 + $0x8] sm:$0xff] %vm1771, %v3172
      %3181 = vst.msk [vmem:[%s513 + $0x10] sm:$0xff] %vm1771, %v3175
      %3182 = vst.msk [vmem:[%s513 + $0x18] sm:$0xff] %vm1771, %v3177
      %s3183 = smul.u32 4, %s25
      %p3184 = scmp.lt.s32.totalorder %s3183, 7
      %s3185 = scalar_select %p3184, %s3183, 7
      %s3186 = smul.addr %s3185, 8
      %s3187 = scalar_lea.vmem %s14, %s3186
      // Predicated region
      $region77: #{tpu_custom_call.1} parent=75 // pred_check
        %p3188 = pneg %p352
      $region78: #{tpu_custom_call.1} parent=75 // pred_check_branch
        %3190 = sbr.rel (%p3188) target = $region80
      $region79: #{tpu_custom_call.1} parent=75 // pred_region
        %s3191 = smul.u32 4, %s25
      $region80: #{tpu_custom_call.1} parent=75 // pred_fallthru
        _
    $region76: #{tpu_custom_call.1} parent=5 // pred_fallthru
      _
    %p3192 = scmp.le.s32.totalorder 2, %s20
    // Predicated region
    $region81: #{tpu_custom_call.1} parent=5 // pred_check
      %p3193 = pneg %p3192
    $region82: #{tpu_custom_call.1} parent=5 // pred_check_branch
      %3195 = sbr.rel (%p3193) target = $region84
    $region83: #{tpu_custom_call.1} parent=5 // pred_region
      %s3196 = ssub.s32 %s20, 2
      // Predicated region
      $region85: #{tpu_custom_call.1} parent=83 // pred_check
        %p3197 = pneg %p358
      $region86: #{tpu_custom_call.1} parent=83 // pred_check_branch
        %3199 = sbr.rel (%p3197) target = $region88
      $region87: #{tpu_custom_call.1} parent=83 // pred_region
        %s3200 = smul.u32 4, %s26
        %p3201 = scmp.lt.s32.totalorder %s3200, 7
        %s3202 = scalar_select %p3201, %s3200, 7
        %s3203 = smul.addr %s3202, 8
        %s3204 = scalar_lea.vmem %s14, %s3203
      $region88: #{tpu_custom_call.1} parent=83 // pred_fallthru
        _
    $region84: #{tpu_custom_call.1} parent=5 // pred_fallthru
      _
  $region6: #{tpu_custom_call.1} parent=0 // loop_footer
    %s24 = sadd.s32 1, %s20
  $region7: #{tpu_custom_call.1} parent=0 // loop_footer_branch
    %19 = sbr.rel target = $region3
  $region8: #{tpu_custom_call.1} parent=0 // loop_exit
    _

</llo_original>
